<compile_context>
chip_gen: v7x
topology: tpu7x:2x2x1
jax: 0.10.0
libtpu: 0.0.40
codegen_flags: <defaults>
</compile_context>

<pallas_src>
import jax
import jax.numpy as jnp
from jax.experimental import pallas as pl
from jax.experimental.pallas import tpu as pltpu


def _round_up(x, m):
    return (x + m - 1) // m * m


def _resident(a):
    """Full-array block that never changes with the grid (resident in VMEM)."""
    zeros = (0,) * a.ndim
    return pl.BlockSpec(a.shape, lambda *_: zeros)


# ---------------------------------------------------------------------------
# Encoder kernel: per-point MLP (3 -> C1 -> C2 -> C3) and a running global
# max-pool over points.  Layout: points on lanes, channels on sublanes.
# BN is folded into W, b.  The FC (C3 -> code) epilogue lives in the wrapper.
# ---------------------------------------------------------------------------
def _encoder_kernel(x_ref, w1_ref, b1_ref, w2_ref, b2_ref, w3_ref, b3_ref,
                    feat_ref, acc_ref):
    k = pl.program_id(1)

    @pl.when(k == 0)
    def _init():
        acc_ref[...] = jnp.full(acc_ref.shape, -jnp.inf, acc_ref.dtype)

    x = x_ref[0]                         # (3, TN) f32, points on lanes
    w1 = w1_ref[...]                     # (C1, 3) f32 (BN folded)

    # conv1 (K=3) as three broadcast FMAs on the VPU (avoids a K=3 MXU pass)
    h = (w1[:, 0:1] * x[0:1, :] +
         w1[:, 1:2] * x[1:2, :] +
         w1[:, 2:3] * x[2:3, :]) + b1_ref[...]
    h = jnp.maximum(h, 0.0)                                        # (C1, TN)

    # conv2 + folded BN + ReLU  (bf16 MXU, f32 accumulate)
    h = jnp.dot(w2_ref[...], h.astype(jnp.bfloat16),
                preferred_element_type=jnp.float32) + b2_ref[...]
    h = jnp.maximum(h, 0.0)                                        # (C2, TN)

    # conv3 + folded BN (no ReLU before the max-pool)
    h = jnp.dot(w3_ref[...], h.astype(jnp.bfloat16),
                preferred_element_type=jnp.float32) + b3_ref[...]  # (C3, TN)

    # lane-resident running max: pure VPU elementwise, no XLU in steady state
    acc_ref[...] = jnp.maximum(acc_ref[...], h)

    @pl.when(k == pl.num_programs(1) - 1)
    def _finalize():
        # single cross-lane max, once per batch element
        feat_ref[0] = jnp.max(acc_ref[...], axis=1, keepdims=True)  # (C3, 1)


# ---------------------------------------------------------------------------
# Decoder kernel: one patch per grid step, batch folded into the lane axis.
# PyTorch: y = cat([uv_grid, codeword.expand], 2); conv1..conv3 (ksize=1)
# + BN + ReLU, conv4 + tanh.  The concat is split:
#     cat([g, c]) @ W1 == W1a @ g (2 VPU FMAs) + (W1b @ c + b1) [precomputed].
# Layout: B*spp on lanes, channels on sublanes; BN folded into W, b.
# ---------------------------------------------------------------------------
def _decoder_kernel(uv_ref, bias1_ref, w1a_ref, w2_ref, b2_ref,
                    w3_ref, b3_ref, w4_ref, b4_ref, out_ref):
    g = uv_ref[0]                            # (2, L)   f32
    a = w1a_ref[0]                           # (C1, 2)  f32

    # conv1 + folded BN + ReLU (codeword part arrives precomputed as bias1)
    h = a[:, 0:1] * g[0:1, :] + a[:, 1:2] * g[1:2, :] + bias1_ref[0]
    h = jnp.maximum(h, 0.0).astype(jnp.bfloat16)                   # (C1, L)

    # conv2 + folded BN + ReLU
    h = jnp.dot(w2_ref[0], h, preferred_element_type=jnp.float32) + b2_ref[0]
    h = jnp.maximum(h, 0.0).astype(jnp.bfloat16)                   # (C2, L)

    # conv3 + folded BN + ReLU
    h = jnp.dot(w3_ref[0], h, preferred_element_type=jnp.float32) + b3_ref[0]
    h = jnp.maximum(h, 0.0).astype(jnp.bfloat16)                   # (C3, L)

    # conv4 + tanh (no BN)
    h = jnp.dot(w4_ref[0], h, preferred_element_type=jnp.float32) + b4_ref[0]
    out_ref[0] = jnp.tanh(h)                                       # (3, L)


# ---------------------------------------------------------------------------
# Wrappers
# ---------------------------------------------------------------------------
def encoder_forward(x_b3n, p, tile_n=2048):
    """x_b3n: (B, 3, N) NCW point cloud  ->  codewords (B, code)."""
    x = x_b3n.astype(jnp.float32)
    B, cin, N = x.shape
    assert cin == 3
    c1, c2, c3 = p["w1"].shape[0], p["w2"].shape[0], p["w3"].shape[0]

    tile_n = min(tile_n, _round_up(N, 128))      # big tiles: few grid steps
    assert tile_n % 128 == 0
    n_pad = _round_up(N, tile_n)
    if n_pad != N:
        # pad by repeating real points -> global max-pool is unaffected
        x = jnp.pad(x, ((0, 0), (0, 0), (0, n_pad - N)), mode="edge")
    kt = n_pad // tile_n

    args = (x, p["w1"], p["b1"], p["w2"], p["b2"], p["w3"], p["b3"])

    flops = 2 * B * n_pad * (3 * c1 + c1 * c2 + c2 * c3)
    bytes_acc = (int(x.size) * 4
                 + sum(int(v.size) * v.dtype.itemsize for v in args[1:])
                 + B * c3 * 4)

    feat = pl.pallas_call(
        _encoder_kernel,
        out_shape=jax.ShapeDtypeStruct((B, c3, 1), jnp.float32),
        grid=(B, kt),
        in_specs=[pl.BlockSpec((1, 3, tile_n), lambda b, k: (b, 0, k))]
                 + [_resident(a) for a in args[1:]],
        out_specs=pl.BlockSpec((1, c3, 1), lambda b, k: (b, 0, 0)),
        scratch_shapes=[pltpu.VMEM((c3, tile_n), jnp.float32)],
        compiler_params=pltpu.CompilerParams(
            dimension_semantics=("parallel", "arbitrary"),
            vmem_limit_bytes=32 * 1024 * 1024),
        cost_estimate=pl.CostEstimate(flops=int(flops), transcendentals=0,
                                      bytes_accessed=int(bytes_acc)),
    )(*args)

    feat = feat[:, :, 0]                                  # (B, C3)
    # FC (C3 -> code) + folded BN + ReLU as a batched XLA GEMM — far better
    # MXU shape than an in-kernel N=1 matvec, keeps wfc/bfc out of VMEM.
    cws = jnp.maximum(feat @ p["wfc"].T + p["bfc"], 0.0)  # (B, code)
    return cws


def decoder_forward(uv, cws, dp):
    """uv: (B, M, 2), cws: (B, code)  ->  pc_pred (B, spp*P, 3)."""
    B, M, two = uv.shape
    assert two == 2
    P = dp["w1a"].shape[0]
    spp = M // P
    m_use = spp * P                      # PyTorch uses the first spp*P points
    c1 = dp["w1a"].shape[1]
    c2 = dp["w2"].shape[1]
    c3 = dp["w3"].shape[1]

    # (B, m_use, 2) -> (P, 2, B*spp): batch folded into the lane axis so every
    # MXU pass sees >= 256 lanes and the grid is only (P,).
    uvp = uv[:, :m_use].astype(jnp.float32).reshape(B, P, spp, 2)
    uvL = jnp.transpose(uvp, (1, 3, 0, 2)).reshape(P, 2, B * spp)

    # conv1 codeword contribution precomputed in XLA:
    #   z[p, :, b] = w1b[p] @ cw[b] + b1[p]
    # then broadcast across each batch's spp-lane block.
    z = jnp.einsum("pck,bk->pcb", dp["w1b"], cws) + dp["b1"]   # (P, C1, B)
    bias1 = jnp.repeat(z, spp, axis=2)                         # (P, C1, B*spp)

    L = B * spp
    L_pad = _round_up(L, 128)            # lane-align so stores are unmasked
    if L_pad != L:
        uvL = jnp.pad(uvL, ((0, 0), (0, 0), (0, L_pad - L)))
        bias1 = jnp.pad(bias1, ((0, 0), (0, 0), (0, L_pad - L)))

    wkeys = ["w1a", "w2", "b2", "w3", "b3", "w4", "b4"]
    wargs = [dp[k] for k in wkeys]
    args = (uvL, bias1) + tuple(wargs)

    in_specs = [
        pl.BlockSpec((1, 2, L_pad), lambda pi: (pi, 0, 0)),
        pl.BlockSpec((1, c1, L_pad), lambda pi: (pi, 0, 0)),
    ] + [pl.BlockSpec((1,) + a.shape[1:], lambda pi: (pi, 0, 0))
         for a in wargs]   # per-patch weights, default double-buffering

    flops = 2 * P * L_pad * (2 * c1 + c1 * c2 + c2 * c3 + c3 * 3)
    bytes_acc = (int(uvL.size) * 4 + int(bias1.size) * 4
                 + sum(int(a.size) * a.dtype.itemsize for a in wargs)
                 + P * 3 * L_pad * 4)

    out = pl.pallas_call(
        _decoder_kernel,
        out_shape=jax.ShapeDtypeStruct((P, 3, L_pad), jnp.float32),
        grid=(P,),
        in_specs=in_specs,
        out_specs=pl.BlockSpec((1, 3, L_pad), lambda pi: (pi, 0, 0)),
        compiler_params=pltpu.CompilerParams(
            dimension_semantics=("parallel",),
            vmem_limit_bytes=32 * 1024 * 1024),
        cost_estimate=pl.CostEstimate(flops=int(flops),
                                      transcendentals=int(P * L_pad * 3),
                                      bytes_accessed=int(bytes_acc)),
    )(*args)

    # lane-dense in-kernel store; layout fixup is a cheap XLA transpose
    out = out[:, :, :L].reshape(P, 3, B, spp)
    pc_pred = jnp.transpose(out, (2, 0, 3, 1)).reshape(B, m_use, 3)
    return pc_pred


def atlasnet_forward(x_b3n, uv, enc_params, dec_params):
    """Equivalent of AtlasNetReimpl.forward: returns (pc_pred, codewords, uv)."""
    cws = encoder_forward(x_b3n, enc_params)         # (B, code)
    pc_pred = decoder_forward(uv, cws, dec_params)   # (B, spp*P, 3)
    # TODO(synk): DiffGeomProps (normals/fff via autograd of pc_pred w.r.t. uv)
    # has no clean Pallas equivalent; geom_props is not produced here.
    return pc_pred, cws, uv


# ---------------------------------------------------------------------------
# Deterministic parameter construction (PyTorch-style init, eval-mode BN fold)
# ---------------------------------------------------------------------------
def _conv1x1(key, c_in, c_out):
    # Conv1d(kernel=1) / Linear default init, weight stored (out, in)
    kw, kb = jax.random.split(key)
    bound = 1.0 / float(c_in) ** 0.5
    w = jax.random.uniform(kw, (c_out, c_in), jnp.float32, -bound, bound)
    b = jax.random.uniform(kb, (c_out,), jnp.float32, -bound, bound)
    return w, b


def _fold_bn(w, b, c_out, eps=1e-5):
    # eval-mode BN with default running stats (mean=0, var=1, gamma=1, beta=0)
    gamma = jnp.ones((c_out,), jnp.float32)
    beta = jnp.zeros((c_out,), jnp.float32)
    mean = jnp.zeros((c_out,), jnp.float32)
    var = jnp.ones((c_out,), jnp.float32)
    s = gamma / jnp.sqrt(var + eps)
    t = beta - mean * s
    return w * s[:, None], b * s + t


def init_encoder_params(key, code, c1=64, c2=64, c3=128):
    ks = jax.random.split(key, 4)
    w1, b1 = _fold_bn(*_conv1x1(ks[0], 3, c1), c1)
    w2, b2 = _fold_bn(*_conv1x1(ks[1], c1, c2), c2)
    w3, b3 = _fold_bn(*_conv1x1(ks[2], c2, c3), c3)
    wfc, bfc = _fold_bn(*_conv1x1(ks[3], c3, code), code)
    col = lambda v: v.reshape(-1, 1)
    return dict(
        w1=w1, b1=col(b1),                              # f32: VPU FMA path
        w2=w2.astype(jnp.bfloat16), b2=col(b2),
        w3=w3.astype(jnp.bfloat16), b3=col(b3),
        wfc=wfc, bfc=bfc)                               # FC stays in XLA (f32)


def init_decoder_params(key, num_patches, code):
    c1, c2, c3 = code, code // 2, code // 4
    per = {k: [] for k in ["w1a", "w1b", "b1", "w2", "b2", "w3", "b3",
                           "w4", "b4"]}
    keys = jax.random.split(key, num_patches)
    col = lambda v: v.reshape(-1, 1)
    for p in range(num_patches):
        ks = jax.random.split(keys[p], 4)
        # conv1 acts on cat([uv_grid, codeword], channel) -> split its weight
        w1, b1 = _fold_bn(*_conv1x1(ks[0], 2 + code, c1), c1)
        w2, b2 = _fold_bn(*_conv1x1(ks[1], c1, c2), c2)
        w3, b3 = _fold_bn(*_conv1x1(ks[2], c2, c3), c3)
        w4, b4 = _conv1x1(ks[3], c3, 3)                  # conv4: tanh, no BN
        per["w1a"].append(w1[:, :2])                     # (C1, 2)  f32 (VPU)
        per["w1b"].append(w1[:, 2:])                     # (C1, code) XLA precompute
        per["b1"].append(col(b1))
        per["w2"].append(w2.astype(jnp.bfloat16)); per["b2"].append(col(b2))
        per["w3"].append(w3.astype(jnp.bfloat16)); per["b3"].append(col(b3))
        per["w4"].append(w4.astype(jnp.bfloat16)); per["b4"].append(col(b4))
    return {k: jnp.stack(v, axis=0) for k, v in per.items()}


# ---------------------------------------------------------------------------
if __name__ == "__main__":
    B, N = 2, 512            # batch, input points
    code = 128               # codeword size
    M, num_patches = 256, 2  # sampled UV points, patches (spp=128, lanes=256)

    key = jax.random.PRNGKey(0)
    kx, kuv, kenc, kdec = jax.random.split(key, 4)

    # encoder input: PyTorch NCW point cloud (B, 3, N)
    x = jax.random.normal(kx, (B, 3, N), jnp.float32)
    # FNSamplerRandUniform: uniform UV samples in [0,1]^2, shape (B, M, 2)
    uv = jax.random.uniform(kuv, (B, M, 2), jnp.float32)

    enc_params = init_encoder_params(kenc, code)
    dec_params = init_decoder_params(kdec, num_patches, code)

    fwd = jax.jit(atlasnet_forward)
    pc_pred, cws, uv_out = fwd(x, uv, enc_params, dec_params)
    jax.block_until_ready(pc_pred)

    spp = M // num_patches
    assert pc_pred.shape == (B, spp * num_patches, 3)
    assert cws.shape == (B, code)
    assert bool(jnp.all(jnp.isfinite(pc_pred)))
    assert bool(jnp.all(jnp.isfinite(cws)))
    print("KERNEL_OK")
</pallas_src>

<mosaic_0001>
module attributes {stable_mosaic.version = 11 : i64} {
  func.func @_encoder_kernel(%arg0: i32, %arg1: i32, %arg2: memref<1x3x512xf32, #tpu.memory_space<vmem>>, %arg3: memref<64x3xf32, #tpu.memory_space<vmem>>, %arg4: memref<64x1xf32, #tpu.memory_space<vmem>>, %arg5: memref<64x64xbf16, #tpu.memory_space<vmem>>, %arg6: memref<64x1xf32, #tpu.memory_space<vmem>>, %arg7: memref<128x64xbf16, #tpu.memory_space<vmem>>, %arg8: memref<128x1xf32, #tpu.memory_space<vmem>>, %arg9: memref<1x128x1xf32, #tpu.memory_space<vmem>>, %arg10: memref<128x512xf32, #tpu.memory_space<vmem>>) attributes {dimension_semantics = [#tpu.dimension_semantics<parallel>, #tpu.dimension_semantics<arbitrary>], iteration_bounds = array<i64: 2, 1>, scalar_prefetch = 0 : i64, scratch_operands = 1 : i64, tpu.core_type = #tpu.core_type<tc>, window_params = [{transform_indices = @transform_0, window_bounds = array<i64: 1, 3, 512>}, {pipeline_mode = #tpu.pipeline_mode<synchronous>, transform_indices = @transform_1, window_bounds = array<i64: 64, 3>}, {pipeline_mode = #tpu.pipeline_mode<synchronous>, transform_indices = @transform_2, window_bounds = array<i64: 64, 1>}, {pipeline_mode = #tpu.pipeline_mode<synchronous>, transform_indices = @transform_3, window_bounds = array<i64: 64, 64>}, {pipeline_mode = #tpu.pipeline_mode<synchronous>, transform_indices = @transform_4, window_bounds = array<i64: 64, 1>}, {pipeline_mode = #tpu.pipeline_mode<synchronous>, transform_indices = @transform_5, window_bounds = array<i64: 128, 64>}, {pipeline_mode = #tpu.pipeline_mode<synchronous>, transform_indices = @transform_6, window_bounds = array<i64: 128, 1>}, {transform_indices = @transform_7, window_bounds = array<i64: 1, 128, 1>}]} {
    %c0_i32 = arith.constant 0 : i32
    %0 = arith.cmpi eq, %arg1, %c0_i32 : i32
    %1 = arith.extui %0 : i1 to i32
    %c0_i32_0 = arith.constant 0 : i32
    %2 = arith.cmpi ne, %1, %c0_i32_0 : i32
    scf.if %2 {
      %cst_24 = arith.constant 0xFF800000 : f32
      %48 = vector.broadcast %cst_24 : f32 to vector<128x512xf32>
      %c0_25 = arith.constant 0 : index
      %c0_26 = arith.constant 0 : index
      %49 = vector.load %arg10[%c0_25, %c0_26] : memref<128x512xf32, #tpu.memory_space<vmem>>, vector<128x512xf32>
      tpu.vector_store %arg10[%c0_25, %c0_26], %48 {strides = array<i32>} : memref<128x512xf32, #tpu.memory_space<vmem>>, vector<128x512xf32>,
    } else {
    }
    %c0 = arith.constant 0 : index
    %c0_1 = arith.constant 0 : index
    %c0_2 = arith.constant 0 : index
    %3 = vector.load %arg2[%c0, %c0_1, %c0_2] : memref<1x3x512xf32, #tpu.memory_space<vmem>>, vector<1x3x512xf32>
    %4 = vector.shape_cast %3 : vector<1x3x512xf32> to vector<3x512xf32>
    %c0_3 = arith.constant 0 : index
    %c0_4 = arith.constant 0 : index
    %5 = vector.load %arg3[%c0_3, %c0_4] : memref<64x3xf32, #tpu.memory_space<vmem>>, vector<64x3xf32>
    %6 = vector.extract_strided_slice %5 {offsets = [0, 0], sizes = [64, 1], strides = [1, 1]} : vector<64x3xf32> to vector<64x1xf32>
    %7 = vector.extract_strided_slice %4 {offsets = [0, 0], sizes = [1, 512], strides = [1, 1]} : vector<3x512xf32> to vector<1x512xf32>
    %8 = vector.broadcast %6 : vector<64x1xf32> to vector<64x512xf32>
    %9 = vector.broadcast %7 : vector<1x512xf32> to vector<64x512xf32>
    %10 = arith.mulf %8, %9 : vector<64x512xf32>
    %11 = vector.extract_strided_slice %5 {offsets = [0, 1], sizes = [64, 1], strides = [1, 1]} : vector<64x3xf32> to vector<64x1xf32>
    %12 = vector.extract_strided_slice %4 {offsets = [1, 0], sizes = [1, 512], strides = [1, 1]} : vector<3x512xf32> to vector<1x512xf32>
    %13 = vector.broadcast %11 : vector<64x1xf32> to vector<64x512xf32>
    %14 = vector.broadcast %12 : vector<1x512xf32> to vector<64x512xf32>
    %15 = arith.mulf %13, %14 : vector<64x512xf32>
    %16 = arith.addf %10, %15 : vector<64x512xf32>
    %17 = vector.extract_strided_slice %5 {offsets = [0, 2], sizes = [64, 1], strides = [1, 1]} : vector<64x3xf32> to vector<64x1xf32>
    %18 = vector.extract_strided_slice %4 {offsets = [2, 0], sizes = [1, 512], strides = [1, 1]} : vector<3x512xf32> to vector<1x512xf32>
    %19 = vector.broadcast %17 : vector<64x1xf32> to vector<64x512xf32>
    %20 = vector.broadcast %18 : vector<1x512xf32> to vector<64x512xf32>
    %21 = arith.mulf %19, %20 : vector<64x512xf32>
    %22 = arith.addf %16, %21 : vector<64x512xf32>
    %c0_5 = arith.constant 0 : index
    %c0_6 = arith.constant 0 : index
    %23 = vector.load %arg4[%c0_5, %c0_6] : memref<64x1xf32, #tpu.memory_space<vmem>>, vector<64x1xf32>
    %24 = vector.broadcast %23 : vector<64x1xf32> to vector<64x512xf32>
    %25 = arith.addf %22, %24 : vector<64x512xf32>
    %cst = arith.constant 0.000000e+00 : f32
    %26 = vector.broadcast %cst : f32 to vector<64x512xf32>
    %27 = arith.maximumf %25, %26 : vector<64x512xf32>
    %c0_7 = arith.constant 0 : index
    %c0_8 = arith.constant 0 : index
    %28 = vector.load %arg5[%c0_7, %c0_8] : memref<64x64xbf16, #tpu.memory_space<vmem>>, vector<64x64xbf16>
    %29 = arith.truncf %27 : vector<64x512xf32> to vector<64x512xbf16>
    %cst_9 = arith.constant dense<0.000000e+00> : vector<64x512xf32>
    %30 = tpu.matmul %28, %29, %cst_9 {dimension_numbers = #tpu.dot_dimension_numbers<[1], [0], [0], [1], [0, 0, 1, 1], [], []>} : vector<64x64xbf16>, vector<64x512xbf16>, vector<64x512xf32> -> vector<64x512xf32>
    %c0_10 = arith.constant 0 : index
    %c0_11 = arith.constant 0 : index
    %31 = vector.load %arg6[%c0_10, %c0_11] : memref<64x1xf32, #tpu.memory_space<vmem>>, vector<64x1xf32>
    %32 = vector.broadcast %31 : vector<64x1xf32> to vector<64x512xf32>
    %33 = arith.addf %30, %32 : vector<64x512xf32>
    %cst_12 = arith.constant 0.000000e+00 : f32
    %34 = vector.broadcast %cst_12 : f32 to vector<64x512xf32>
    %35 = arith.maximumf %33, %34 : vector<64x512xf32>
    %c0_13 = arith.constant 0 : index
    %c0_14 = arith.constant 0 : index
    %36 = vector.load %arg7[%c0_13, %c0_14] : memref<128x64xbf16, #tpu.memory_space<vmem>>, vector<128x64xbf16>
    %37 = arith.truncf %35 : vector<64x512xf32> to vector<64x512xbf16>
    %cst_15 = arith.constant dense<0.000000e+00> : vector<128x512xf32>
    %38 = tpu.matmul %36, %37, %cst_15 {dimension_numbers = #tpu.dot_dimension_numbers<[1], [0], [0], [1], [0, 0, 1, 1], [], []>} : vector<128x64xbf16>, vector<64x512xbf16>, vector<128x512xf32> -> vector<128x512xf32>
    %c0_16 = arith.constant 0 : index
    %c0_17 = arith.constant 0 : index
    %39 = vector.load %arg8[%c0_16, %c0_17] : memref<128x1xf32, #tpu.memory_space<vmem>>, vector<128x1xf32>
    %40 = vector.broadcast %39 : vector<128x1xf32> to vector<128x512xf32>
    %41 = arith.addf %38, %40 : vector<128x512xf32>
    %c0_18 = arith.constant 0 : index
    %c0_19 = arith.constant 0 : index
    %42 = vector.load %arg10[%c0_18, %c0_19] : memref<128x512xf32, #tpu.memory_space<vmem>>, vector<128x512xf32>
    %43 = arith.maximumf %42, %41 : vector<128x512xf32>
    %c0_20 = arith.constant 0 : index
    %c0_21 = arith.constant 0 : index
    %44 = vector.load %arg10[%c0_20, %c0_21] : memref<128x512xf32, #tpu.memory_space<vmem>>, vector<128x512xf32>
    tpu.vector_store %arg10[%c0_20, %c0_21], %43 {strides = array<i32>} : memref<128x512xf32, #tpu.memory_space<vmem>>, vector<128x512xf32>,
    %c0_i32_22 = arith.constant 0 : i32
    %45 = arith.cmpi eq, %arg1, %c0_i32_22 : i32
    %46 = arith.extui %45 : i1 to i32
    %c0_i32_23 = arith.constant 0 : i32
    %47 = arith.cmpi ne, %46, %c0_i32_23 : i32
    scf.if %47 {
      %c0_24 = arith.constant 0 : index
      %c0_25 = arith.constant 0 : index
      %48 = vector.load %arg10[%c0_24, %c0_25] : memref<128x512xf32, #tpu.memory_space<vmem>>, vector<128x512xf32>
      %cst_26 = arith.constant dense<0xFF800000> : vector<128xf32>
      %49 = vector.multi_reduction <maximumf>, %48, %cst_26 [1] : vector<128x512xf32> to vector<128xf32>
      %50 = vector.shape_cast %49 : vector<128xf32> to vector<128x1xf32>
      %c0_27 = arith.constant 0 : index
      %c0_28 = arith.constant 0 : index
      %c0_29 = arith.constant 0 : index
      %51 = vector.load %arg9[%c0_27, %c0_28, %c0_29] : memref<1x128x1xf32, #tpu.memory_space<vmem>>, vector<1x128x1xf32>
      %52 = vector.shape_cast %51 : vector<1x128x1xf32> to vector<128x1xf32>
      %53 = vector.shape_cast %50 : vector<128x1xf32> to vector<1x128x1xf32>
      tpu.vector_store %arg9[%c0_27, %c0_28, %c0_29], %53 {strides = array<i32>} : memref<1x128x1xf32, #tpu.memory_space<vmem>>, vector<1x128x1xf32>,
    } else {
    }
    return
  }
  func.func @transform_0(%arg0: i32, %arg1: i32) -> (i32, i32, i32) {
    %c0_i32 = arith.constant 0 : i32
    %c0_i32_0 = arith.constant 0 : i32
    return %arg0, %c0_i32, %arg1 : i32, i32, i32
  }
  func.func @transform_1(%arg0: i32, %arg1: i32) -> (i32, i32) {
    %c0_i32 = arith.constant 0 : i32
    %c0_i32_0 = arith.constant 0 : i32
    %c0_i32_1 = arith.constant 0 : i32
    return %c0_i32, %c0_i32_0 : i32, i32
  }
  func.func @transform_2(%arg0: i32, %arg1: i32) -> (i32, i32) {
    %c0_i32 = arith.constant 0 : i32
    %c0_i32_0 = arith.constant 0 : i32
    %c0_i32_1 = arith.constant 0 : i32
    return %c0_i32, %c0_i32_0 : i32, i32
  }
  func.func @transform_3(%arg0: i32, %arg1: i32) -> (i32, i32) {
    %c0_i32 = arith.constant 0 : i32
    %c0_i32_0 = arith.constant 0 : i32
    %c0_i32_1 = arith.constant 0 : i32
    return %c0_i32, %c0_i32_0 : i32, i32
  }
  func.func @transform_4(%arg0: i32, %arg1: i32) -> (i32, i32) {
    %c0_i32 = arith.constant 0 : i32
    %c0_i32_0 = arith.constant 0 : i32
    %c0_i32_1 = arith.constant 0 : i32
    return %c0_i32, %c0_i32_0 : i32, i32
  }
  func.func @transform_5(%arg0: i32, %arg1: i32) -> (i32, i32) {
    %c0_i32 = arith.constant 0 : i32
    %c0_i32_0 = arith.constant 0 : i32
    %c0_i32_1 = arith.constant 0 : i32
    return %c0_i32, %c0_i32_0 : i32, i32
  }
  func.func @transform_6(%arg0: i32, %arg1: i32) -> (i32, i32) {
    %c0_i32 = arith.constant 0 : i32
    %c0_i32_0 = arith.constant 0 : i32
    %c0_i32_1 = arith.constant 0 : i32
    return %c0_i32, %c0_i32_0 : i32, i32
  }
  func.func @transform_7(%arg0: i32, %arg1: i32) -> (i32, i32, i32) {
    %c0_i32 = arith.constant 0 : i32
    %c0_i32_0 = arith.constant 0 : i32
    %c0_i32_1 = arith.constant 0 : i32
    return %arg0, %c0_i32, %c0_i32_0 : i32, i32, i32
  }
}

module attributes {stable_mosaic.version = 11 : i64} {
  func.func @_decoder_kernel(%arg0: i32, %arg1: memref<1x2x256xf32, #tpu.memory_space<vmem>>, %arg2: memref<1x128x256xf32, #tpu.memory_space<vmem>>, %arg3: memref<1x128x2xf32, #tpu.memory_space<vmem>>, %arg4: memref<1x64x128xbf16, #tpu.memory_space<vmem>>, %arg5: memref<1x64x1xf32, #tpu.memory_space<vmem>>, %arg6: memref<1x32x64xbf16, #tpu.memory_space<vmem>>, %arg7: memref<1x32x1xf32, #tpu.memory_space<vmem>>, %arg8: memref<1x3x32xbf16, #tpu.memory_space<vmem>>, %arg9: memref<1x3x1xf32, #tpu.memory_space<vmem>>, %arg10: memref<1x3x256xf32, #tpu.memory_space<vmem>>) attributes {dimension_semantics = [#tpu.dimension_semantics<parallel>], iteration_bounds = array<i64: 2>, scalar_prefetch = 0 : i64, scratch_operands = 0 : i64, tpu.core_type = #tpu.core_type<tc>, window_params = [{transform_indices = @transform_0, window_bounds = array<i64: 1, 2, 256>}, {transform_indices = @transform_1, window_bounds = array<i64: 1, 128, 256>}, {transform_indices = @transform_2, window_bounds = array<i64: 1, 128, 2>}, {transform_indices = @transform_3, window_bounds = array<i64: 1, 64, 128>}, {transform_indices = @transform_4, window_bounds = array<i64: 1, 64, 1>}, {transform_indices = @transform_5, window_bounds = array<i64: 1, 32, 64>}, {transform_indices = @transform_6, window_bounds = array<i64: 1, 32, 1>}, {transform_indices = @transform_7, window_bounds = array<i64: 1, 3, 32>}, {transform_indices = @transform_8, window_bounds = array<i64: 1, 3, 1>}, {transform_indices = @transform_9, window_bounds = array<i64: 1, 3, 256>}]} {
    %c0 = arith.constant 0 : index
    %c0_0 = arith.constant 0 : index
    %c0_1 = arith.constant 0 : index
    %0 = vector.load %arg1[%c0, %c0_0, %c0_1] : memref<1x2x256xf32, #tpu.memory_space<vmem>>, vector<1x2x256xf32>
    %1 = vector.shape_cast %0 : vector<1x2x256xf32> to vector<2x256xf32>
    %c0_2 = arith.constant 0 : index
    %c0_3 = arith.constant 0 : index
    %c0_4 = arith.constant 0 : index
    %2 = vector.load %arg3[%c0_2, %c0_3, %c0_4] : memref<1x128x2xf32, #tpu.memory_space<vmem>>, vector<1x128x2xf32>
    %3 = vector.shape_cast %2 : vector<1x128x2xf32> to vector<128x2xf32>
    %4 = vector.extract_strided_slice %3 {offsets = [0, 0], sizes = [128, 1], strides = [1, 1]} : vector<128x2xf32> to vector<128x1xf32>
    %5 = vector.extract_strided_slice %1 {offsets = [0, 0], sizes = [1, 256], strides = [1, 1]} : vector<2x256xf32> to vector<1x256xf32>
    %6 = vector.broadcast %4 : vector<128x1xf32> to vector<128x256xf32>
    %7 = vector.broadcast %5 : vector<1x256xf32> to vector<128x256xf32>
    %8 = arith.mulf %6, %7 : vector<128x256xf32>
    %9 = vector.extract_strided_slice %3 {offsets = [0, 1], sizes = [128, 1], strides = [1, 1]} : vector<128x2xf32> to vector<128x1xf32>
    %10 = vector.extract_strided_slice %1 {offsets = [1, 0], sizes = [1, 256], strides = [1, 1]} : vector<2x256xf32> to vector<1x256xf32>
    %11 = vector.broadcast %9 : vector<128x1xf32> to vector<128x256xf32>
    %12 = vector.broadcast %10 : vector<1x256xf32> to vector<128x256xf32>
    %13 = arith.mulf %11, %12 : vector<128x256xf32>
    %14 = arith.addf %8, %13 : vector<128x256xf32>
    %c0_5 = arith.constant 0 : index
    %c0_6 = arith.constant 0 : index
    %c0_7 = arith.constant 0 : index
    %15 = vector.load %arg2[%c0_5, %c0_6, %c0_7] : memref<1x128x256xf32, #tpu.memory_space<vmem>>, vector<1x128x256xf32>
    %16 = vector.shape_cast %15 : vector<1x128x256xf32> to vector<128x256xf32>
    %17 = arith.addf %14, %16 : vector<128x256xf32>
    %cst = arith.constant 0.000000e+00 : f32
    %18 = vector.broadcast %cst : f32 to vector<128x256xf32>
    %19 = arith.maximumf %17, %18 : vector<128x256xf32>
    %20 = arith.truncf %19 : vector<128x256xf32> to vector<128x256xbf16>
    %c0_8 = arith.constant 0 : index
    %c0_9 = arith.constant 0 : index
    %c0_10 = arith.constant 0 : index
    %21 = vector.load %arg4[%c0_8, %c0_9, %c0_10] : memref<1x64x128xbf16, #tpu.memory_space<vmem>>, vector<1x64x128xbf16>
    %22 = vector.shape_cast %21 : vector<1x64x128xbf16> to vector<64x128xbf16>
    %cst_11 = arith.constant dense<0.000000e+00> : vector<64x256xf32>
    %23 = tpu.matmul %22, %20, %cst_11 {dimension_numbers = #tpu.dot_dimension_numbers<[1], [0], [0], [1], [0, 0, 1, 1], [], []>} : vector<64x128xbf16>, vector<128x256xbf16>, vector<64x256xf32> -> vector<64x256xf32>
    %c0_12 = arith.constant 0 : index
    %c0_13 = arith.constant 0 : index
    %c0_14 = arith.constant 0 : index
    %24 = vector.load %arg5[%c0_12, %c0_13, %c0_14] : memref<1x64x1xf32, #tpu.memory_space<vmem>>, vector<1x64x1xf32>
    %25 = vector.shape_cast %24 : vector<1x64x1xf32> to vector<64x1xf32>
    %26 = vector.broadcast %25 : vector<64x1xf32> to vector<64x256xf32>
    %27 = arith.addf %23, %26 : vector<64x256xf32>
    %cst_15 = arith.constant 0.000000e+00 : f32
    %28 = vector.broadcast %cst_15 : f32 to vector<64x256xf32>
    %29 = arith.maximumf %27, %28 : vector<64x256xf32>
    %30 = arith.truncf %29 : vector<64x256xf32> to vector<64x256xbf16>
    %c0_16 = arith.constant 0 : index
    %c0_17 = arith.constant 0 : index
    %c0_18 = arith.constant 0 : index
    %31 = vector.load %arg6[%c0_16, %c0_17, %c0_18] : memref<1x32x64xbf16, #tpu.memory_space<vmem>>, vector<1x32x64xbf16>
    %32 = vector.shape_cast %31 : vector<1x32x64xbf16> to vector<32x64xbf16>
    %cst_19 = arith.constant dense<0.000000e+00> : vector<32x256xf32>
    %33 = tpu.matmul %32, %30, %cst_19 {dimension_numbers = #tpu.dot_dimension_numbers<[1], [0], [0], [1], [0, 0, 1, 1], [], []>} : vector<32x64xbf16>, vector<64x256xbf16>, vector<32x256xf32> -> vector<32x256xf32>
    %c0_20 = arith.constant 0 : index
    %c0_21 = arith.constant 0 : index
    %c0_22 = arith.constant 0 : index
    %34 = vector.load %arg7[%c0_20, %c0_21, %c0_22] : memref<1x32x1xf32, #tpu.memory_space<vmem>>, vector<1x32x1xf32>
    %35 = vector.shape_cast %34 : vector<1x32x1xf32> to vector<32x1xf32>
    %36 = vector.broadcast %35 : vector<32x1xf32> to vector<32x256xf32>
    %37 = arith.addf %33, %36 : vector<32x256xf32>
    %cst_23 = arith.constant 0.000000e+00 : f32
    %38 = vector.broadcast %cst_23 : f32 to vector<32x256xf32>
    %39 = arith.maximumf %37, %38 : vector<32x256xf32>
    %40 = arith.truncf %39 : vector<32x256xf32> to vector<32x256xbf16>
    %c0_24 = arith.constant 0 : index
    %c0_25 = arith.constant 0 : index
    %c0_26 = arith.constant 0 : index
    %41 = vector.load %arg8[%c0_24, %c0_25, %c0_26] : memref<1x3x32xbf16, #tpu.memory_space<vmem>>, vector<1x3x32xbf16>
    %42 = vector.shape_cast %41 : vector<1x3x32xbf16> to vector<3x32xbf16>
    %cst_27 = arith.constant dense<0.000000e+00> : vector<3x256xf32>
    %43 = tpu.matmul %42, %40, %cst_27 {dimension_numbers = #tpu.dot_dimension_numbers<[1], [0], [0], [1], [0, 0, 1, 1], [], []>} : vector<3x32xbf16>, vector<32x256xbf16>, vector<3x256xf32> -> vector<3x256xf32>
    %c0_28 = arith.constant 0 : index
    %c0_29 = arith.constant 0 : index
    %c0_30 = arith.constant 0 : index
    %44 = vector.load %arg9[%c0_28, %c0_29, %c0_30] : memref<1x3x1xf32, #tpu.memory_space<vmem>>, vector<1x3x1xf32>
    %45 = vector.shape_cast %44 : vector<1x3x1xf32> to vector<3x1xf32>
    %46 = vector.broadcast %45 : vector<3x1xf32> to vector<3x256xf32>
    %47 = arith.addf %43, %46 : vector<3x256xf32>
    %48 = math.tanh %47 : vector<3x256xf32>
    %c0_31 = arith.constant 0 : index
    %c0_32 = arith.constant 0 : index
    %c0_33 = arith.constant 0 : index
    %49 = vector.load %arg10[%c0_31, %c0_32, %c0_33] : memref<1x3x256xf32, #tpu.memory_space<vmem>>, vector<1x3x256xf32>
    %50 = vector.shape_cast %49 : vector<1x3x256xf32> to vector<3x256xf32>
    %51 = vector.shape_cast %48 : vector<3x256xf32> to vector<1x3x256xf32>
    tpu.vector_store %arg10[%c0_31, %c0_32, %c0_33], %51 {strides = array<i32>} : memref<1x3x256xf32, #tpu.memory_space<vmem>>, vector<1x3x256xf32>,
    return
  }
  func.func @transform_0(%arg0: i32) -> (i32, i32, i32) {
    %c0_i32 = arith.constant 0 : i32
    %c0_i32_0 = arith.constant 0 : i32
    %c0_i32_1 = arith.constant 0 : i32
    return %arg0, %c0_i32, %c0_i32_0 : i32, i32, i32
  }
  func.func @transform_1(%arg0: i32) -> (i32, i32, i32) {
    %c0_i32 = arith.constant 0 : i32
    %c0_i32_0 = arith.constant 0 : i32
    %c0_i32_1 = arith.constant 0 : i32
    return %arg0, %c0_i32, %c0_i32_0 : i32, i32, i32
  }
  func.func @transform_2(%arg0: i32) -> (i32, i32, i32) {
    %c0_i32 = arith.constant 0 : i32
    %c0_i32_0 = arith.constant 0 : i32
    %c0_i32_1 = arith.constant 0 : i32
    return %arg0, %c0_i32, %c0_i32_0 : i32, i32, i32
  }
  func.func @transform_3(%arg0: i32) -> (i32, i32, i32) {
    %c0_i32 = arith.constant 0 : i32
    %c0_i32_0 = arith.constant 0 : i32
    %c0_i32_1 = arith.constant 0 : i32
    return %arg0, %c0_i32, %c0_i32_0 : i32, i32, i32
  }
  func.func @transform_4(%arg0: i32) -> (i32, i32, i32) {
    %c0_i32 = arith.constant 0 : i32
    %c0_i32_0 = arith.constant 0 : i32
    %c0_i32_1 = arith.constant 0 : i32
    return %arg0, %c0_i32, %c0_i32_0 : i32, i32, i32
  }
  func.func @transform_5(%arg0: i32) -> (i32, i32, i32) {
    %c0_i32 = arith.constant 0 : i32
    %c0_i32_0 = arith.constant 0 : i32
    %c0_i32_1 = arith.constant 0 : i32
    return %arg0, %c0_i32, %c0_i32_0 : i32, i32, i32
  }
  func.func @transform_6(%arg0: i32) -> (i32, i32, i32) {
    %c0_i32 = arith.constant 0 : i32
    %c0_i32_0 = arith.constant 0 : i32
    %c0_i32_1 = arith.constant 0 : i32
    return %arg0, %c0_i32, %c0_i32_0 : i32, i32, i32
  }
  func.func @transform_7(%arg0: i32) -> (i32, i32, i32) {
    %c0_i32 = arith.constant 0 : i32
    %c0_i32_0 = arith.constant 0 : i32
    %c0_i32_1 = arith.constant 0 : i32
    return %arg0, %c0_i32, %c0_i32_0 : i32, i32, i32
  }
  func.func @transform_8(%arg0: i32) -> (i32, i32, i32) {
    %c0_i32 = arith.constant 0 : i32
    %c0_i32_0 = arith.constant 0 : i32
    %c0_i32_1 = arith.constant 0 : i32
    return %arg0, %c0_i32, %c0_i32_0 : i32, i32, i32
  }
  func.func @transform_9(%arg0: i32) -> (i32, i32, i32) {
    %c0_i32 = arith.constant 0 : i32
    %c0_i32_0 = arith.constant 0 : i32
    %c0_i32_1 = arith.constant 0 : i32
    return %arg0, %c0_i32, %c0_i32_0 : i32, i32, i32
  }
}

</mosaic_0001>

<llo_original>
// kernel: atlasnet_forward.3
$region0: #{atlasnet_forward.3}
  #allocation0 [shape = 'u32[]', space=smem, size = 0x4, offset = 0x4, fixed_abs, tag = 'smem constant byte address 0x4 - core index']
  #allocation1 [shape = 'u32[144,128]{1,0:T(1,128)}', space=vmem, size = 0x12000, scoped, tag = 'internal scratch']
  %s0 = inlined_call_operand.vmem [shape: f32[2,2,256], index: 0, kind: input, shape index: {}]
  %s1 = inlined_call_operand.vmem [shape: f32[2,128,256], index: 1, kind: input, shape index: {}]
  %s2 = inlined_call_operand.vmem [shape: f32[2,128,2], index: 2, kind: input, shape index: {}]
  %s3 = inlined_call_operand.vmem [shape: bf16[2,64,128], index: 3, kind: input, shape index: {}]
  %s4 = inlined_call_operand.vmem [shape: f32[2,64,1], index: 4, kind: input, shape index: {}]
  %s5 = inlined_call_operand.vmem [shape: bf16[2,32,64], index: 5, kind: input, shape index: {}]
  %s6 = inlined_call_operand.vmem [shape: f32[2,32,1], index: 6, kind: input, shape index: {}]
  %s7 = inlined_call_operand.vmem [shape: bf16[2,3,32], index: 7, kind: input, shape index: {}]
  %s8 = inlined_call_operand.vmem [shape: f32[2,3,1], index: 8, kind: input, shape index: {}]
  %s9 = inlined_call_operand.vmem [shape: f32[2,3,256], index: 9, kind: output, shape index: {}]
  %s10 = sld [smem:[#allocation0]]
  $region69: #{atlasnet_forward.3} parent=0
    _
  %s12 = ssub.s32 1, %s10
  %s13 = scalar_select 0, %s12, %s10
  loop: start=0, step=1, limit=4
  $region2: #{atlasnet_forward.3} parent=0 // loop_pre_header
    _
  $region3: #{atlasnet_forward.3} parent=0 // loop_header
    %s15 = sphi 0, %s19
    %p16 = scmp.ge.s32.totalorder %s15, 4
    %s25 = sphi 0, %s27
    %s28 = sphi 0, %s25
    %s29 = sphi 0, %s28
    %s45 = sphi 0, %s29
    %s51 = sphi 0, %s53
    %s54 = sphi 0, %s51
    %s55 = sphi 0, %s54
    %s71 = sphi 0, %s55
    %s77 = sphi 0, %s79
    %s80 = sphi 0, %s77
    %s81 = sphi 0, %s80
    %s97 = sphi 0, %s81
    %s103 = sphi 0, %s105
    %s106 = sphi 0, %s103
    %s107 = sphi 0, %s106
    %s123 = sphi 0, %s107
    %s129 = sphi 0, %s131
    %s132 = sphi 0, %s129
    %s133 = sphi 0, %s132
    %s149 = sphi 0, %s133
    %s155 = sphi 0, %s157
    %s158 = sphi 0, %s155
    %s159 = sphi 0, %s158
    %s175 = sphi 0, %s159
    %s181 = sphi 0, %s183
    %s184 = sphi 0, %s181
    %s185 = sphi 0, %s184
    %s201 = sphi 0, %s185
    %s207 = sphi 0, %s209
    %s210 = sphi 0, %s207
    %s211 = sphi 0, %s210
    %s227 = sphi 0, %s211
    %s233 = sphi 0, %s235
    %s236 = sphi 0, %s233
    %s237 = sphi 0, %s236
    %s253 = sphi 0, %s237
    %s259 = sphi 0, %s261
    %s262 = sphi 0, %s259
    %s263 = sphi 0, %s262
    %s279 = sphi 0, %s263
  $region4: #{atlasnet_forward.3} parent=0 // loop_header_branch
    %18 = sbr.rel (%p16) target = $region8
  $region5: #{atlasnet_forward.3} parent=0 // loop_body
    %s20 = ssub.s32 %s15, 1
    %s21 = ssub.s32 %s15, 2
    %s22 = sadd.s32 %s15, 1
    %s23 = ssub.s32 %s15, %s22
    %p24 = scmp.eq.s32.totalorder %s23, 0
    %s26 = sadd.s32 %s25, 1
    %s27 = scalar_select %p24, %s25, %s26
    %p30 = pneg %p24
    %p31 = scmp.eq.s32.totalorder %s15, 1
    %p32 = por %p30, %p31
    %p33 = scmp.ne.s32.totalorder %s25, %s28
    %p34 = scmp.eq.s32.totalorder %s15, 0
    %p35 = por %p33, %p34
    %p36 = scmp.ne.s32.totalorder %s25, %s28
    %p37 = scmp.eq.s32.totalorder %s20, 1
    %p38 = por %p36, %p37
    %p39 = scmp.ne.s32.totalorder %s28, %s29
    %p40 = scmp.eq.s32.totalorder %s20, 0
    %p41 = por %p39, %p40
    %p42 = scmp.ne.s32.totalorder %s28, %s29
    %p43 = scmp.eq.s32.totalorder %s21, 1
    %p44 = por %p42, %p43
    %p46 = scmp.ne.s32.totalorder %s29, %s45
    %p47 = scmp.eq.s32.totalorder %s21, 0
    %p48 = por %p46, %p47
    %s49 = ssub.s32 %s15, %s22
    %p50 = scmp.eq.s32.totalorder %s49, 0
    %s52 = sadd.s32 %s51, 1
    %s53 = scalar_select %p50, %s51, %s52
    %p56 = pneg %p50
    %p57 = scmp.eq.s32.totalorder %s15, 1
    %p58 = por %p56, %p57
    %p59 = scmp.ne.s32.totalorder %s51, %s54
    %p60 = scmp.eq.s32.totalorder %s15, 0
    %p61 = por %p59, %p60
    %p62 = scmp.ne.s32.totalorder %s51, %s54
    %p63 = scmp.eq.s32.totalorder %s20, 1
    %p64 = por %p62, %p63
    %p65 = scmp.ne.s32.totalorder %s54, %s55
    %p66 = scmp.eq.s32.totalorder %s20, 0
    %p67 = por %p65, %p66
    %p68 = scmp.ne.s32.totalorder %s54, %s55
    %p69 = scmp.eq.s32.totalorder %s21, 1
    %p70 = por %p68, %p69
    %p72 = scmp.ne.s32.totalorder %s55, %s71
    %p73 = scmp.eq.s32.totalorder %s21, 0
    %p74 = por %p72, %p73
    %s75 = ssub.s32 %s15, %s22
    %p76 = scmp.eq.s32.totalorder %s75, 0
    %s78 = sadd.s32 %s77, 1
    %s79 = scalar_select %p76, %s77, %s78
    %p82 = pneg %p76
    %p83 = scmp.eq.s32.totalorder %s15, 1
    %p84 = por %p82, %p83
    %p85 = scmp.ne.s32.totalorder %s77, %s80
    %p86 = scmp.eq.s32.totalorder %s15, 0
    %p87 = por %p85, %p86
    %p88 = scmp.ne.s32.totalorder %s77, %s80
    %p89 = scmp.eq.s32.totalorder %s20, 1
    %p90 = por %p88, %p89
    %p91 = scmp.ne.s32.totalorder %s80, %s81
    %p92 = scmp.eq.s32.totalorder %s20, 0
    %p93 = por %p91, %p92
    %p94 = scmp.ne.s32.totalorder %s80, %s81
    %p95 = scmp.eq.s32.totalorder %s21, 1
    %p96 = por %p94, %p95
    %p98 = scmp.ne.s32.totalorder %s81, %s97
    %p99 = scmp.eq.s32.totalorder %s21, 0
    %p100 = por %p98, %p99
    %s101 = ssub.s32 %s15, %s22
    %p102 = scmp.eq.s32.totalorder %s101, 0
    %s104 = sadd.s32 %s103, 1
    %s105 = scalar_select %p102, %s103, %s104
    %p108 = pneg %p102
    %p109 = scmp.eq.s32.totalorder %s15, 1
    %p110 = por %p108, %p109
    %p111 = scmp.ne.s32.totalorder %s103, %s106
    %p112 = scmp.eq.s32.totalorder %s15, 0
    %p113 = por %p111, %p112
    %p114 = scmp.ne.s32.totalorder %s103, %s106
    %p115 = scmp.eq.s32.totalorder %s20, 1
    %p116 = por %p114, %p115
    %p117 = scmp.ne.s32.totalorder %s106, %s107
    %p118 = scmp.eq.s32.totalorder %s20, 0
    %p119 = por %p117, %p118
    %p120 = scmp.ne.s32.totalorder %s106, %s107
    %p121 = scmp.eq.s32.totalorder %s21, 1
    %p122 = por %p120, %p121
    %p124 = scmp.ne.s32.totalorder %s107, %s123
    %p125 = scmp.eq.s32.totalorder %s21, 0
    %p126 = por %p124, %p125
    %s127 = ssub.s32 %s15, %s22
    %p128 = scmp.eq.s32.totalorder %s127, 0
    %s130 = sadd.s32 %s129, 1
    %s131 = scalar_select %p128, %s129, %s130
    %p134 = pneg %p128
    %p135 = scmp.eq.s32.totalorder %s15, 1
    %p136 = por %p134, %p135
    %p137 = scmp.ne.s32.totalorder %s129, %s132
    %p138 = scmp.eq.s32.totalorder %s15, 0
    %p139 = por %p137, %p138
    %p140 = scmp.ne.s32.totalorder %s129, %s132
    %p141 = scmp.eq.s32.totalorder %s20, 1
    %p142 = por %p140, %p141
    %p143 = scmp.ne.s32.totalorder %s132, %s133
    %p144 = scmp.eq.s32.totalorder %s20, 0
    %p145 = por %p143, %p144
    %p146 = scmp.ne.s32.totalorder %s132, %s133
    %p147 = scmp.eq.s32.totalorder %s21, 1
    %p148 = por %p146, %p147
    %p150 = scmp.ne.s32.totalorder %s133, %s149
    %p151 = scmp.eq.s32.totalorder %s21, 0
    %p152 = por %p150, %p151
    %s153 = ssub.s32 %s15, %s22
    %p154 = scmp.eq.s32.totalorder %s153, 0
    %s156 = sadd.s32 %s155, 1
    %s157 = scalar_select %p154, %s155, %s156
    %p160 = pneg %p154
    %p161 = scmp.eq.s32.totalorder %s15, 1
    %p162 = por %p160, %p161
    %p163 = scmp.ne.s32.totalorder %s155, %s158
    %p164 = scmp.eq.s32.totalorder %s15, 0
    %p165 = por %p163, %p164
    %p166 = scmp.ne.s32.totalorder %s155, %s158
    %p167 = scmp.eq.s32.totalorder %s20, 1
    %p168 = por %p166, %p167
    %p169 = scmp.ne.s32.totalorder %s158, %s159
    %p170 = scmp.eq.s32.totalorder %s20, 0
    %p171 = por %p169, %p170
    %p172 = scmp.ne.s32.totalorder %s158, %s159
    %p173 = scmp.eq.s32.totalorder %s21, 1
    %p174 = por %p172, %p173
    %p176 = scmp.ne.s32.totalorder %s159, %s175
    %p177 = scmp.eq.s32.totalorder %s21, 0
    %p178 = por %p176, %p177
    %s179 = ssub.s32 %s15, %s22
    %p180 = scmp.eq.s32.totalorder %s179, 0
    %s182 = sadd.s32 %s181, 1
    %s183 = scalar_select %p180, %s181, %s182
    %p186 = pneg %p180
    %p187 = scmp.eq.s32.totalorder %s15, 1
    %p188 = por %p186, %p187
    %p189 = scmp.ne.s32.totalorder %s181, %s184
    %p190 = scmp.eq.s32.totalorder %s15, 0
    %p191 = por %p189, %p190
    %p192 = scmp.ne.s32.totalorder %s181, %s184
    %p193 = scmp.eq.s32.totalorder %s20, 1
    %p194 = por %p192, %p193
    %p195 = scmp.ne.s32.totalorder %s184, %s185
    %p196 = scmp.eq.s32.totalorder %s20, 0
    %p197 = por %p195, %p196
    %p198 = scmp.ne.s32.totalorder %s184, %s185
    %p199 = scmp.eq.s32.totalorder %s21, 1
    %p200 = por %p198, %p199
    %p202 = scmp.ne.s32.totalorder %s185, %s201
    %p203 = scmp.eq.s32.totalorder %s21, 0
    %p204 = por %p202, %p203
    %s205 = ssub.s32 %s15, %s22
    %p206 = scmp.eq.s32.totalorder %s205, 0
    %s208 = sadd.s32 %s207, 1
    %s209 = scalar_select %p206, %s207, %s208
    %p212 = pneg %p206
    %p213 = scmp.eq.s32.totalorder %s15, 1
    %p214 = por %p212, %p213
    %p215 = scmp.ne.s32.totalorder %s207, %s210
    %p216 = scmp.eq.s32.totalorder %s15, 0
    %p217 = por %p215, %p216
    %p218 = scmp.ne.s32.totalorder %s207, %s210
    %p219 = scmp.eq.s32.totalorder %s20, 1
    %p220 = por %p218, %p219
    %p221 = scmp.ne.s32.totalorder %s210, %s211
    %p222 = scmp.eq.s32.totalorder %s20, 0
    %p223 = por %p221, %p222
    %p224 = scmp.ne.s32.totalorder %s210, %s211
    %p225 = scmp.eq.s32.totalorder %s21, 1
    %p226 = por %p224, %p225
    %p228 = scmp.ne.s32.totalorder %s211, %s227
    %p229 = scmp.eq.s32.totalorder %s21, 0
    %p230 = por %p228, %p229
    %s231 = ssub.s32 %s15, %s22
    %p232 = scmp.eq.s32.totalorder %s231, 0
    %s234 = sadd.s32 %s233, 1
    %s235 = scalar_select %p232, %s233, %s234
    %p238 = pneg %p232
    %p239 = scmp.eq.s32.totalorder %s15, 1
    %p240 = por %p238, %p239
    %p241 = scmp.ne.s32.totalorder %s233, %s236
    %p242 = scmp.eq.s32.totalorder %s15, 0
    %p243 = por %p241, %p242
    %p244 = scmp.ne.s32.totalorder %s233, %s236
    %p245 = scmp.eq.s32.totalorder %s20, 1
    %p246 = por %p244, %p245
    %p247 = scmp.ne.s32.totalorder %s236, %s237
    %p248 = scmp.eq.s32.totalorder %s20, 0
    %p249 = por %p247, %p248
    %p250 = scmp.ne.s32.totalorder %s236, %s237
    %p251 = scmp.eq.s32.totalorder %s21, 1
    %p252 = por %p250, %p251
    %p254 = scmp.ne.s32.totalorder %s237, %s253
    %p255 = scmp.eq.s32.totalorder %s21, 0
    %p256 = por %p254, %p255
    %s257 = ssub.s32 %s15, %s22
    %p258 = scmp.eq.s32.totalorder %s257, 0
    %s260 = sadd.s32 %s259, 1
    %s261 = scalar_select %p258, %s259, %s260
    %p264 = pneg %p258
    %p265 = scmp.eq.s32.totalorder %s15, 1
    %p266 = por %p264, %p265
    %p267 = scmp.ne.s32.totalorder %s259, %s262
    %p268 = scmp.eq.s32.totalorder %s15, 0
    %p269 = por %p267, %p268
    %p270 = scmp.ne.s32.totalorder %s259, %s262
    %p271 = scmp.eq.s32.totalorder %s20, 1
    %p272 = por %p270, %p271
    %p273 = scmp.ne.s32.totalorder %s262, %s263
    %p274 = scmp.eq.s32.totalorder %s20, 0
    %p275 = por %p273, %p274
    %p276 = scmp.ne.s32.totalorder %s262, %s263
    %p277 = scmp.eq.s32.totalorder %s21, 1
    %p278 = por %p276, %p277
    %p280 = scmp.ne.s32.totalorder %s263, %s279
    %p281 = scmp.eq.s32.totalorder %s21, 0
    %p282 = por %p280, %p281
    %p283 = scmp.le.s32.totalorder 1, %s15
    %p284 = scmp.lt.s32.totalorder %s15, 3
    %p285 = pnand %p283, %p284
    %p286 = pneg %p285
    // Predicated region
    $region9: #{atlasnet_forward.3} parent=5 // pred_check
      _
    $region10: #{atlasnet_forward.3} parent=5 // pred_check_branch
      %288 = sbr.rel (%p285) target = $region12
    $region11: #{atlasnet_forward.3} parent=5 // pred_region
      %s289 = ssub.s32 %s15, 1
    $region12: #{atlasnet_forward.3} parent=5 // pred_fallthru
      _
    %p290 = scmp.lt.s32.totalorder %s15, 2
    // Predicated region
    $region13: #{atlasnet_forward.3} parent=5 // pred_check
      %p291 = pneg %p290
    $region14: #{atlasnet_forward.3} parent=5 // pred_check_branch
      %293 = sbr.rel (%p291) target = $region16
    $region15: #{atlasnet_forward.3} parent=5 // pred_region
      // Predicated region
      $region17: #{atlasnet_forward.3} parent=15 // pred_check
        %p294 = pneg %p35
      $region18: #{atlasnet_forward.3} parent=15 // pred_check_branch
        %296 = sbr.rel (%p294) target = $region20
      $region19: #{atlasnet_forward.3} parent=15 // pred_region
        %p297 = scmp.lt.s32.totalorder %s15, 1
        %s298 = scalar_select %p297, %s15, 1
        %s299 = smul.addr %s298, 2
        %s300 = smul.addr %s299, 2
        %s301 = scalar_lea.vmem %s0, %s300
      $region20: #{atlasnet_forward.3} parent=15 // pred_fallthru
        _
      // Predicated region
      $region21: #{atlasnet_forward.3} parent=15 // pred_check
        %p302 = pneg %p61
      $region22: #{atlasnet_forward.3} parent=15 // pred_check_branch
        %304 = sbr.rel (%p302) target = $region24
      $region23: #{atlasnet_forward.3} parent=15 // pred_region
        %p305 = scmp.lt.s32.totalorder %s15, 1
        %s306 = scalar_select %p305, %s15, 1
        %s307 = smul.addr %s306, 32
        %s308 = smul.addr %s307, 8
        %s309 = scalar_lea.vmem %s1, %s308
      $region24: #{atlasnet_forward.3} parent=15 // pred_fallthru
        _
      // Predicated region
      $region25: #{atlasnet_forward.3} parent=15 // pred_check
        %p310 = pneg %p87
      $region26: #{atlasnet_forward.3} parent=15 // pred_check_branch
        %312 = sbr.rel (%p310) target = $region28
      $region27: #{atlasnet_forward.3} parent=15 // pred_region
        %p313 = scmp.lt.s32.totalorder %s15, 1
        %s314 = scalar_select %p313, %s15, 1
        %s315 = smul.addr %s314, 16
        %s316 = smul.addr %s315, 8
        %s317 = scalar_lea.vmem %s2, %s316
      $region28: #{atlasnet_forward.3} parent=15 // pred_fallthru
        _
      // Predicated region
      $region29: #{atlasnet_forward.3} parent=15 // pred_check
        %p318 = pneg %p113
      $region30: #{atlasnet_forward.3} parent=15 // pred_check_branch
        %320 = sbr.rel (%p318) target = $region32
      $region31: #{atlasnet_forward.3} parent=15 // pred_region
        %p321 = scmp.lt.s32.totalorder %s15, 1
        %s322 = scalar_select %p321, %s15, 1
        %s323 = smul.addr %s322, 8
        %s324 = smul.addr %s323, 4
        %s325 = scalar_lea.vmem %s3, %s324
      $region32: #{atlasnet_forward.3} parent=15 // pred_fallthru
        _
      // Predicated region
      $region33: #{atlasnet_forward.3} parent=15 // pred_check
        %p326 = pneg %p139
      $region34: #{atlasnet_forward.3} parent=15 // pred_check_branch
        %328 = sbr.rel (%p326) target = $region36
      $region35: #{atlasnet_forward.3} parent=15 // pred_region
        %p329 = scmp.lt.s32.totalorder %s15, 1
        %s330 = scalar_select %p329, %s15, 1
        %s331 = smul.addr %s330, 8
        %s332 = smul.addr %s331, 8
        %s333 = scalar_lea.vmem %s4, %s332
      $region36: #{atlasnet_forward.3} parent=15 // pred_fallthru
        _
      // Predicated region
      $region37: #{atlasnet_forward.3} parent=15 // pred_check
        %p334 = pneg %p165
      $region38: #{atlasnet_forward.3} parent=15 // pred_check_branch
        %336 = sbr.rel (%p334) target = $region40
      $region39: #{atlasnet_forward.3} parent=15 // pred_region
        %p337 = scmp.lt.s32.totalorder %s15, 1
        %s338 = scalar_select %p337, %s15, 1
        %s339 = smul.addr %s338, 4
        %s340 = smul.addr %s339, 4
        %s341 = scalar_lea.vmem %s5, %s340
      $region40: #{atlasnet_forward.3} parent=15 // pred_fallthru
        _
      // Predicated region
      $region41: #{atlasnet_forward.3} parent=15 // pred_check
        %p342 = pneg %p191
      $region42: #{atlasnet_forward.3} parent=15 // pred_check_branch
        %344 = sbr.rel (%p342) target = $region44
      $region43: #{atlasnet_forward.3} parent=15 // pred_region
        %p345 = scmp.lt.s32.totalorder %s15, 1
        %s346 = scalar_select %p345, %s15, 1
        %s347 = smul.addr %s346, 4
        %s348 = smul.addr %s347, 8
        %s349 = scalar_lea.vmem %s6, %s348
      $region44: #{atlasnet_forward.3} parent=15 // pred_fallthru
        _
      // Predicated region
      $region45: #{atlasnet_forward.3} parent=15 // pred_check
        %p350 = pneg %p217
      $region46: #{atlasnet_forward.3} parent=15 // pred_check_branch
        %352 = sbr.rel (%p350) target = $region48
      $region47: #{atlasnet_forward.3} parent=15 // pred_region
        %p353 = scmp.lt.s32.totalorder %s15, 1
        %s354 = scalar_select %p353, %s15, 1
        %s355 = smul.addr %s354, 2
        %s356 = scalar_lea.vmem %s7, %s355
      $region48: #{atlasnet_forward.3} parent=15 // pred_fallthru
        _
      // Predicated region
      $region49: #{atlasnet_forward.3} parent=15 // pred_check
        %p357 = pneg %p243
      $region50: #{atlasnet_forward.3} parent=15 // pred_check_branch
        %359 = sbr.rel (%p357) target = $region52
      $region51: #{atlasnet_forward.3} parent=15 // pred_region
        %p360 = scmp.lt.s32.totalorder %s15, 1
        %s361 = scalar_select %p360, %s15, 1
        %s362 = smul.addr %s361, 4
        %s363 = scalar_lea.vmem %s8, %s362
      $region52: #{atlasnet_forward.3} parent=15 // pred_fallthru
        _
    $region16: #{atlasnet_forward.3} parent=5 // pred_fallthru
      _
    %p364 = scmp.le.s32.totalorder 1, %s15
    %p365 = scmp.lt.s32.totalorder %s15, 3
    %p366 = pnand %p364, %p365
    %p367 = pneg %p366
    // Predicated region
    $region53: #{atlasnet_forward.3} parent=5 // pred_check
      _
    $region54: #{atlasnet_forward.3} parent=5 // pred_check_branch
      %369 = sbr.rel (%p366) target = $region56
    $region55: #{atlasnet_forward.3} parent=5 // pred_region
      %s370 = ssub.s32 %s15, 1
      %p371 = scmp.lt.s32.totalorder %s20, 1
      %s372 = scalar_select %p371, %s20, 1
      %s373 = smul.addr %s372, 2
      %s374 = smul.addr %s373, 2
      %s375 = scalar_lea.vmem %s0, %s374
      %p376 = pneg %p41
      %p377 = pneg %p38
      %p378 = scmp.lt.s32.totalorder %s20, 1
      %s379 = scalar_select %p378, %s20, 1
      %s380 = smul.addr %s379, 32
      %s381 = smul.addr %s380, 8
      %s382 = scalar_lea.vmem %s1, %s381
      %p383 = pneg %p67
      %p384 = pneg %p64
      %p385 = scmp.lt.s32.totalorder %s20, 1
      %s386 = scalar_select %p385, %s20, 1
      %s387 = smul.addr %s386, 16
      %s388 = smul.addr %s387, 8
      %s389 = scalar_lea.vmem %s2, %s388
      %p390 = pneg %p93
      %p391 = pneg %p90
      %p392 = scmp.lt.s32.totalorder %s20, 1
      %s393 = scalar_select %p392, %s20, 1
      %s394 = smul.addr %s393, 8
      %s395 = smul.addr %s394, 4
      %s396 = scalar_lea.vmem %s3, %s395
      %p397 = pneg %p119
      %p398 = pneg %p116
      %p399 = scmp.lt.s32.totalorder %s20, 1
      %s400 = scalar_select %p399, %s20, 1
      %s401 = smul.addr %s400, 8
      %s402 = smul.addr %s401, 8
      %s403 = scalar_lea.vmem %s4, %s402
      %p404 = pneg %p145
      %p405 = pneg %p142
      %p406 = scmp.lt.s32.totalorder %s20, 1
      %s407 = scalar_select %p406, %s20, 1
      %s408 = smul.addr %s407, 4
      %s409 = smul.addr %s408, 4
      %s410 = scalar_lea.vmem %s5, %s409
      %p411 = pneg %p171
      %p412 = pneg %p168
      %p413 = scmp.lt.s32.totalorder %s20, 1
      %s414 = scalar_select %p413, %s20, 1
      %s415 = smul.addr %s414, 4
      %s416 = smul.addr %s415, 8
      %s417 = scalar_lea.vmem %s6, %s416
      %p418 = pneg %p197
      %p419 = pneg %p194
      %p420 = scmp.lt.s32.totalorder %s20, 1
      %s421 = scalar_select %p420, %s20, 1
      %s422 = smul.addr %s421, 2
      %s423 = scalar_lea.vmem %s7, %s422
      %p424 = pneg %p223
      %p425 = pneg %p220
      %p426 = scmp.lt.s32.totalorder %s20, 1
      %s427 = scalar_select %p426, %s20, 1
      %s428 = smul.addr %s427, 4
      %s429 = scalar_lea.vmem %s8, %s428
      %p430 = pneg %p249
      %p431 = pneg %p246
      %p432 = pneg %p275
      %p433 = pneg %p272
      %p434 = scmp.lt.s32.totalorder %s20, 1
      %s435 = scalar_select %p434, %s20, 1
      %s436 = smul.addr %s435, 2
      %s437 = smul.addr %s436, 4
      %s438 = scalar_lea.vmem %s9, %s437
      %p439 = scmp.lt.s32.totalorder %s20, 1
      %s440 = scalar_select %p439, %s20, 1
      %s441 = smul.addr %s440, 2
      %s442 = smul.addr %s441, 2
      %s443 = scalar_lea.vmem %s0, %s442
      %p444 = scmp.lt.s32.totalorder %s20, 1
      %s445 = scalar_select %p444, %s20, 1
      %s446 = smul.addr %s445, 32
      %s447 = smul.addr %s446, 8
      %s448 = scalar_lea.vmem %s1, %s447
      %p449 = scmp.lt.s32.totalorder %s20, 1
      %s450 = scalar_select %p449, %s20, 1
      %s451 = smul.addr %s450, 16
      %s452 = smul.addr %s451, 8
      %s453 = scalar_lea.vmem %s2, %s452
      %p454 = scmp.lt.s32.totalorder %s20, 1
      %s455 = scalar_select %p454, %s20, 1
      %s456 = smul.addr %s455, 8
      %s457 = smul.addr %s456, 4
      %s458 = scalar_lea.vmem %s3, %s457
      %p459 = scmp.lt.s32.totalorder %s20, 1
      %s460 = scalar_select %p459, %s20, 1
      %s461 = smul.addr %s460, 8
      %s462 = smul.addr %s461, 8
      %s463 = scalar_lea.vmem %s4, %s462
      %p464 = scmp.lt.s32.totalorder %s20, 1
      %s465 = scalar_select %p464, %s20, 1
      %s466 = smul.addr %s465, 4
      %s467 = smul.addr %s466, 4
      %s468 = scalar_lea.vmem %s5, %s467
      %p469 = scmp.lt.s32.totalorder %s20, 1
      %s470 = scalar_select %p469, %s20, 1
      %s471 = smul.addr %s470, 4
      %s472 = smul.addr %s471, 8
      %s473 = scalar_lea.vmem %s6, %s472
      %p474 = scmp.lt.s32.totalorder %s20, 1
      %s475 = scalar_select %p474, %s20, 1
      %s476 = smul.addr %s475, 2
      %s477 = scalar_lea.vmem %s7, %s476
      %p478 = scmp.lt.s32.totalorder %s20, 1
      %s479 = scalar_select %p478, %s20, 1
      %s480 = smul.addr %s479, 4
      %s481 = scalar_lea.vmem %s8, %s480
      %p482 = scmp.lt.s32.totalorder %s20, 1
      %s483 = scalar_select %p482, %s20, 1
      %s484 = smul.addr %s483, 2
      %s485 = smul.addr %s484, 4
      %s486 = scalar_lea.vmem %s9, %s485
      %v488 = vld [vmem:[%s443] sm:$0xf]
      %v489 = vld [vmem:[%s453] sm:$0xff]
      %v490 = vld [vmem:[%s453 + $0x8] sm:$0xff]
      %v491 = vld [vmem:[%s453 + $0x10] sm:$0xff]
      %v492 = vld [vmem:[%s453 + $0x18] sm:$0xff]
      %v493 = vld [vmem:[%s453 + $0x20] sm:$0xff]
      %v494 = vld [vmem:[%s453 + $0x28] sm:$0xff]
      %v495 = vld [vmem:[%s453 + $0x30] sm:$0xff]
      %v496 = vld [vmem:[%s453 + $0x38] sm:$0xff]
      %v497 = vld [vmem:[%s453 + $0x40] sm:$0xff]
      %v498 = vld [vmem:[%s453 + $0x48] sm:$0xff]
      %v499 = vld [vmem:[%s453 + $0x50] sm:$0xff]
      %v500 = vld [vmem:[%s453 + $0x58] sm:$0xff]
      %v501 = vld [vmem:[%s453 + $0x60] sm:$0xff]
      %v502 = vld [vmem:[%s453 + $0x68] sm:$0xff]
      %v503 = vld [vmem:[%s453 + $0x70] sm:$0xff]
      %v504 = vld [vmem:[%s453 + $0x78] sm:$0xff]
      %506 = vset.pattern.permute.xlu0 0
      %507 = vperm.xlu0 %506, %v489
      %v508 = vpop.permute.xlu0 %507
      %511 = vset.pattern.permute.xlu0 0
      %512 = vperm.xlu0 %511, %v490
      %v513 = vpop.permute.xlu0 %512
      %516 = vset.pattern.permute.xlu0 0
      %517 = vperm.xlu0 %516, %v491
      %v518 = vpop.permute.xlu0 %517
      %521 = vset.pattern.permute.xlu0 0
      %522 = vperm.xlu0 %521, %v492
      %v523 = vpop.permute.xlu0 %522
      %526 = vset.pattern.permute.xlu0 0
      %527 = vperm.xlu0 %526, %v493
      %v528 = vpop.permute.xlu0 %527
      %531 = vset.pattern.permute.xlu0 0
      %532 = vperm.xlu0 %531, %v494
      %v533 = vpop.permute.xlu0 %532
      %536 = vset.pattern.permute.xlu0 0
      %537 = vperm.xlu0 %536, %v495
      %v538 = vpop.permute.xlu0 %537
      %541 = vset.pattern.permute.xlu0 0
      %542 = vperm.xlu0 %541, %v496
      %v543 = vpop.permute.xlu0 %542
      %546 = vset.pattern.permute.xlu0 0
      %547 = vperm.xlu0 %546, %v497
      %v548 = vpop.permute.xlu0 %547
      %551 = vset.pattern.permute.xlu0 0
      %552 = vperm.xlu0 %551, %v498
      %v553 = vpop.permute.xlu0 %552
      %556 = vset.pattern.permute.xlu0 0
      %557 = vperm.xlu0 %556, %v499
      %v558 = vpop.permute.xlu0 %557
      %561 = vset.pattern.permute.xlu0 0
      %562 = vperm.xlu0 %561, %v500
      %v563 = vpop.permute.xlu0 %562
      %566 = vset.pattern.permute.xlu0 0
      %567 = vperm.xlu0 %566, %v501
      %v568 = vpop.permute.xlu0 %567
      %571 = vset.pattern.permute.xlu0 0
      %572 = vperm.xlu0 %571, %v502
      %v573 = vpop.permute.xlu0 %572
      %576 = vset.pattern.permute.xlu0 0
      %577 = vperm.xlu0 %576, %v503
      %v578 = vpop.permute.xlu0 %577
      %581 = vset.pattern.permute.xlu0 0
      %582 = vperm.xlu0 %581, %v504
      %v583 = vpop.permute.xlu0 %582
      %v586 = vlaneseq
      %v587 = vshrl.u32 %v586, 7
      %v588 = vsub.s32 0, %v587
      %v589 = vrot.slane %v488, %v588
      %v590 = vlaneseq
      %v591 = vshrl.u32 %v590, 7
      %v592 = vsub.s32 2, %v591
      %v593 = vrot.slane %v488, %v592
      %v596 = vlaneseq
      %v597 = vshrl.u32 %v596, 7
      %v598 = vsub.s32 0, %v597
      %v599 = vrot.slane %v589, %v598
      %v600 = vlaneseq
      %v601 = vshrl.u32 %v600, 7
      %v602 = vsub.s32 0, %v601
      %v603 = vrot.slane %v593, %v602
      %v604 = vmul.f32 %v508, %v599
      %v605 = vmul.f32 %v508, %v603
      %v606 = vmul.f32 %v513, %v599
      %v607 = vmul.f32 %v513, %v603
      %v608 = vmul.f32 %v518, %v599
      %v609 = vmul.f32 %v518, %v603
      %v610 = vmul.f32 %v523, %v599
      %v611 = vmul.f32 %v523, %v603
      %v612 = vmul.f32 %v528, %v599
      %v613 = vmul.f32 %v528, %v603
      %v614 = vmul.f32 %v533, %v599
      %v615 = vmul.f32 %v533, %v603
      %v616 = vmul.f32 %v538, %v599
      %v617 = vmul.f32 %v538, %v603
      %v618 = vmul.f32 %v543, %v599
      %v619 = vmul.f32 %v543, %v603
      %v620 = vmul.f32 %v548, %v599
      %v621 = vmul.f32 %v548, %v603
      %v622 = vmul.f32 %v553, %v599
      %v623 = vmul.f32 %v553, %v603
      %v624 = vmul.f32 %v558, %v599
      %v625 = vmul.f32 %v558, %v603
      %v626 = vmul.f32 %v563, %v599
      %v627 = vmul.f32 %v563, %v603
      %v628 = vmul.f32 %v568, %v599
      %v629 = vmul.f32 %v568, %v603
      %v630 = vmul.f32 %v573, %v599
      %v631 = vmul.f32 %v573, %v603
      %v632 = vmul.f32 %v578, %v599
      %v633 = vmul.f32 %v578, %v603
      %v634 = vmul.f32 %v583, %v599
      %v635 = vmul.f32 %v583, %v603
      %636 = vset.pattern.permute.xlu0 1
      %637 = vperm.xlu0 %636, %v489
      %v638 = vpop.permute.xlu0 %637
      %640 = vset.pattern.permute.xlu0 1
      %641 = vperm.xlu0 %640, %v490
      %v642 = vpop.permute.xlu0 %641
      %644 = vset.pattern.permute.xlu0 1
      %645 = vperm.xlu0 %644, %v491
      %v646 = vpop.permute.xlu0 %645
      %648 = vset.pattern.permute.xlu0 1
      %649 = vperm.xlu0 %648, %v492
      %v650 = vpop.permute.xlu0 %649
      %652 = vset.pattern.permute.xlu0 1
      %653 = vperm.xlu0 %652, %v493
      %v654 = vpop.permute.xlu0 %653
      %656 = vset.pattern.permute.xlu0 1
      %657 = vperm.xlu0 %656, %v494
      %v658 = vpop.permute.xlu0 %657
      %660 = vset.pattern.permute.xlu0 1
      %661 = vperm.xlu0 %660, %v495
      %v662 = vpop.permute.xlu0 %661
      %664 = vset.pattern.permute.xlu0 1
      %665 = vperm.xlu0 %664, %v496
      %v666 = vpop.permute.xlu0 %665
      %668 = vset.pattern.permute.xlu0 1
      %669 = vperm.xlu0 %668, %v497
      %v670 = vpop.permute.xlu0 %669
      %672 = vset.pattern.permute.xlu0 1
      %673 = vperm.xlu0 %672, %v498
      %v674 = vpop.permute.xlu0 %673
      %676 = vset.pattern.permute.xlu0 1
      %677 = vperm.xlu0 %676, %v499
      %v678 = vpop.permute.xlu0 %677
      %680 = vset.pattern.permute.xlu0 1
      %681 = vperm.xlu0 %680, %v500
      %v682 = vpop.permute.xlu0 %681
      %684 = vset.pattern.permute.xlu0 1
      %685 = vperm.xlu0 %684, %v501
      %v686 = vpop.permute.xlu0 %685
      %688 = vset.pattern.permute.xlu0 1
      %689 = vperm.xlu0 %688, %v502
      %v690 = vpop.permute.xlu0 %689
      %692 = vset.pattern.permute.xlu0 1
      %693 = vperm.xlu0 %692, %v503
      %v694 = vpop.permute.xlu0 %693
      %696 = vset.pattern.permute.xlu0 1
      %697 = vperm.xlu0 %696, %v504
      %v698 = vpop.permute.xlu0 %697
      %v700 = vlaneseq
      %v701 = vshrl.u32 %v700, 7
      %v702 = vsub.s32 1, %v701
      %v703 = vrot.slane %v488, %v702
      %v704 = vlaneseq
      %v705 = vshrl.u32 %v704, 7
      %v706 = vsub.s32 3, %v705
      %v707 = vrot.slane %v488, %v706
      %v710 = vlaneseq
      %v711 = vshrl.u32 %v710, 7
      %v712 = vsub.s32 1, %v711
      %v713 = vrot.slane %v703, %v712
      %v714 = vlaneseq
      %v715 = vshrl.u32 %v714, 7
      %v716 = vsub.s32 1, %v715
      %v717 = vrot.slane %v707, %v716
      %v718 = vmul.f32 %v638, %v713
      %v719 = vmul.f32 %v638, %v717
      %v720 = vmul.f32 %v642, %v713
      %v721 = vmul.f32 %v642, %v717
      %v722 = vmul.f32 %v646, %v713
      %v723 = vmul.f32 %v646, %v717
      %v724 = vmul.f32 %v650, %v713
      %v725 = vmul.f32 %v650, %v717
      %v726 = vmul.f32 %v654, %v713
      %v727 = vmul.f32 %v654, %v717
      %v728 = vmul.f32 %v658, %v713
      %v729 = vmul.f32 %v658, %v717
      %v730 = vmul.f32 %v662, %v713
      %v731 = vmul.f32 %v662, %v717
      %v732 = vmul.f32 %v666, %v713
      %v733 = vmul.f32 %v666, %v717
      %v734 = vmul.f32 %v670, %v713
      %v735 = vmul.f32 %v670, %v717
      %v736 = vmul.f32 %v674, %v713
      %v737 = vmul.f32 %v674, %v717
      %v738 = vmul.f32 %v678, %v713
      %v739 = vmul.f32 %v678, %v717
      %v740 = vmul.f32 %v682, %v713
      %v741 = vmul.f32 %v682, %v717
      %v742 = vmul.f32 %v686, %v713
      %v743 = vmul.f32 %v686, %v717
      %v744 = vmul.f32 %v690, %v713
      %v745 = vmul.f32 %v690, %v717
      %v746 = vmul.f32 %v694, %v713
      %v747 = vmul.f32 %v694, %v717
      %v748 = vmul.f32 %v698, %v713
      %v749 = vmul.f32 %v698, %v717
      %v750 = vadd.f32 %v604, %v718
      %v751 = vadd.f32 %v605, %v719
      %v752 = vadd.f32 %v606, %v720
      %v753 = vadd.f32 %v607, %v721
      %v754 = vadd.f32 %v608, %v722
      %v755 = vadd.f32 %v609, %v723
      %v756 = vadd.f32 %v610, %v724
      %v757 = vadd.f32 %v611, %v725
      %v758 = vadd.f32 %v612, %v726
      %v759 = vadd.f32 %v613, %v727
      %v760 = vadd.f32 %v614, %v728
      %v761 = vadd.f32 %v615, %v729
      %v762 = vadd.f32 %v616, %v730
      %v763 = vadd.f32 %v617, %v731
      %v764 = vadd.f32 %v618, %v732
      %v765 = vadd.f32 %v619, %v733
      %v766 = vadd.f32 %v620, %v734
      %v767 = vadd.f32 %v621, %v735
      %v768 = vadd.f32 %v622, %v736
      %v769 = vadd.f32 %v623, %v737
      %v770 = vadd.f32 %v624, %v738
      %v771 = vadd.f32 %v625, %v739
      %v772 = vadd.f32 %v626, %v740
      %v773 = vadd.f32 %v627, %v741
      %v774 = vadd.f32 %v628, %v742
      %v775 = vadd.f32 %v629, %v743
      %v776 = vadd.f32 %v630, %v744
      %v777 = vadd.f32 %v631, %v745
      %v778 = vadd.f32 %v632, %v746
      %v779 = vadd.f32 %v633, %v747
      %v780 = vadd.f32 %v634, %v748
      %v781 = vadd.f32 %v635, %v749
      %v782 = vld [vmem:[%s448] sm:$0xff]
      %v783 = vld [vmem:[%s448 + $0x8] sm:$0xff]
      %v784 = vld [vmem:[%s448 + $0x10] sm:$0xff]
      %v785 = vld [vmem:[%s448 + $0x18] sm:$0xff]
      %v786 = vld [vmem:[%s448 + $0x20] sm:$0xff]
      %v787 = vld [vmem:[%s448 + $0x28] sm:$0xff]
      %v788 = vld [vmem:[%s448 + $0x30] sm:$0xff]
      %v789 = vld [vmem:[%s448 + $0x38] sm:$0xff]
      %v790 = vld [vmem:[%s448 + $0x40] sm:$0xff]
      %v791 = vld [vmem:[%s448 + $0x48] sm:$0xff]
      %v792 = vld [vmem:[%s448 + $0x50] sm:$0xff]
      %v793 = vld [vmem:[%s448 + $0x58] sm:$0xff]
      %v794 = vld [vmem:[%s448 + $0x60] sm:$0xff]
      %v795 = vld [vmem:[%s448 + $0x68] sm:$0xff]
      %v796 = vld [vmem:[%s448 + $0x70] sm:$0xff]
      %v797 = vld [vmem:[%s448 + $0x78] sm:$0xff]
      %v798 = vld [vmem:[%s448 + $0x80] sm:$0xff]
      %v799 = vld [vmem:[%s448 + $0x88] sm:$0xff]
      %v800 = vld [vmem:[%s448 + $0x90] sm:$0xff]
      %v801 = vld [vmem:[%s448 + $0x98] sm:$0xff]
      %v802 = vld [vmem:[%s448 + $0xa0] sm:$0xff]
      %v803 = vld [vmem:[%s448 + $0xa8] sm:$0xff]
      %v804 = vld [vmem:[%s448 + $0xb0] sm:$0xff]
      %v805 = vld [vmem:[%s448 + $0xb8] sm:$0xff]
      %v806 = vld [vmem:[%s448 + $0xc0] sm:$0xff]
      %v807 = vld [vmem:[%s448 + $0xc8] sm:$0xff]
      %v808 = vld [vmem:[%s448 + $0xd0] sm:$0xff]
      %v809 = vld [vmem:[%s448 + $0xd8] sm:$0xff]
      %v810 = vld [vmem:[%s448 + $0xe0] sm:$0xff]
      %v811 = vld [vmem:[%s448 + $0xe8] sm:$0xff]
      %v812 = vld [vmem:[%s448 + $0xf0] sm:$0xff]
      %v813 = vld [vmem:[%s448 + $0xf8] sm:$0xff]
      %v814 = vadd.f32 %v750, %v782
      %v815 = vadd.f32 %v751, %v783
      %v816 = vadd.f32 %v752, %v784
      %v817 = vadd.f32 %v753, %v785
      %v818 = vadd.f32 %v754, %v786
      %v819 = vadd.f32 %v755, %v787
      %v820 = vadd.f32 %v756, %v788
      %v821 = vadd.f32 %v757, %v789
      %v822 = vadd.f32 %v758, %v790
      %v823 = vadd.f32 %v759, %v791
      %v824 = vadd.f32 %v760, %v792
      %v825 = vadd.f32 %v761, %v793
      %v826 = vadd.f32 %v762, %v794
      %v827 = vadd.f32 %v763, %v795
      %v828 = vadd.f32 %v764, %v796
      %v829 = vadd.f32 %v765, %v797
      %v830 = vadd.f32 %v766, %v798
      %v831 = vadd.f32 %v767, %v799
      %v832 = vadd.f32 %v768, %v800
      %v833 = vadd.f32 %v769, %v801
      %v834 = vadd.f32 %v770, %v802
      %v835 = vadd.f32 %v771, %v803
      %v836 = vadd.f32 %v772, %v804
      %v837 = vadd.f32 %v773, %v805
      %v838 = vadd.f32 %v774, %v806
      %v839 = vadd.f32 %v775, %v807
      %v840 = vadd.f32 %v776, %v808
      %v841 = vadd.f32 %v777, %v809
      %v842 = vadd.f32 %v778, %v810
      %v843 = vadd.f32 %v779, %v811
      %v844 = vadd.f32 %v780, %v812
      %v845 = vadd.f32 %v781, %v813
      %v846 = vmax.f32 %v814, 0.0
      %v847 = vmax.f32 %v815, 0.0
      %v848 = vmax.f32 %v816, 0.0
      %v849 = vmax.f32 %v817, 0.0
      %v850 = vmax.f32 %v818, 0.0
      %v851 = vmax.f32 %v819, 0.0
      %v852 = vmax.f32 %v820, 0.0
      %v853 = vmax.f32 %v821, 0.0
      %v854 = vmax.f32 %v822, 0.0
      %v855 = vmax.f32 %v823, 0.0
      %v856 = vmax.f32 %v824, 0.0
      %v857 = vmax.f32 %v825, 0.0
      %v858 = vmax.f32 %v826, 0.0
      %v859 = vmax.f32 %v827, 0.0
      %v860 = vmax.f32 %v828, 0.0
      %v861 = vmax.f32 %v829, 0.0
      %v862 = vmax.f32 %v830, 0.0
      %v863 = vmax.f32 %v831, 0.0
      %v864 = vmax.f32 %v832, 0.0
      %v865 = vmax.f32 %v833, 0.0
      %v866 = vmax.f32 %v834, 0.0
      %v867 = vmax.f32 %v835, 0.0
      %v868 = vmax.f32 %v836, 0.0
      %v869 = vmax.f32 %v837, 0.0
      %v870 = vmax.f32 %v838, 0.0
      %v871 = vmax.f32 %v839, 0.0
      %v872 = vmax.f32 %v840, 0.0
      %v873 = vmax.f32 %v841, 0.0
      %v874 = vmax.f32 %v842, 0.0
      %v875 = vmax.f32 %v843, 0.0
      %v876 = vmax.f32 %v844, 0.0
      %v877 = vmax.f32 %v845, 0.0
      %v878 = vpack.c.bf16 %v848, %v846
      %v879 = vpack.c.bf16 %v849, %v847
      %v880 = vpack.c.bf16 %v852, %v850
      %v881 = vpack.c.bf16 %v853, %v851
      %v882 = vpack.c.bf16 %v856, %v854
      %v883 = vpack.c.bf16 %v857, %v855
      %v884 = vpack.c.bf16 %v860, %v858
      %v885 = vpack.c.bf16 %v861, %v859
      %v886 = vpack.c.bf16 %v864, %v862
      %v887 = vpack.c.bf16 %v865, %v863
      %v888 = vpack.c.bf16 %v868, %v866
      %v889 = vpack.c.bf16 %v869, %v867
      %v890 = vpack.c.bf16 %v872, %v870
      %v891 = vpack.c.bf16 %v873, %v871
      %v892 = vpack.c.bf16 %v876, %v874
      %v893 = vpack.c.bf16 %v877, %v875
      %v894 = vld [vmem:[%s458] sm:$0xf]
      %v895 = vld [vmem:[%s458 + $0x4] sm:$0xf]
      %v896 = vld [vmem:[%s458 + $0x8] sm:$0xf]
      %v897 = vld [vmem:[%s458 + $0xc] sm:$0xf]
      %v898 = vld [vmem:[%s458 + $0x10] sm:$0xf]
      %v899 = vld [vmem:[%s458 + $0x14] sm:$0xf]
      %v900 = vld [vmem:[%s458 + $0x18] sm:$0xf]
      %v901 = vld [vmem:[%s458 + $0x1c] sm:$0xf]
      %v902 = vld [vmem:[%s463] sm:$0xff]
      %v903 = vld [vmem:[%s463 + $0x8] sm:$0xff]
      %v904 = vld [vmem:[%s463 + $0x10] sm:$0xff]
      %v905 = vld [vmem:[%s463 + $0x18] sm:$0xff]
      %v906 = vld [vmem:[%s463 + $0x20] sm:$0xff]
      %v907 = vld [vmem:[%s463 + $0x28] sm:$0xff]
      %v908 = vld [vmem:[%s463 + $0x30] sm:$0xff]
      %v909 = vld [vmem:[%s463 + $0x38] sm:$0xff]
      %911 = vset.pattern.permute.xlu0 0
      %912 = vperm.xlu0 %911, %v902
      %v913 = vpop.permute.xlu0 %912
      %916 = vset.pattern.permute.xlu0 0
      %917 = vperm.xlu0 %916, %v903
      %v918 = vpop.permute.xlu0 %917
      %921 = vset.pattern.permute.xlu0 0
      %922 = vperm.xlu0 %921, %v904
      %v923 = vpop.permute.xlu0 %922
      %926 = vset.pattern.permute.xlu0 0
      %927 = vperm.xlu0 %926, %v905
      %v928 = vpop.permute.xlu0 %927
      %931 = vset.pattern.permute.xlu0 0
      %932 = vperm.xlu0 %931, %v906
      %v933 = vpop.permute.xlu0 %932
      %936 = vset.pattern.permute.xlu0 0
      %937 = vperm.xlu0 %936, %v907
      %v938 = vpop.permute.xlu0 %937
      %941 = vset.pattern.permute.xlu0 0
      %942 = vperm.xlu0 %941, %v908
      %v943 = vpop.permute.xlu0 %942
      %946 = vset.pattern.permute.xlu0 0
      %947 = vperm.xlu0 %946, %v909
      %v948 = vpop.permute.xlu0 %947
      %v958 = vunpack.c.l.b16 %v894
      %v959 = vunpack.c.l.b16 %v895
      %v960 = vunpack.c.l.b16 %v896
      %v961 = vunpack.c.l.b16 %v897
      %v962 = vunpack.c.l.b16 %v898
      %v963 = vunpack.c.l.b16 %v899
      %v964 = vunpack.c.l.b16 %v900
      %v965 = vunpack.c.l.b16 %v901
      %v966 = vpack.c.b16 %v959, %v958
      %v967 = vpack.c.b16 %v961, %v960
      %v968 = vpack.c.b16 %v963, %v962
      %v969 = vpack.c.b16 %v965, %v964
      %974 = vmatprep.subr.bf16.mxu0 %v879
      %975 = vmatpush1.bf16.msra.mxu0 %v878
      %976 = vmatprep.subr.bf16.mxu0 %v881
      %977 = vmatpush1.bf16.msra.mxu0 %v880
      %978 = vmatprep.subr.bf16.mxu0 %v883
      %979 = vmatpush1.bf16.msra.mxu0 %v882
      %980 = vmatprep.subr.bf16.mxu0 %v885
      %981 = vmatpush1.bf16.msra.mxu0 %v884
      %982 = vmatprep.subr.bf16.mxu0 %v887
      %983 = vmatpush1.bf16.msra.mxu0 %v886
      %984 = vmatprep.subr.bf16.mxu0 %v889
      %985 = vmatpush1.bf16.msra.mxu0 %v888
      %986 = vmatprep.subr.bf16.mxu0 %v891
      %987 = vmatpush1.bf16.msra.mxu0 %v890
      %988 = vmatprep.subr.bf16.mxu0 %v893
      %989 = vmatpush1.bf16.msra.mxu0 %v892
      %990 = vmatprep.subr.bf16.mxu0 0
      %991 = vmatpush1.bf16.msra.mxu0 0
      %992 = vmatprep.subr.bf16.mxu0 0
      %993 = vmatpush1.bf16.msra.mxu0 0
      %994 = vmatprep.subr.bf16.mxu0 0
      %995 = vmatpush1.bf16.msra.mxu0 0
      %996 = vmatprep.subr.bf16.mxu0 0
      %997 = vmatpush1.bf16.msra.mxu0 0
      %998 = vmatprep.subr.bf16.mxu0 0
      %999 = vmatpush1.bf16.msra.mxu0 0
      %1000 = vmatprep.subr.bf16.mxu0 0
      %1001 = vmatpush1.bf16.msra.mxu0 0
      %1002 = vmatprep.subr.bf16.mxu0 0
      %1003 = vmatpush1.bf16.msra.mxu0 0
      %1004 = vmatprep.subr.bf16.mxu0 0
      %1005 = vmatpush1.bf16.msra.mxu0 0
      %1006 = vmatprep.mubr.bf16.mxu0 0
      %1007 = vmatmul.mubr.bf16.gmra.mrb[0].mxu0 %v966
      %v1008 = vpop.f32.mrb[0].mxu0
      %v1009 = vadd.f32 %v913, %v1008
      %v1010 = vpop.f32.mrb[0].mxu0
      %v1011 = vadd.f32 %v913, %v1010
      %v1012 = vpop.f32.mrb[0].mxu0
      %v1013 = vadd.f32 %v918, %v1012
      %v1014 = vpop.f32.mrb[0].mxu0
      %v1015 = vadd.f32 %v918, %v1014
      %1016 = vmatprep.mubr.bf16.mxu0 0
      %1017 = vmatmul.mubr.bf16.gmra.mrb[0].mxu0 %v967
      %v1018 = vpop.f32.mrb[0].mxu0
      %v1019 = vadd.f32 %v923, %v1018
      %v1020 = vpop.f32.mrb[0].mxu0
      %v1021 = vadd.f32 %v923, %v1020
      %v1022 = vpop.f32.mrb[0].mxu0
      %v1023 = vadd.f32 %v928, %v1022
      %v1024 = vpop.f32.mrb[0].mxu0
      %v1025 = vadd.f32 %v928, %v1024
      %1026 = vmatprep.mubr.bf16.mxu0 0
      %1027 = vmatmul.mubr.bf16.gmra.mrb[0].mxu0 %v968
      %v1028 = vpop.f32.mrb[0].mxu0
      %v1029 = vadd.f32 %v933, %v1028
      %v1030 = vpop.f32.mrb[0].mxu0
      %v1031 = vadd.f32 %v933, %v1030
      %v1032 = vpop.f32.mrb[0].mxu0
      %v1033 = vadd.f32 %v938, %v1032
      %v1034 = vpop.f32.mrb[0].mxu0
      %v1035 = vadd.f32 %v938, %v1034
      %1036 = vmatprep.mubr.bf16.mxu0 0
      %1037 = vmatmul.mubr.bf16.gmra.mrb[0].mxu0 %v969
      %v1038 = vpop.f32.mrb[0].mxu0
      %v1039 = vadd.f32 %v943, %v1038
      %v1040 = vpop.f32.mrb[0].mxu0
      %v1041 = vadd.f32 %v943, %v1040
      %v1042 = vpop.f32.mrb[0].mxu0
      %v1043 = vadd.f32 %v948, %v1042
      %v1044 = vpop.f32.mrb[0].mxu0
      %v1045 = vadd.f32 %v948, %v1044
      %1046 = vdwg.mxu0
      %v1047 = vmax.f32 %v1009, 0.0
      %v1048 = vmax.f32 %v1011, 0.0
      %v1049 = vmax.f32 %v1013, 0.0
      %v1050 = vmax.f32 %v1015, 0.0
      %v1051 = vmax.f32 %v1019, 0.0
      %v1052 = vmax.f32 %v1021, 0.0
      %v1053 = vmax.f32 %v1023, 0.0
      %v1054 = vmax.f32 %v1025, 0.0
      %v1055 = vmax.f32 %v1029, 0.0
      %v1056 = vmax.f32 %v1031, 0.0
      %v1057 = vmax.f32 %v1033, 0.0
      %v1058 = vmax.f32 %v1035, 0.0
      %v1059 = vmax.f32 %v1039, 0.0
      %v1060 = vmax.f32 %v1041, 0.0
      %v1061 = vmax.f32 %v1043, 0.0
      %v1062 = vmax.f32 %v1045, 0.0
      %v1063 = vpack.c.bf16 %v1049, %v1047
      %v1064 = vpack.c.bf16 %v1050, %v1048
      %v1065 = vpack.c.bf16 %v1053, %v1051
      %v1066 = vpack.c.bf16 %v1054, %v1052
      %v1067 = vpack.c.bf16 %v1057, %v1055
      %v1068 = vpack.c.bf16 %v1058, %v1056
      %v1069 = vpack.c.bf16 %v1061, %v1059
      %v1070 = vpack.c.bf16 %v1062, %v1060
      %v1071 = vld [vmem:[%s468] sm:$0xf]
      %v1072 = vld [vmem:[%s468 + $0x4] sm:$0xf]
      %v1073 = vld [vmem:[%s468 + $0x8] sm:$0xf]
      %v1074 = vld [vmem:[%s468 + $0xc] sm:$0xf]
      %v1075 = vld [vmem:[%s473] sm:$0xff]
      %v1076 = vld [vmem:[%s473 + $0x8] sm:$0xff]
      %v1077 = vld [vmem:[%s473 + $0x10] sm:$0xff]
      %v1078 = vld [vmem:[%s473 + $0x18] sm:$0xff]
      %1080 = vset.pattern.permute.xlu0 0
      %1081 = vperm.xlu0 %1080, %v1075
      %v1082 = vpop.permute.xlu0 %1081
      %1085 = vset.pattern.permute.xlu0 0
      %1086 = vperm.xlu0 %1085, %v1076
      %v1087 = vpop.permute.xlu0 %1086
      %1090 = vset.pattern.permute.xlu0 0
      %1091 = vperm.xlu0 %1090, %v1077
      %v1092 = vpop.permute.xlu0 %1091
      %1095 = vset.pattern.permute.xlu0 0
      %1096 = vperm.xlu0 %1095, %v1078
      %v1097 = vpop.permute.xlu0 %1096
      %v1103 = vunpack.c.l.b16 %v1071
      %v1104 = vunpack.c.l.b16 %v1072
      %v1105 = vunpack.c.l.b16 %v1073
      %v1106 = vunpack.c.l.b16 %v1074
      %v1107 = vpack.c.b16 %v1104, %v1103
      %v1108 = vpack.c.b16 %v1106, %v1105
      %vm1109 = vcmask 523264
      %v1111 = vsel %vm1109, %v1107, 0
      %v1114 = vsel %vm1109, %v1108, 0
      %1116 = vmatprep.subr.bf16.mxu0 %v1064
      %1117 = vmatpush1.bf16.msra.mxu0 %v1063
      %1118 = vmatprep.subr.bf16.mxu0 %v1066
      %1119 = vmatpush1.bf16.msra.mxu0 %v1065
      %1120 = vmatprep.subr.bf16.mxu0 %v1068
      %1121 = vmatpush1.bf16.msra.mxu0 %v1067
      %1122 = vmatprep.subr.bf16.mxu0 %v1070
      %1123 = vmatpush1.bf16.msra.mxu0 %v1069
      %1124 = vmatprep.subr.bf16.mxu0 0
      %1125 = vmatpush1.bf16.msra.mxu0 0
      %1126 = vmatprep.subr.bf16.mxu0 0
      %1127 = vmatpush1.bf16.msra.mxu0 0
      %1128 = vmatprep.subr.bf16.mxu0 0
      %1129 = vmatpush1.bf16.msra.mxu0 0
      %1130 = vmatprep.subr.bf16.mxu0 0
      %1131 = vmatpush1.bf16.msra.mxu0 0
      %1132 = vmatprep.subr.bf16.mxu0 0
      %1133 = vmatpush1.bf16.msra.mxu0 0
      %1134 = vmatprep.subr.bf16.mxu0 0
      %1135 = vmatpush1.bf16.msra.mxu0 0
      %1136 = vmatprep.subr.bf16.mxu0 0
      %1137 = vmatpush1.bf16.msra.mxu0 0
      %1138 = vmatprep.subr.bf16.mxu0 0
      %1139 = vmatpush1.bf16.msra.mxu0 0
      %1140 = vmatprep.subr.bf16.mxu0 0
      %1141 = vmatpush1.bf16.msra.mxu0 0
      %1142 = vmatprep.subr.bf16.mxu0 0
      %1143 = vmatpush1.bf16.msra.mxu0 0
      %1144 = vmatprep.subr.bf16.mxu0 0
      %1145 = vmatpush1.bf16.msra.mxu0 0
      %1146 = vmatprep.subr.bf16.mxu0 0
      %1147 = vmatpush1.bf16.msra.mxu0 0
      %1148 = vmatprep.mubr.bf16.mxu0 0
      %1149 = vmatmul.mubr.bf16.gmra.mrb[0].mxu0 %v1111
      %v1150 = vpop.f32.mrb[0].mxu0
      %v1151 = vadd.f32 %v1082, %v1150
      %v1152 = vpop.f32.mrb[0].mxu0
      %v1153 = vadd.f32 %v1082, %v1152
      %v1154 = vpop.f32.mrb[0].mxu0
      %v1155 = vadd.f32 %v1087, %v1154
      %v1156 = vpop.f32.mrb[0].mxu0
      %v1157 = vadd.f32 %v1087, %v1156
      %1158 = vmatprep.mubr.bf16.mxu0 0
      %1159 = vmatmul.mubr.bf16.gmra.mrb[0].mxu0 %v1114
      %v1160 = vpop.f32.mrb[0].mxu0
      %v1161 = vadd.f32 %v1092, %v1160
      %v1162 = vpop.f32.mrb[0].mxu0
      %v1163 = vadd.f32 %v1092, %v1162
      %v1164 = vpop.f32.mrb[0].mxu0
      %v1165 = vadd.f32 %v1097, %v1164
      %v1166 = vpop.f32.mrb[0].mxu0
      %v1167 = vadd.f32 %v1097, %v1166
      %1168 = vdwg.mxu0
      %v1169 = vmax.f32 %v1151, 0.0
      %v1170 = vmax.f32 %v1153, 0.0
      %v1171 = vmax.f32 %v1155, 0.0
      %v1172 = vmax.f32 %v1157, 0.0
      %v1173 = vmax.f32 %v1161, 0.0
      %v1174 = vmax.f32 %v1163, 0.0
      %v1175 = vmax.f32 %v1165, 0.0
      %v1176 = vmax.f32 %v1167, 0.0
      %v1177 = vpack.c.bf16 %v1171, %v1169
      %v1178 = vpack.c.bf16 %v1172, %v1170
      %v1179 = vpack.c.bf16 %v1175, %v1173
      %v1180 = vpack.c.bf16 %v1176, %v1174
      %v1181 = vld [vmem:[%s477] sm:$0x3]
      %v1182 = vld [vmem:[%s481] sm:$0x7]
      %1184 = vset.pattern.permute.xlu0 0
      %1185 = vperm.xlu0 %1184, %v1182
      %v1186 = vpop.permute.xlu0 %1185
      %vm1188 = vcmask 261120
      %v1190 = vsel %vm1188, %v1181, 0
      %1192 = vmatprep.subr.bf16.mxu0 %v1178
      %1193 = vmatpush1.bf16.msra.mxu0 %v1177
      %1194 = vmatprep.subr.bf16.mxu0 %v1180
      %1195 = vmatpush1.bf16.msra.mxu0 %v1179
      %1196 = vmatprep.subr.bf16.mxu0 0
      %1197 = vmatpush1.bf16.msra.mxu0 0
      %1198 = vmatprep.subr.bf16.mxu0 0
      %1199 = vmatpush1.bf16.msra.mxu0 0
      %1200 = vmatprep.subr.bf16.mxu0 0
      %1201 = vmatpush1.bf16.msra.mxu0 0
      %1202 = vmatprep.subr.bf16.mxu0 0
      %1203 = vmatpush1.bf16.msra.mxu0 0
      %1204 = vmatprep.subr.bf16.mxu0 0
      %1205 = vmatpush1.bf16.msra.mxu0 0
      %1206 = vmatprep.subr.bf16.mxu0 0
      %1207 = vmatpush1.bf16.msra.mxu0 0
      %1208 = vmatprep.subr.bf16.mxu0 0
      %1209 = vmatpush1.bf16.msra.mxu0 0
      %1210 = vmatprep.subr.bf16.mxu0 0
      %1211 = vmatpush1.bf16.msra.mxu0 0
      %1212 = vmatprep.subr.bf16.mxu0 0
      %1213 = vmatpush1.bf16.msra.mxu0 0
      %1214 = vmatprep.subr.bf16.mxu0 0
      %1215 = vmatpush1.bf16.msra.mxu0 0
      %1216 = vmatprep.subr.bf16.mxu0 0
      %1217 = vmatpush1.bf16.msra.mxu0 0
      %1218 = vmatprep.subr.bf16.mxu0 0
      %1219 = vmatpush1.bf16.msra.mxu0 0
      %1220 = vmatprep.subr.bf16.mxu0 0
      %1221 = vmatpush1.bf16.msra.mxu0 0
      %1222 = vmatprep.subr.bf16.mxu0 0
      %1223 = vmatpush1.bf16.msra.mxu0 0
      %1224 = vmatprep.mubr.bf16.mxu0 0
      %1225 = vmatmul.mubr.bf16.gmra.mrb[0].mxu0 %v1190
      %v1226 = vpop.f32.mrb[0].mxu0
      %v1227 = vadd.f32 %v1186, %v1226
      %v1228 = vpop.f32.mrb[0].mxu0
      %v1229 = vadd.f32 %v1186, %v1228
      %v1230 = vpop.f32.mrb[0].mxu0
      %v1231 = vpop.f32.mrb[0].mxu0
      %1232 = vdwg.mxu0
      %v1233 = vtanh.pop %v1227
      %v1234 = vtanh.pop %v1229
      %v1237 = vcombine.low %v1233, %v1234
      %1239 = vst [vmem:[%s486] sm:$0x77] %v1237
      %p1240 = scmp.lt.s32.totalorder %s20, 1
      %s1241 = scalar_select %p1240, %s20, 1
      %s1242 = smul.addr %s1241, 2
      %s1243 = smul.addr %s1242, 4
      %s1244 = scalar_lea.vmem %s9, %s1243
      // Predicated region
      $region57: #{atlasnet_forward.3} parent=55 // pred_check
        %p1245 = pneg %p272
      $region58: #{atlasnet_forward.3} parent=55 // pred_check_branch
        %1247 = sbr.rel (%p1245) target = $region60
      $region59: #{atlasnet_forward.3} parent=55 // pred_region
        _
      $region60: #{atlasnet_forward.3} parent=55 // pred_fallthru
        _
    $region56: #{atlasnet_forward.3} parent=5 // pred_fallthru
      _
    %p1248 = scmp.le.s32.totalorder 2, %s15
    // Predicated region
    $region61: #{atlasnet_forward.3} parent=5 // pred_check
      %p1249 = pneg %p1248
    $region62: #{atlasnet_forward.3} parent=5 // pred_check_branch
      %1251 = sbr.rel (%p1249) target = $region64
    $region63: #{atlasnet_forward.3} parent=5 // pred_region
      %s1252 = ssub.s32 %s15, 2
      // Predicated region
      $region65: #{atlasnet_forward.3} parent=63 // pred_check
        %p1253 = pneg %p278
      $region66: #{atlasnet_forward.3} parent=63 // pred_check_branch
        %1255 = sbr.rel (%p1253) target = $region68
      $region67: #{atlasnet_forward.3} parent=63 // pred_region
        %p1256 = scmp.lt.s32.totalorder %s21, 1
        %s1257 = scalar_select %p1256, %s21, 1
        %s1258 = smul.addr %s1257, 2
        %s1259 = smul.addr %s1258, 4
        %s1260 = scalar_lea.vmem %s9, %s1259
      $region68: #{atlasnet_forward.3} parent=63 // pred_fallthru
        _
    $region64: #{atlasnet_forward.3} parent=5 // pred_fallthru
      _
  $region6: #{atlasnet_forward.3} parent=0 // loop_footer
    %s19 = sadd.s32 1, %s15
  $region7: #{atlasnet_forward.3} parent=0 // loop_footer_branch
    %14 = sbr.rel target = $region3
  $region8: #{atlasnet_forward.3} parent=0 // loop_exit
    _

// kernel: atlasnet_forward.2
$region0: #{atlasnet_forward.2}
  #allocation0 [shape = 'u32[]', space=smem, size = 0x4, offset = 0x4, fixed_abs, tag = 'smem constant byte address 0x4 - core index']
  #allocation1 [shape = 'u32[144,128]{1,0:T(1,128)}', space=vmem, size = 0x12000, scoped, tag = 'internal scratch']
  #allocation2 [shape = 'f32[128,512]{1,0:T(8,128)}', space=vmem, size = 0x40000, scoped, tag = 'scratch operand']
  %s0 = inlined_call_operand.vmem [shape: f32[2,3,512], index: 0, kind: input, shape index: {}]
  %s1 = inlined_call_operand.vmem [shape: f32[64,3], index: 1, kind: input, shape index: {}]
  %s2 = inlined_call_operand.vmem [shape: f32[64,1], index: 2, kind: input, shape index: {}]
  %s3 = inlined_call_operand.vmem [shape: bf16[64,64], index: 3, kind: input, shape index: {}]
  %s4 = inlined_call_operand.vmem [shape: f32[64,1], index: 4, kind: input, shape index: {}]
  %s5 = inlined_call_operand.vmem [shape: bf16[128,64], index: 5, kind: input, shape index: {}]
  %s6 = inlined_call_operand.vmem [shape: f32[128,1], index: 6, kind: input, shape index: {}]
  %s7 = inlined_call_operand.vmem [shape: f32[2,128,1], index: 7, kind: output, shape index: {}]
  %s8 = sld [smem:[#allocation0]]
  $region69: #{atlasnet_forward.2} parent=0
    _
  %s10 = ssub.s32 1, %s8
  %s11 = scalar_select 0, %s10, %s8
  loop: start=0, step=1, limit=4
  $region2: #{atlasnet_forward.2} parent=0 // loop_pre_header
    _
  $region3: #{atlasnet_forward.2} parent=0 // loop_header
    %s13 = sphi 0, %s17
    %p14 = scmp.ge.s32.totalorder %s13, 4
    %s20 = sphi 0, %s32
    %s21 = sphi 0, %s28
    %s22 = sphi 0, %s20
    %s23 = sphi 0, %s21
    %s24 = sphi 0, %s22
    %s25 = sphi 0, %s23
    %s37 = sphi 0, %s39
    %s40 = sphi 0, %s37
    %s41 = sphi 0, %s40
    %s57 = sphi 0, %s41
    %s61 = sphi 0, %s61
    %s63 = sphi 0, %s61
    %s64 = sphi 0, %s63
    %s78 = sphi 0, %s64
    %s82 = sphi 0, %s82
    %s84 = sphi 0, %s82
    %s85 = sphi 0, %s84
    %s99 = sphi 0, %s85
    %s103 = sphi 0, %s103
    %s105 = sphi 0, %s103
    %s106 = sphi 0, %s105
    %s120 = sphi 0, %s106
    %s124 = sphi 0, %s124
    %s126 = sphi 0, %s124
    %s127 = sphi 0, %s126
    %s141 = sphi 0, %s127
    %s145 = sphi 0, %s145
    %s147 = sphi 0, %s145
    %s148 = sphi 0, %s147
    %s162 = sphi 0, %s148
    %s166 = sphi 0, %s166
    %s168 = sphi 0, %s166
    %s169 = sphi 0, %s168
    %s183 = sphi 0, %s169
    %s189 = sphi 0, %s191
    %s192 = sphi 0, %s189
    %s193 = sphi 0, %s192
    %s209 = sphi 0, %s193
  $region4: #{atlasnet_forward.2} parent=0 // loop_header_branch
    %16 = sbr.rel (%p14) target = $region8
  $region5: #{atlasnet_forward.2} parent=0 // loop_body
    %s18 = ssub.s32 %s13, 1
    %s19 = ssub.s32 %s13, 2
    %s26 = sadd.s32 1, %s21
    %p27 = scmp.ge.s32.totalorder %s26, 1
    %s28 = scalar_select %p27, 0, %s26
    %s29 = sadd.s32 1, %s20
    %s30 = scalar_select %p27, %s29, %s20
    %p31 = scmp.ge.s32.totalorder %s30, 2
    %s32 = scalar_select %p31, 0, %s30
    %s33 = ssub.s32 %s20, %s32
    %s34 = ssub.s32 %s21, %s28
    %s35 = sor.u32 %s33, %s34
    %p36 = scmp.eq.s32.totalorder %s35, 0
    %s38 = sadd.s32 %s37, 1
    %s39 = scalar_select %p36, %s37, %s38
    %p42 = pneg %p36
    %p43 = scmp.eq.s32.totalorder %s13, 1
    %p44 = por %p42, %p43
    %p45 = scmp.ne.s32.totalorder %s37, %s40
    %p46 = scmp.eq.s32.totalorder %s13, 0
    %p47 = por %p45, %p46
    %p48 = scmp.ne.s32.totalorder %s37, %s40
    %p49 = scmp.eq.s32.totalorder %s18, 1
    %p50 = por %p48, %p49
    %p51 = scmp.ne.s32.totalorder %s40, %s41
    %p52 = scmp.eq.s32.totalorder %s18, 0
    %p53 = por %p51, %p52
    %p54 = scmp.ne.s32.totalorder %s40, %s41
    %p55 = scmp.eq.s32.totalorder %s19, 1
    %p56 = por %p54, %p55
    %p58 = scmp.ne.s32.totalorder %s41, %s57
    %p59 = scmp.eq.s32.totalorder %s19, 0
    %p60 = por %p58, %p59
    %s62 = sadd.s32 %s61, 1
    %p65 = scmp.eq.s32.totalorder %s13, 1
    %p66 = scmp.ne.s32.totalorder %s61, %s63
    %p67 = scmp.eq.s32.totalorder %s13, 0
    %p68 = por %p66, %p67
    %p69 = scmp.ne.s32.totalorder %s61, %s63
    %p70 = scmp.eq.s32.totalorder %s18, 1
    %p71 = por %p69, %p70
    %p72 = scmp.ne.s32.totalorder %s63, %s64
    %p73 = scmp.eq.s32.totalorder %s18, 0
    %p74 = por %p72, %p73
    %p75 = scmp.ne.s32.totalorder %s63, %s64
    %p76 = scmp.eq.s32.totalorder %s19, 1
    %p77 = por %p75, %p76
    %p79 = scmp.ne.s32.totalorder %s64, %s78
    %p80 = scmp.eq.s32.totalorder %s19, 0
    %p81 = por %p79, %p80
    %s83 = sadd.s32 %s82, 1
    %p86 = scmp.eq.s32.totalorder %s13, 1
    %p87 = scmp.ne.s32.totalorder %s82, %s84
    %p88 = scmp.eq.s32.totalorder %s13, 0
    %p89 = por %p87, %p88
    %p90 = scmp.ne.s32.totalorder %s82, %s84
    %p91 = scmp.eq.s32.totalorder %s18, 1
    %p92 = por %p90, %p91
    %p93 = scmp.ne.s32.totalorder %s84, %s85
    %p94 = scmp.eq.s32.totalorder %s18, 0
    %p95 = por %p93, %p94
    %p96 = scmp.ne.s32.totalorder %s84, %s85
    %p97 = scmp.eq.s32.totalorder %s19, 1
    %p98 = por %p96, %p97
    %p100 = scmp.ne.s32.totalorder %s85, %s99
    %p101 = scmp.eq.s32.totalorder %s19, 0
    %p102 = por %p100, %p101
    %s104 = sadd.s32 %s103, 1
    %p107 = scmp.eq.s32.totalorder %s13, 1
    %p108 = scmp.ne.s32.totalorder %s103, %s105
    %p109 = scmp.eq.s32.totalorder %s13, 0
    %p110 = por %p108, %p109
    %p111 = scmp.ne.s32.totalorder %s103, %s105
    %p112 = scmp.eq.s32.totalorder %s18, 1
    %p113 = por %p111, %p112
    %p114 = scmp.ne.s32.totalorder %s105, %s106
    %p115 = scmp.eq.s32.totalorder %s18, 0
    %p116 = por %p114, %p115
    %p117 = scmp.ne.s32.totalorder %s105, %s106
    %p118 = scmp.eq.s32.totalorder %s19, 1
    %p119 = por %p117, %p118
    %p121 = scmp.ne.s32.totalorder %s106, %s120
    %p122 = scmp.eq.s32.totalorder %s19, 0
    %p123 = por %p121, %p122
    %s125 = sadd.s32 %s124, 1
    %p128 = scmp.eq.s32.totalorder %s13, 1
    %p129 = scmp.ne.s32.totalorder %s124, %s126
    %p130 = scmp.eq.s32.totalorder %s13, 0
    %p131 = por %p129, %p130
    %p132 = scmp.ne.s32.totalorder %s124, %s126
    %p133 = scmp.eq.s32.totalorder %s18, 1
    %p134 = por %p132, %p133
    %p135 = scmp.ne.s32.totalorder %s126, %s127
    %p136 = scmp.eq.s32.totalorder %s18, 0
    %p137 = por %p135, %p136
    %p138 = scmp.ne.s32.totalorder %s126, %s127
    %p139 = scmp.eq.s32.totalorder %s19, 1
    %p140 = por %p138, %p139
    %p142 = scmp.ne.s32.totalorder %s127, %s141
    %p143 = scmp.eq.s32.totalorder %s19, 0
    %p144 = por %p142, %p143
    %s146 = sadd.s32 %s145, 1
    %p149 = scmp.eq.s32.totalorder %s13, 1
    %p150 = scmp.ne.s32.totalorder %s145, %s147
    %p151 = scmp.eq.s32.totalorder %s13, 0
    %p152 = por %p150, %p151
    %p153 = scmp.ne.s32.totalorder %s145, %s147
    %p154 = scmp.eq.s32.totalorder %s18, 1
    %p155 = por %p153, %p154
    %p156 = scmp.ne.s32.totalorder %s147, %s148
    %p157 = scmp.eq.s32.totalorder %s18, 0
    %p158 = por %p156, %p157
    %p159 = scmp.ne.s32.totalorder %s147, %s148
    %p160 = scmp.eq.s32.totalorder %s19, 1
    %p161 = por %p159, %p160
    %p163 = scmp.ne.s32.totalorder %s148, %s162
    %p164 = scmp.eq.s32.totalorder %s19, 0
    %p165 = por %p163, %p164
    %s167 = sadd.s32 %s166, 1
    %p170 = scmp.eq.s32.totalorder %s13, 1
    %p171 = scmp.ne.s32.totalorder %s166, %s168
    %p172 = scmp.eq.s32.totalorder %s13, 0
    %p173 = por %p171, %p172
    %p174 = scmp.ne.s32.totalorder %s166, %s168
    %p175 = scmp.eq.s32.totalorder %s18, 1
    %p176 = por %p174, %p175
    %p177 = scmp.ne.s32.totalorder %s168, %s169
    %p178 = scmp.eq.s32.totalorder %s18, 0
    %p179 = por %p177, %p178
    %p180 = scmp.ne.s32.totalorder %s168, %s169
    %p181 = scmp.eq.s32.totalorder %s19, 1
    %p182 = por %p180, %p181
    %p184 = scmp.ne.s32.totalorder %s169, %s183
    %p185 = scmp.eq.s32.totalorder %s19, 0
    %p186 = por %p184, %p185
    %s187 = ssub.s32 %s20, %s32
    %p188 = scmp.eq.s32.totalorder %s187, 0
    %s190 = sadd.s32 %s189, 1
    %s191 = scalar_select %p188, %s189, %s190
    %p194 = pneg %p188
    %p195 = scmp.eq.s32.totalorder %s13, 1
    %p196 = por %p194, %p195
    %p197 = scmp.ne.s32.totalorder %s189, %s192
    %p198 = scmp.eq.s32.totalorder %s13, 0
    %p199 = por %p197, %p198
    %p200 = scmp.ne.s32.totalorder %s189, %s192
    %p201 = scmp.eq.s32.totalorder %s18, 1
    %p202 = por %p200, %p201
    %p203 = scmp.ne.s32.totalorder %s192, %s193
    %p204 = scmp.eq.s32.totalorder %s18, 0
    %p205 = por %p203, %p204
    %p206 = scmp.ne.s32.totalorder %s192, %s193
    %p207 = scmp.eq.s32.totalorder %s19, 1
    %p208 = por %p206, %p207
    %p210 = scmp.ne.s32.totalorder %s193, %s209
    %p211 = scmp.eq.s32.totalorder %s19, 0
    %p212 = por %p210, %p211
    %p213 = scmp.le.s32.totalorder 1, %s13
    %p214 = scmp.lt.s32.totalorder %s13, 3
    %p215 = pnand %p213, %p214
    %p216 = pneg %p215
    // Predicated region
    $region9: #{atlasnet_forward.2} parent=5 // pred_check
      _
    $region10: #{atlasnet_forward.2} parent=5 // pred_check_branch
      %218 = sbr.rel (%p215) target = $region12
    $region11: #{atlasnet_forward.2} parent=5 // pred_region
      %s219 = ssub.s32 %s13, 1
      // Predicated region
      $region13: #{atlasnet_forward.2} parent=11 // pred_check
        %p220 = pneg %p74
      $region14: #{atlasnet_forward.2} parent=11 // pred_check_branch
        %222 = sbr.rel (%p220) target = $region16
      $region15: #{atlasnet_forward.2} parent=11 // pred_region
        _
      $region16: #{atlasnet_forward.2} parent=11 // pred_fallthru
        _
      // Predicated region
      $region17: #{atlasnet_forward.2} parent=11 // pred_check
        %p223 = pneg %p95
      $region18: #{atlasnet_forward.2} parent=11 // pred_check_branch
        %225 = sbr.rel (%p223) target = $region20
      $region19: #{atlasnet_forward.2} parent=11 // pred_region
        _
      $region20: #{atlasnet_forward.2} parent=11 // pred_fallthru
        _
      // Predicated region
      $region21: #{atlasnet_forward.2} parent=11 // pred_check
        %p226 = pneg %p116
      $region22: #{atlasnet_forward.2} parent=11 // pred_check_branch
        %228 = sbr.rel (%p226) target = $region24
      $region23: #{atlasnet_forward.2} parent=11 // pred_region
        _
      $region24: #{atlasnet_forward.2} parent=11 // pred_fallthru
        _
      // Predicated region
      $region25: #{atlasnet_forward.2} parent=11 // pred_check
        %p229 = pneg %p137
      $region26: #{atlasnet_forward.2} parent=11 // pred_check_branch
        %231 = sbr.rel (%p229) target = $region28
      $region27: #{atlasnet_forward.2} parent=11 // pred_region
        _
      $region28: #{atlasnet_forward.2} parent=11 // pred_fallthru
        _
      // Predicated region
      $region29: #{atlasnet_forward.2} parent=11 // pred_check
        %p232 = pneg %p158
      $region30: #{atlasnet_forward.2} parent=11 // pred_check_branch
        %234 = sbr.rel (%p232) target = $region32
      $region31: #{atlasnet_forward.2} parent=11 // pred_region
        _
      $region32: #{atlasnet_forward.2} parent=11 // pred_fallthru
        _
      // Predicated region
      $region33: #{atlasnet_forward.2} parent=11 // pred_check
        %p235 = pneg %p179
      $region34: #{atlasnet_forward.2} parent=11 // pred_check_branch
        %237 = sbr.rel (%p235) target = $region36
      $region35: #{atlasnet_forward.2} parent=11 // pred_region
        _
      $region36: #{atlasnet_forward.2} parent=11 // pred_fallthru
        _
    $region12: #{atlasnet_forward.2} parent=5 // pred_fallthru
      _
    %p238 = scmp.lt.s32.totalorder %s13, 2
    // Predicated region
    $region37: #{atlasnet_forward.2} parent=5 // pred_check
      %p239 = pneg %p238
    $region38: #{atlasnet_forward.2} parent=5 // pred_check_branch
      %241 = sbr.rel (%p239) target = $region40
    $region39: #{atlasnet_forward.2} parent=5 // pred_region
      // Predicated region
      $region41: #{atlasnet_forward.2} parent=39 // pred_check
        %p242 = pneg %p47
      $region42: #{atlasnet_forward.2} parent=39 // pred_check_branch
        %244 = sbr.rel (%p242) target = $region44
      $region43: #{atlasnet_forward.2} parent=39 // pred_region
        %s245 = smul.u32 4, %s21
        %p246 = scmp.lt.s32.totalorder %s20, 1
        %s247 = scalar_select %p246, %s20, 1
        %p248 = scmp.lt.s32.totalorder %s245, 3
        %s249 = scalar_select %p248, %s245, 3
        %s250 = smul.addr %s247, 4
        %s251 = sadd.s32 %s249, %s250
        %s252 = smul.addr %s251, 4
        %s253 = scalar_lea.vmem %s0, %s252
        %s254 = smul.u32 4, %s21
      $region44: #{atlasnet_forward.2} parent=39 // pred_fallthru
        _
    $region40: #{atlasnet_forward.2} parent=5 // pred_fallthru
      _
    %p255 = scmp.le.s32.totalorder 1, %s13
    %p256 = scmp.lt.s32.totalorder %s13, 3
    %p257 = pnand %p255, %p256
    %p258 = pneg %p257
    // Predicated region
    $region45: #{atlasnet_forward.2} parent=5 // pred_check
      _
    $region46: #{atlasnet_forward.2} parent=5 // pred_check_branch
      %260 = sbr.rel (%p257) target = $region48
    $region47: #{atlasnet_forward.2} parent=5 // pred_region
      %s261 = ssub.s32 %s13, 1
      %s262 = smul.u32 4, %s23
      %p263 = scmp.lt.s32.totalorder %s22, 1
      %s264 = scalar_select %p263, %s22, 1
      %p265 = scmp.lt.s32.totalorder %s262, 3
      %s266 = scalar_select %p265, %s262, 3
      %s267 = smul.addr %s264, 4
      %s268 = sadd.s32 %s266, %s267
      %s269 = smul.addr %s268, 4
      %s270 = scalar_lea.vmem %s0, %s269
      %p271 = pneg %p53
      %p272 = pneg %p50
      %p273 = pneg %p74
      %p274 = pneg %p71
      %p275 = pneg %p95
      %p276 = pneg %p92
      %p277 = pneg %p116
      %p278 = pneg %p113
      %p279 = pneg %p137
      %p280 = pneg %p134
      %p281 = pneg %p158
      %p282 = pneg %p155
      %p283 = pneg %p179
      %p284 = pneg %p176
      %p285 = pneg %p205
      %p286 = pneg %p202
      %p287 = scmp.lt.s32.totalorder %s22, 1
      %s288 = scalar_select %p287, %s22, 1
      %s289 = smul.addr %s288, 16
      %s290 = smul.addr %s289, 8
      %s291 = scalar_lea.vmem %s7, %s290
      %s292 = smul.u32 4, %s23
      %p293 = scmp.lt.s32.totalorder %s22, 1
      %s294 = scalar_select %p293, %s22, 1
      %p295 = scmp.lt.s32.totalorder %s292, 3
      %s296 = scalar_select %p295, %s292, 3
      %s297 = smul.addr %s294, 4
      %s298 = sadd.s32 %s296, %s297
      %s299 = smul.addr %s298, 4
      %s300 = scalar_lea.vmem %s0, %s299
      %s301 = smul.u32 4, %s23
      %p302 = scmp.lt.s32.totalorder %s22, 1
      %s303 = scalar_select %p302, %s22, 1
      %s304 = smul.addr %s303, 16
      %s305 = smul.addr %s304, 8
      %s306 = scalar_lea.vmem %s7, %s305
      %p308 = scmp.eq.s32.totalorder %s23, 0
      // Predicated region
      $region49: #{atlasnet_forward.2} parent=47 // pred_check
        %p309 = pneg %p308
      $region50: #{atlasnet_forward.2} parent=47 // pred_check_branch
        %311 = sbr.rel (%p309) target = $region52
      $region51: #{atlasnet_forward.2} parent=47 // pred_region
        %312 = vst [vmem:[#allocation2] sm:$0xff] -inf
        %313 = vst [vmem:[#allocation2 + $0x8] sm:$0xff] -inf
        %314 = vst [vmem:[#allocation2 + $0x10] sm:$0xff] -inf
        %315 = vst [vmem:[#allocation2 + $0x18] sm:$0xff] -inf
        %316 = vst [vmem:[#allocation2 + $0x20] sm:$0xff] -inf
        %317 = vst [vmem:[#allocation2 + $0x28] sm:$0xff] -inf
        %318 = vst [vmem:[#allocation2 + $0x30] sm:$0xff] -inf
        %319 = vst [vmem:[#allocation2 + $0x38] sm:$0xff] -inf
        %320 = vst [vmem:[#allocation2 + $0x40] sm:$0xff] -inf
        %321 = vst [vmem:[#allocation2 + $0x48] sm:$0xff] -inf
        %322 = vst [vmem:[#allocation2 + $0x50] sm:$0xff] -inf
        %323 = vst [vmem:[#allocation2 + $0x58] sm:$0xff] -inf
        %324 = vst [vmem:[#allocation2 + $0x60] sm:$0xff] -inf
        %325 = vst [vmem:[#allocation2 + $0x68] sm:$0xff] -inf
        %326 = vst [vmem:[#allocation2 + $0x70] sm:$0xff] -inf
        %327 = vst [vmem:[#allocation2 + $0x78] sm:$0xff] -inf
        %328 = vst [vmem:[#allocation2 + $0x80] sm:$0xff] -inf
        %329 = vst [vmem:[#allocation2 + $0x88] sm:$0xff] -inf
        %330 = vst [vmem:[#allocation2 + $0x90] sm:$0xff] -inf
        %331 = vst [vmem:[#allocation2 + $0x98] sm:$0xff] -inf
        %332 = vst [vmem:[#allocation2 + $0xa0] sm:$0xff] -inf
        %333 = vst [vmem:[#allocation2 + $0xa8] sm:$0xff] -inf
        %334 = vst [vmem:[#allocation2 + $0xb0] sm:$0xff] -inf
        %335 = vst [vmem:[#allocation2 + $0xb8] sm:$0xff] -inf
        %336 = vst [vmem:[#allocation2 + $0xc0] sm:$0xff] -inf
        %337 = vst [vmem:[#allocation2 + $0xc8] sm:$0xff] -inf
        %338 = vst [vmem:[#allocation2 + $0xd0] sm:$0xff] -inf
        %339 = vst [vmem:[#allocation2 + $0xd8] sm:$0xff] -inf
        %340 = vst [vmem:[#allocation2 + $0xe0] sm:$0xff] -inf
        %341 = vst [vmem:[#allocation2 + $0xe8] sm:$0xff] -inf
        %342 = vst [vmem:[#allocation2 + $0xf0] sm:$0xff] -inf
        %343 = vst [vmem:[#allocation2 + $0xf8] sm:$0xff] -inf
        %344 = vst [vmem:[#allocation2 + $0x100] sm:$0xff] -inf
        %345 = vst [vmem:[#allocation2 + $0x108] sm:$0xff] -inf
        %346 = vst [vmem:[#allocation2 + $0x110] sm:$0xff] -inf
        %347 = vst [vmem:[#allocation2 + $0x118] sm:$0xff] -inf
        %348 = vst [vmem:[#allocation2 + $0x120] sm:$0xff] -inf
        %349 = vst [vmem:[#allocation2 + $0x128] sm:$0xff] -inf
        %350 = vst [vmem:[#allocation2 + $0x130] sm:$0xff] -inf
        %351 = vst [vmem:[#allocation2 + $0x138] sm:$0xff] -inf
        %352 = vst [vmem:[#allocation2 + $0x140] sm:$0xff] -inf
        %353 = vst [vmem:[#allocation2 + $0x148] sm:$0xff] -inf
        %354 = vst [vmem:[#allocation2 + $0x150] sm:$0xff] -inf
        %355 = vst [vmem:[#allocation2 + $0x158] sm:$0xff] -inf
        %356 = vst [vmem:[#allocation2 + $0x160] sm:$0xff] -inf
        %357 = vst [vmem:[#allocation2 + $0x168] sm:$0xff] -inf
        %358 = vst [vmem:[#allocation2 + $0x170] sm:$0xff] -inf
        %359 = vst [vmem:[#allocation2 + $0x178] sm:$0xff] -inf
        %360 = vst [vmem:[#allocation2 + $0x180] sm:$0xff] -inf
        %361 = vst [vmem:[#allocation2 + $0x188] sm:$0xff] -inf
        %362 = vst [vmem:[#allocation2 + $0x190] sm:$0xff] -inf
        %363 = vst [vmem:[#allocation2 + $0x198] sm:$0xff] -inf
        %364 = vst [vmem:[#allocation2 + $0x1a0] sm:$0xff] -inf
        %365 = vst [vmem:[#allocation2 + $0x1a8] sm:$0xff] -inf
        %366 = vst [vmem:[#allocation2 + $0x1b0] sm:$0xff] -inf
        %367 = vst [vmem:[#allocation2 + $0x1b8] sm:$0xff] -inf
        %368 = vst [vmem:[#allocation2 + $0x1c0] sm:$0xff] -inf
        %369 = vst [vmem:[#allocation2 + $0x1c8] sm:$0xff] -inf
        %370 = vst [vmem:[#allocation2 + $0x1d0] sm:$0xff] -inf
        %371 = vst [vmem:[#allocation2 + $0x1d8] sm:$0xff] -inf
        %372 = vst [vmem:[#allocation2 + $0x1e0] sm:$0xff] -inf
        %373 = vst [vmem:[#allocation2 + $0x1e8] sm:$0xff] -inf
        %374 = vst [vmem:[#allocation2 + $0x1f0] sm:$0xff] -inf
        %375 = vst [vmem:[#allocation2 + $0x1f8] sm:$0xff] -inf
      $region52: #{atlasnet_forward.2} parent=47 // pred_fallthru
        _
      %v376 = vld [vmem:[%s300] sm:$0x77]
      %v377 = vld [vmem:[%s300 + $0x8] sm:$0x77]
      %v378 = vld [vmem:[%s1] sm:$0xff]
      %v379 = vld [vmem:[%s1 + $0x8] sm:$0xff]
      %v380 = vld [vmem:[%s1 + $0x10] sm:$0xff]
      %v381 = vld [vmem:[%s1 + $0x18] sm:$0xff]
      %v382 = vld [vmem:[%s1 + $0x20] sm:$0xff]
      %v383 = vld [vmem:[%s1 + $0x28] sm:$0xff]
      %v384 = vld [vmem:[%s1 + $0x30] sm:$0xff]
      %v385 = vld [vmem:[%s1 + $0x38] sm:$0xff]
      %387 = vset.pattern.permute.xlu0 0
      %388 = vperm.xlu0 %387, %v378
      %v389 = vpop.permute.xlu0 %388
      %392 = vset.pattern.permute.xlu0 0
      %393 = vperm.xlu0 %392, %v379
      %v394 = vpop.permute.xlu0 %393
      %397 = vset.pattern.permute.xlu0 0
      %398 = vperm.xlu0 %397, %v380
      %v399 = vpop.permute.xlu0 %398
      %402 = vset.pattern.permute.xlu0 0
      %403 = vperm.xlu0 %402, %v381
      %v404 = vpop.permute.xlu0 %403
      %407 = vset.pattern.permute.xlu0 0
      %408 = vperm.xlu0 %407, %v382
      %v409 = vpop.permute.xlu0 %408
      %412 = vset.pattern.permute.xlu0 0
      %413 = vperm.xlu0 %412, %v383
      %v414 = vpop.permute.xlu0 %413
      %417 = vset.pattern.permute.xlu0 0
      %418 = vperm.xlu0 %417, %v384
      %v419 = vpop.permute.xlu0 %418
      %422 = vset.pattern.permute.xlu0 0
      %423 = vperm.xlu0 %422, %v385
      %v424 = vpop.permute.xlu0 %423
      %v428 = vlaneseq
      %v429 = vshrl.u32 %v428, 7
      %v430 = vsub.s32 0, %v429
      %v431 = vrot.slane %v376, %v430
      %v432 = vlaneseq
      %v433 = vshrl.u32 %v432, 7
      %v434 = vsub.s32 4, %v433
      %v435 = vrot.slane %v376, %v434
      %v436 = vlaneseq
      %v437 = vshrl.u32 %v436, 7
      %v438 = vsub.s32 0, %v437
      %v439 = vrot.slane %v377, %v438
      %v440 = vlaneseq
      %v441 = vshrl.u32 %v440, 7
      %v442 = vsub.s32 4, %v441
      %v443 = vrot.slane %v377, %v442
      %v448 = vlaneseq
      %v449 = vshrl.u32 %v448, 7
      %v450 = vsub.s32 0, %v449
      %v451 = vrot.slane %v431, %v450
      %v452 = vlaneseq
      %v453 = vshrl.u32 %v452, 7
      %v454 = vsub.s32 0, %v453
      %v455 = vrot.slane %v435, %v454
      %v456 = vlaneseq
      %v457 = vshrl.u32 %v456, 7
      %v458 = vsub.s32 0, %v457
      %v459 = vrot.slane %v439, %v458
      %v460 = vlaneseq
      %v461 = vshrl.u32 %v460, 7
      %v462 = vsub.s32 0, %v461
      %v463 = vrot.slane %v443, %v462
      %v464 = vmul.f32 %v389, %v451
      %v465 = vmul.f32 %v389, %v455
      %v466 = vmul.f32 %v389, %v459
      %v467 = vmul.f32 %v389, %v463
      %v468 = vmul.f32 %v394, %v451
      %v469 = vmul.f32 %v394, %v455
      %v470 = vmul.f32 %v394, %v459
      %v471 = vmul.f32 %v394, %v463
      %v472 = vmul.f32 %v399, %v451
      %v473 = vmul.f32 %v399, %v455
      %v474 = vmul.f32 %v399, %v459
      %v475 = vmul.f32 %v399, %v463
      %v476 = vmul.f32 %v404, %v451
      %v477 = vmul.f32 %v404, %v455
      %v478 = vmul.f32 %v404, %v459
      %v479 = vmul.f32 %v404, %v463
      %v480 = vmul.f32 %v409, %v451
      %v481 = vmul.f32 %v409, %v455
      %v482 = vmul.f32 %v409, %v459
      %v483 = vmul.f32 %v409, %v463
      %v484 = vmul.f32 %v414, %v451
      %v485 = vmul.f32 %v414, %v455
      %v486 = vmul.f32 %v414, %v459
      %v487 = vmul.f32 %v414, %v463
      %v488 = vmul.f32 %v419, %v451
      %v489 = vmul.f32 %v419, %v455
      %v490 = vmul.f32 %v419, %v459
      %v491 = vmul.f32 %v419, %v463
      %v492 = vmul.f32 %v424, %v451
      %v493 = vmul.f32 %v424, %v455
      %v494 = vmul.f32 %v424, %v459
      %v495 = vmul.f32 %v424, %v463
      %496 = vset.pattern.permute.xlu0 1
      %497 = vperm.xlu0 %496, %v378
      %v498 = vpop.permute.xlu0 %497
      %500 = vset.pattern.permute.xlu0 1
      %501 = vperm.xlu0 %500, %v379
      %v502 = vpop.permute.xlu0 %501
      %504 = vset.pattern.permute.xlu0 1
      %505 = vperm.xlu0 %504, %v380
      %v506 = vpop.permute.xlu0 %505
      %508 = vset.pattern.permute.xlu0 1
      %509 = vperm.xlu0 %508, %v381
      %v510 = vpop.permute.xlu0 %509
      %512 = vset.pattern.permute.xlu0 1
      %513 = vperm.xlu0 %512, %v382
      %v514 = vpop.permute.xlu0 %513
      %516 = vset.pattern.permute.xlu0 1
      %517 = vperm.xlu0 %516, %v383
      %v518 = vpop.permute.xlu0 %517
      %520 = vset.pattern.permute.xlu0 1
      %521 = vperm.xlu0 %520, %v384
      %v522 = vpop.permute.xlu0 %521
      %524 = vset.pattern.permute.xlu0 1
      %525 = vperm.xlu0 %524, %v385
      %v526 = vpop.permute.xlu0 %525
      %v528 = vlaneseq
      %v529 = vshrl.u32 %v528, 7
      %v530 = vsub.s32 1, %v529
      %v531 = vrot.slane %v376, %v530
      %v532 = vlaneseq
      %v533 = vshrl.u32 %v532, 7
      %v534 = vsub.s32 5, %v533
      %v535 = vrot.slane %v376, %v534
      %v536 = vlaneseq
      %v537 = vshrl.u32 %v536, 7
      %v538 = vsub.s32 1, %v537
      %v539 = vrot.slane %v377, %v538
      %v540 = vlaneseq
      %v541 = vshrl.u32 %v540, 7
      %v542 = vsub.s32 5, %v541
      %v543 = vrot.slane %v377, %v542
      %v548 = vlaneseq
      %v549 = vshrl.u32 %v548, 7
      %v550 = vsub.s32 1, %v549
      %v551 = vrot.slane %v531, %v550
      %v552 = vlaneseq
      %v553 = vshrl.u32 %v552, 7
      %v554 = vsub.s32 1, %v553
      %v555 = vrot.slane %v535, %v554
      %v556 = vlaneseq
      %v557 = vshrl.u32 %v556, 7
      %v558 = vsub.s32 1, %v557
      %v559 = vrot.slane %v539, %v558
      %v560 = vlaneseq
      %v561 = vshrl.u32 %v560, 7
      %v562 = vsub.s32 1, %v561
      %v563 = vrot.slane %v543, %v562
      %v564 = vmul.f32 %v498, %v551
      %v565 = vmul.f32 %v498, %v555
      %v566 = vmul.f32 %v498, %v559
      %v567 = vmul.f32 %v498, %v563
      %v568 = vmul.f32 %v502, %v551
      %v569 = vmul.f32 %v502, %v555
      %v570 = vmul.f32 %v502, %v559
      %v571 = vmul.f32 %v502, %v563
      %v572 = vmul.f32 %v506, %v551
      %v573 = vmul.f32 %v506, %v555
      %v574 = vmul.f32 %v506, %v559
      %v575 = vmul.f32 %v506, %v563
      %v576 = vmul.f32 %v510, %v551
      %v577 = vmul.f32 %v510, %v555
      %v578 = vmul.f32 %v510, %v559
      %v579 = vmul.f32 %v510, %v563
      %v580 = vmul.f32 %v514, %v551
      %v581 = vmul.f32 %v514, %v555
      %v582 = vmul.f32 %v514, %v559
      %v583 = vmul.f32 %v514, %v563
      %v584 = vmul.f32 %v518, %v551
      %v585 = vmul.f32 %v518, %v555
      %v586 = vmul.f32 %v518, %v559
      %v587 = vmul.f32 %v518, %v563
      %v588 = vmul.f32 %v522, %v551
      %v589 = vmul.f32 %v522, %v555
      %v590 = vmul.f32 %v522, %v559
      %v591 = vmul.f32 %v522, %v563
      %v592 = vmul.f32 %v526, %v551
      %v593 = vmul.f32 %v526, %v555
      %v594 = vmul.f32 %v526, %v559
      %v595 = vmul.f32 %v526, %v563
      %v596 = vadd.f32 %v464, %v564
      %v597 = vadd.f32 %v465, %v565
      %v598 = vadd.f32 %v466, %v566
      %v599 = vadd.f32 %v467, %v567
      %v600 = vadd.f32 %v468, %v568
      %v601 = vadd.f32 %v469, %v569
      %v602 = vadd.f32 %v470, %v570
      %v603 = vadd.f32 %v471, %v571
      %v604 = vadd.f32 %v472, %v572
      %v605 = vadd.f32 %v473, %v573
      %v606 = vadd.f32 %v474, %v574
      %v607 = vadd.f32 %v475, %v575
      %v608 = vadd.f32 %v476, %v576
      %v609 = vadd.f32 %v477, %v577
      %v610 = vadd.f32 %v478, %v578
      %v611 = vadd.f32 %v479, %v579
      %v612 = vadd.f32 %v480, %v580
      %v613 = vadd.f32 %v481, %v581
      %v614 = vadd.f32 %v482, %v582
      %v615 = vadd.f32 %v483, %v583
      %v616 = vadd.f32 %v484, %v584
      %v617 = vadd.f32 %v485, %v585
      %v618 = vadd.f32 %v486, %v586
      %v619 = vadd.f32 %v487, %v587
      %v620 = vadd.f32 %v488, %v588
      %v621 = vadd.f32 %v489, %v589
      %v622 = vadd.f32 %v490, %v590
      %v623 = vadd.f32 %v491, %v591
      %v624 = vadd.f32 %v492, %v592
      %v625 = vadd.f32 %v493, %v593
      %v626 = vadd.f32 %v494, %v594
      %v627 = vadd.f32 %v495, %v595
      %628 = vset.pattern.permute.xlu0 2
      %629 = vperm.xlu0 %628, %v378
      %v630 = vpop.permute.xlu0 %629
      %632 = vset.pattern.permute.xlu0 2
      %633 = vperm.xlu0 %632, %v379
      %v634 = vpop.permute.xlu0 %633
      %636 = vset.pattern.permute.xlu0 2
      %637 = vperm.xlu0 %636, %v380
      %v638 = vpop.permute.xlu0 %637
      %640 = vset.pattern.permute.xlu0 2
      %641 = vperm.xlu0 %640, %v381
      %v642 = vpop.permute.xlu0 %641
      %644 = vset.pattern.permute.xlu0 2
      %645 = vperm.xlu0 %644, %v382
      %v646 = vpop.permute.xlu0 %645
      %648 = vset.pattern.permute.xlu0 2
      %649 = vperm.xlu0 %648, %v383
      %v650 = vpop.permute.xlu0 %649
      %652 = vset.pattern.permute.xlu0 2
      %653 = vperm.xlu0 %652, %v384
      %v654 = vpop.permute.xlu0 %653
      %656 = vset.pattern.permute.xlu0 2
      %657 = vperm.xlu0 %656, %v385
      %v658 = vpop.permute.xlu0 %657
      %v660 = vlaneseq
      %v661 = vshrl.u32 %v660, 7
      %v662 = vsub.s32 2, %v661
      %v663 = vrot.slane %v376, %v662
      %v664 = vlaneseq
      %v665 = vshrl.u32 %v664, 7
      %v666 = vsub.s32 6, %v665
      %v667 = vrot.slane %v376, %v666
      %v668 = vlaneseq
      %v669 = vshrl.u32 %v668, 7
      %v670 = vsub.s32 2, %v669
      %v671 = vrot.slane %v377, %v670
      %v672 = vlaneseq
      %v673 = vshrl.u32 %v672, 7
      %v674 = vsub.s32 6, %v673
      %v675 = vrot.slane %v377, %v674
      %v680 = vlaneseq
      %v681 = vshrl.u32 %v680, 7
      %v682 = vsub.s32 2, %v681
      %v683 = vrot.slane %v663, %v682
      %v684 = vlaneseq
      %v685 = vshrl.u32 %v684, 7
      %v686 = vsub.s32 2, %v685
      %v687 = vrot.slane %v667, %v686
      %v688 = vlaneseq
      %v689 = vshrl.u32 %v688, 7
      %v690 = vsub.s32 2, %v689
      %v691 = vrot.slane %v671, %v690
      %v692 = vlaneseq
      %v693 = vshrl.u32 %v692, 7
      %v694 = vsub.s32 2, %v693
      %v695 = vrot.slane %v675, %v694
      %v696 = vmul.f32 %v630, %v683
      %v697 = vmul.f32 %v630, %v687
      %v698 = vmul.f32 %v630, %v691
      %v699 = vmul.f32 %v630, %v695
      %v700 = vmul.f32 %v634, %v683
      %v701 = vmul.f32 %v634, %v687
      %v702 = vmul.f32 %v634, %v691
      %v703 = vmul.f32 %v634, %v695
      %v704 = vmul.f32 %v638, %v683
      %v705 = vmul.f32 %v638, %v687
      %v706 = vmul.f32 %v638, %v691
      %v707 = vmul.f32 %v638, %v695
      %v708 = vmul.f32 %v642, %v683
      %v709 = vmul.f32 %v642, %v687
      %v710 = vmul.f32 %v642, %v691
      %v711 = vmul.f32 %v642, %v695
      %v712 = vmul.f32 %v646, %v683
      %v713 = vmul.f32 %v646, %v687
      %v714 = vmul.f32 %v646, %v691
      %v715 = vmul.f32 %v646, %v695
      %v716 = vmul.f32 %v650, %v683
      %v717 = vmul.f32 %v650, %v687
      %v718 = vmul.f32 %v650, %v691
      %v719 = vmul.f32 %v650, %v695
      %v720 = vmul.f32 %v654, %v683
      %v721 = vmul.f32 %v654, %v687
      %v722 = vmul.f32 %v654, %v691
      %v723 = vmul.f32 %v654, %v695
      %v724 = vmul.f32 %v658, %v683
      %v725 = vmul.f32 %v658, %v687
      %v726 = vmul.f32 %v658, %v691
      %v727 = vmul.f32 %v658, %v695
      %v728 = vadd.f32 %v596, %v696
      %v729 = vadd.f32 %v597, %v697
      %v730 = vadd.f32 %v598, %v698
      %v731 = vadd.f32 %v599, %v699
      %v732 = vadd.f32 %v600, %v700
      %v733 = vadd.f32 %v601, %v701
      %v734 = vadd.f32 %v602, %v702
      %v735 = vadd.f32 %v603, %v703
      %v736 = vadd.f32 %v604, %v704
      %v737 = vadd.f32 %v605, %v705
      %v738 = vadd.f32 %v606, %v706
      %v739 = vadd.f32 %v607, %v707
      %v740 = vadd.f32 %v608, %v708
      %v741 = vadd.f32 %v609, %v709
      %v742 = vadd.f32 %v610, %v710
      %v743 = vadd.f32 %v611, %v711
      %v744 = vadd.f32 %v612, %v712
      %v745 = vadd.f32 %v613, %v713
      %v746 = vadd.f32 %v614, %v714
      %v747 = vadd.f32 %v615, %v715
      %v748 = vadd.f32 %v616, %v716
      %v749 = vadd.f32 %v617, %v717
      %v750 = vadd.f32 %v618, %v718
      %v751 = vadd.f32 %v619, %v719
      %v752 = vadd.f32 %v620, %v720
      %v753 = vadd.f32 %v621, %v721
      %v754 = vadd.f32 %v622, %v722
      %v755 = vadd.f32 %v623, %v723
      %v756 = vadd.f32 %v624, %v724
      %v757 = vadd.f32 %v625, %v725
      %v758 = vadd.f32 %v626, %v726
      %v759 = vadd.f32 %v627, %v727
      %v760 = vld [vmem:[%s2] sm:$0xff]
      %v761 = vld [vmem:[%s2 + $0x8] sm:$0xff]
      %v762 = vld [vmem:[%s2 + $0x10] sm:$0xff]
      %v763 = vld [vmem:[%s2 + $0x18] sm:$0xff]
      %v764 = vld [vmem:[%s2 + $0x20] sm:$0xff]
      %v765 = vld [vmem:[%s2 + $0x28] sm:$0xff]
      %v766 = vld [vmem:[%s2 + $0x30] sm:$0xff]
      %v767 = vld [vmem:[%s2 + $0x38] sm:$0xff]
      %769 = vset.pattern.permute.xlu0 0
      %770 = vperm.xlu0 %769, %v760
      %v771 = vpop.permute.xlu0 %770
      %774 = vset.pattern.permute.xlu0 0
      %775 = vperm.xlu0 %774, %v761
      %v776 = vpop.permute.xlu0 %775
      %779 = vset.pattern.permute.xlu0 0
      %780 = vperm.xlu0 %779, %v762
      %v781 = vpop.permute.xlu0 %780
      %784 = vset.pattern.permute.xlu0 0
      %785 = vperm.xlu0 %784, %v763
      %v786 = vpop.permute.xlu0 %785
      %789 = vset.pattern.permute.xlu0 0
      %790 = vperm.xlu0 %789, %v764
      %v791 = vpop.permute.xlu0 %790
      %794 = vset.pattern.permute.xlu0 0
      %795 = vperm.xlu0 %794, %v765
      %v796 = vpop.permute.xlu0 %795
      %799 = vset.pattern.permute.xlu0 0
      %800 = vperm.xlu0 %799, %v766
      %v801 = vpop.permute.xlu0 %800
      %804 = vset.pattern.permute.xlu0 0
      %805 = vperm.xlu0 %804, %v767
      %v806 = vpop.permute.xlu0 %805
      %v808 = vadd.f32 %v728, %v771
      %v809 = vadd.f32 %v729, %v771
      %v810 = vadd.f32 %v730, %v771
      %v811 = vadd.f32 %v731, %v771
      %v812 = vadd.f32 %v732, %v776
      %v813 = vadd.f32 %v733, %v776
      %v814 = vadd.f32 %v734, %v776
      %v815 = vadd.f32 %v735, %v776
      %v816 = vadd.f32 %v736, %v781
      %v817 = vadd.f32 %v737, %v781
      %v818 = vadd.f32 %v738, %v781
      %v819 = vadd.f32 %v739, %v781
      %v820 = vadd.f32 %v740, %v786
      %v821 = vadd.f32 %v741, %v786
      %v822 = vadd.f32 %v742, %v786
      %v823 = vadd.f32 %v743, %v786
      %v824 = vadd.f32 %v744, %v791
      %v825 = vadd.f32 %v745, %v791
      %v826 = vadd.f32 %v746, %v791
      %v827 = vadd.f32 %v747, %v791
      %v828 = vadd.f32 %v748, %v796
      %v829 = vadd.f32 %v749, %v796
      %v830 = vadd.f32 %v750, %v796
      %v831 = vadd.f32 %v751, %v796
      %v832 = vadd.f32 %v752, %v801
      %v833 = vadd.f32 %v753, %v801
      %v834 = vadd.f32 %v754, %v801
      %v835 = vadd.f32 %v755, %v801
      %v836 = vadd.f32 %v756, %v806
      %v837 = vadd.f32 %v757, %v806
      %v838 = vadd.f32 %v758, %v806
      %v839 = vadd.f32 %v759, %v806
      %v840 = vmax.f32 %v808, 0.0
      %v841 = vmax.f32 %v809, 0.0
      %v842 = vmax.f32 %v810, 0.0
      %v843 = vmax.f32 %v811, 0.0
      %v844 = vmax.f32 %v812, 0.0
      %v845 = vmax.f32 %v813, 0.0
      %v846 = vmax.f32 %v814, 0.0
      %v847 = vmax.f32 %v815, 0.0
      %v848 = vmax.f32 %v816, 0.0
      %v849 = vmax.f32 %v817, 0.0
      %v850 = vmax.f32 %v818, 0.0
      %v851 = vmax.f32 %v819, 0.0
      %v852 = vmax.f32 %v820, 0.0
      %v853 = vmax.f32 %v821, 0.0
      %v854 = vmax.f32 %v822, 0.0
      %v855 = vmax.f32 %v823, 0.0
      %v856 = vmax.f32 %v824, 0.0
      %v857 = vmax.f32 %v825, 0.0
      %v858 = vmax.f32 %v826, 0.0
      %v859 = vmax.f32 %v827, 0.0
      %v860 = vmax.f32 %v828, 0.0
      %v861 = vmax.f32 %v829, 0.0
      %v862 = vmax.f32 %v830, 0.0
      %v863 = vmax.f32 %v831, 0.0
      %v864 = vmax.f32 %v832, 0.0
      %v865 = vmax.f32 %v833, 0.0
      %v866 = vmax.f32 %v834, 0.0
      %v867 = vmax.f32 %v835, 0.0
      %v868 = vmax.f32 %v836, 0.0
      %v869 = vmax.f32 %v837, 0.0
      %v870 = vmax.f32 %v838, 0.0
      %v871 = vmax.f32 %v839, 0.0
      %v872 = vld [vmem:[%s3] sm:$0xf]
      %v873 = vld [vmem:[%s3 + $0x4] sm:$0xf]
      %v874 = vld [vmem:[%s3 + $0x8] sm:$0xf]
      %v875 = vld [vmem:[%s3 + $0xc] sm:$0xf]
      %v876 = vld [vmem:[%s3 + $0x10] sm:$0xf]
      %v877 = vld [vmem:[%s3 + $0x14] sm:$0xf]
      %v878 = vld [vmem:[%s3 + $0x18] sm:$0xf]
      %v879 = vld [vmem:[%s3 + $0x1c] sm:$0xf]
      %v880 = vpack.c.bf16 %v844, %v840
      %v881 = vpack.c.bf16 %v845, %v841
      %v882 = vpack.c.bf16 %v846, %v842
      %v883 = vpack.c.bf16 %v847, %v843
      %v884 = vpack.c.bf16 %v852, %v848
      %v885 = vpack.c.bf16 %v853, %v849
      %v886 = vpack.c.bf16 %v854, %v850
      %v887 = vpack.c.bf16 %v855, %v851
      %v888 = vpack.c.bf16 %v860, %v856
      %v889 = vpack.c.bf16 %v861, %v857
      %v890 = vpack.c.bf16 %v862, %v858
      %v891 = vpack.c.bf16 %v863, %v859
      %v892 = vpack.c.bf16 %v868, %v864
      %v893 = vpack.c.bf16 %v869, %v865
      %v894 = vpack.c.bf16 %v870, %v866
      %v895 = vpack.c.bf16 %v871, %v867
      %v896 = vld [vmem:[%s4] sm:$0xff]
      %v897 = vld [vmem:[%s4 + $0x8] sm:$0xff]
      %v898 = vld [vmem:[%s4 + $0x10] sm:$0xff]
      %v899 = vld [vmem:[%s4 + $0x18] sm:$0xff]
      %v900 = vld [vmem:[%s4 + $0x20] sm:$0xff]
      %v901 = vld [vmem:[%s4 + $0x28] sm:$0xff]
      %v902 = vld [vmem:[%s4 + $0x30] sm:$0xff]
      %v903 = vld [vmem:[%s4 + $0x38] sm:$0xff]
      %905 = vset.pattern.permute.xlu0 0
      %906 = vperm.xlu0 %905, %v896
      %v907 = vpop.permute.xlu0 %906
      %910 = vset.pattern.permute.xlu0 0
      %911 = vperm.xlu0 %910, %v897
      %v912 = vpop.permute.xlu0 %911
      %915 = vset.pattern.permute.xlu0 0
      %916 = vperm.xlu0 %915, %v898
      %v917 = vpop.permute.xlu0 %916
      %920 = vset.pattern.permute.xlu0 0
      %921 = vperm.xlu0 %920, %v899
      %v922 = vpop.permute.xlu0 %921
      %925 = vset.pattern.permute.xlu0 0
      %926 = vperm.xlu0 %925, %v900
      %v927 = vpop.permute.xlu0 %926
      %930 = vset.pattern.permute.xlu0 0
      %931 = vperm.xlu0 %930, %v901
      %v932 = vpop.permute.xlu0 %931
      %935 = vset.pattern.permute.xlu0 0
      %936 = vperm.xlu0 %935, %v902
      %v937 = vpop.permute.xlu0 %936
      %940 = vset.pattern.permute.xlu0 0
      %941 = vperm.xlu0 %940, %v903
      %v942 = vpop.permute.xlu0 %941
      %v952 = vunpack.c.l.b16 %v872
      %v953 = vunpack.c.l.b16 %v873
      %v954 = vunpack.c.l.b16 %v874
      %v955 = vunpack.c.l.b16 %v875
      %v956 = vunpack.c.l.b16 %v876
      %v957 = vunpack.c.l.b16 %v877
      %v958 = vunpack.c.l.b16 %v878
      %v959 = vunpack.c.l.b16 %v879
      %v960 = vpack.c.b16 %v953, %v952
      %v961 = vpack.c.b16 %v955, %v954
      %v962 = vpack.c.b16 %v957, %v956
      %v963 = vpack.c.b16 %v959, %v958
      %vm964 = vcmask 523264
      %v966 = vsel %vm964, %v960, 0
      %v969 = vsel %vm964, %v961, 0
      %v972 = vsel %vm964, %v962, 0
      %v975 = vsel %vm964, %v963, 0
      %977 = vmatprep.subr.bf16.mxu0 %v881
      %978 = vmatpush1.bf16.msra.mxu0 %v880
      %979 = vmatprep.subr.bf16.mxu0 %v885
      %980 = vmatpush1.bf16.msra.mxu0 %v884
      %981 = vmatprep.subr.bf16.mxu0 %v889
      %982 = vmatpush1.bf16.msra.mxu0 %v888
      %983 = vmatprep.subr.bf16.mxu0 %v893
      %984 = vmatpush1.bf16.msra.mxu0 %v892
      %985 = vmatprep.subr.bf16.mxu0 0
      %986 = vmatpush1.bf16.msra.mxu0 0
      %987 = vmatprep.subr.bf16.mxu0 0
      %988 = vmatpush1.bf16.msra.mxu0 0
      %989 = vmatprep.subr.bf16.mxu0 0
      %990 = vmatpush1.bf16.msra.mxu0 0
      %991 = vmatprep.subr.bf16.mxu0 0
      %992 = vmatpush1.bf16.msra.mxu0 0
      %993 = vmatprep.subr.bf16.mxu0 0
      %994 = vmatpush1.bf16.msra.mxu0 0
      %995 = vmatprep.subr.bf16.mxu0 0
      %996 = vmatpush1.bf16.msra.mxu0 0
      %997 = vmatprep.subr.bf16.mxu0 0
      %998 = vmatpush1.bf16.msra.mxu0 0
      %999 = vmatprep.subr.bf16.mxu0 0
      %1000 = vmatpush1.bf16.msra.mxu0 0
      %1001 = vmatprep.subr.bf16.mxu0 0
      %1002 = vmatpush1.bf16.msra.mxu0 0
      %1003 = vmatprep.subr.bf16.mxu0 0
      %1004 = vmatpush1.bf16.msra.mxu0 0
      %1005 = vmatprep.subr.bf16.mxu0 0
      %1006 = vmatpush1.bf16.msra.mxu0 0
      %1007 = vmatprep.subr.bf16.mxu0 0
      %1008 = vmatpush1.bf16.msra.mxu0 0
      %1009 = vmatprep.mubr.bf16.mxu0 0
      %1010 = vmatmul.mubr.bf16.gmra.mrb[0].mxu0 %v966
      %v1011 = vpop.f32.mrb[0].mxu0
      %v1012 = vadd.f32 %v907, %v1011
      %v1013 = vpop.f32.mrb[0].mxu0
      %v1014 = vadd.f32 %v907, %v1013
      %v1015 = vpop.f32.mrb[0].mxu0
      %v1016 = vadd.f32 %v912, %v1015
      %v1017 = vpop.f32.mrb[0].mxu0
      %v1018 = vadd.f32 %v912, %v1017
      %1019 = vmatprep.mubr.bf16.mxu0 0
      %1020 = vmatmul.mubr.bf16.gmra.mrb[0].mxu0 %v969
      %v1021 = vpop.f32.mrb[0].mxu0
      %v1022 = vadd.f32 %v917, %v1021
      %v1023 = vpop.f32.mrb[0].mxu0
      %v1024 = vadd.f32 %v917, %v1023
      %v1025 = vpop.f32.mrb[0].mxu0
      %v1026 = vadd.f32 %v922, %v1025
      %v1027 = vpop.f32.mrb[0].mxu0
      %v1028 = vadd.f32 %v922, %v1027
      %1029 = vmatprep.mubr.bf16.mxu0 0
      %1030 = vmatmul.mubr.bf16.gmra.mrb[0].mxu0 %v972
      %v1031 = vpop.f32.mrb[0].mxu0
      %v1032 = vadd.f32 %v927, %v1031
      %v1033 = vpop.f32.mrb[0].mxu0
      %v1034 = vadd.f32 %v927, %v1033
      %v1035 = vpop.f32.mrb[0].mxu0
      %v1036 = vadd.f32 %v932, %v1035
      %v1037 = vpop.f32.mrb[0].mxu0
      %v1038 = vadd.f32 %v932, %v1037
      %1039 = vmatprep.mubr.bf16.mxu0 0
      %1040 = vmatmul.mubr.bf16.gmra.mrb[0].mxu0 %v975
      %v1041 = vpop.f32.mrb[0].mxu0
      %v1042 = vadd.f32 %v937, %v1041
      %v1043 = vpop.f32.mrb[0].mxu0
      %v1044 = vadd.f32 %v937, %v1043
      %v1045 = vpop.f32.mrb[0].mxu0
      %v1046 = vadd.f32 %v942, %v1045
      %v1047 = vpop.f32.mrb[0].mxu0
      %v1048 = vadd.f32 %v942, %v1047
      %1049 = vdwg.mxu0
      %1050 = vmatprep.subr.bf16.mxu0 %v883
      %1051 = vmatpush1.bf16.msra.mxu0 %v882
      %1052 = vmatprep.subr.bf16.mxu0 %v887
      %1053 = vmatpush1.bf16.msra.mxu0 %v886
      %1054 = vmatprep.subr.bf16.mxu0 %v891
      %1055 = vmatpush1.bf16.msra.mxu0 %v890
      %1056 = vmatprep.subr.bf16.mxu0 %v895
      %1057 = vmatpush1.bf16.msra.mxu0 %v894
      %1058 = vmatprep.subr.bf16.mxu0 0
      %1059 = vmatpush1.bf16.msra.mxu0 0
      %1060 = vmatprep.subr.bf16.mxu0 0
      %1061 = vmatpush1.bf16.msra.mxu0 0
      %1062 = vmatprep.subr.bf16.mxu0 0
      %1063 = vmatpush1.bf16.msra.mxu0 0
      %1064 = vmatprep.subr.bf16.mxu0 0
      %1065 = vmatpush1.bf16.msra.mxu0 0
      %1066 = vmatprep.subr.bf16.mxu0 0
      %1067 = vmatpush1.bf16.msra.mxu0 0
      %1068 = vmatprep.subr.bf16.mxu0 0
      %1069 = vmatpush1.bf16.msra.mxu0 0
      %1070 = vmatprep.subr.bf16.mxu0 0
      %1071 = vmatpush1.bf16.msra.mxu0 0
      %1072 = vmatprep.subr.bf16.mxu0 0
      %1073 = vmatpush1.bf16.msra.mxu0 0
      %1074 = vmatprep.subr.bf16.mxu0 0
      %1075 = vmatpush1.bf16.msra.mxu0 0
      %1076 = vmatprep.subr.bf16.mxu0 0
      %1077 = vmatpush1.bf16.msra.mxu0 0
      %1078 = vmatprep.subr.bf16.mxu0 0
      %1079 = vmatpush1.bf16.msra.mxu0 0
      %1080 = vmatprep.subr.bf16.mxu0 0
      %1081 = vmatpush1.bf16.msra.mxu0 0
      %1082 = vmatprep.mubr.bf16.mxu0 0
      %1083 = vmatmul.mubr.bf16.gmra.mrb[0].mxu0 %v966
      %v1084 = vpop.f32.mrb[0].mxu0
      %v1085 = vadd.f32 %v907, %v1084
      %v1086 = vpop.f32.mrb[0].mxu0
      %v1087 = vadd.f32 %v907, %v1086
      %v1088 = vpop.f32.mrb[0].mxu0
      %v1089 = vadd.f32 %v912, %v1088
      %v1090 = vpop.f32.mrb[0].mxu0
      %v1091 = vadd.f32 %v912, %v1090
      %1092 = vmatprep.mubr.bf16.mxu0 0
      %1093 = vmatmul.mubr.bf16.gmra.mrb[0].mxu0 %v969
      %v1094 = vpop.f32.mrb[0].mxu0
      %v1095 = vadd.f32 %v917, %v1094
      %v1096 = vpop.f32.mrb[0].mxu0
      %v1097 = vadd.f32 %v917, %v1096
      %v1098 = vpop.f32.mrb[0].mxu0
      %v1099 = vadd.f32 %v922, %v1098
      %v1100 = vpop.f32.mrb[0].mxu0
      %v1101 = vadd.f32 %v922, %v1100
      %1102 = vmatprep.mubr.bf16.mxu0 0
      %1103 = vmatmul.mubr.bf16.gmra.mrb[0].mxu0 %v972
      %v1104 = vpop.f32.mrb[0].mxu0
      %v1105 = vadd.f32 %v927, %v1104
      %v1106 = vpop.f32.mrb[0].mxu0
      %v1107 = vadd.f32 %v927, %v1106
      %v1108 = vpop.f32.mrb[0].mxu0
      %v1109 = vadd.f32 %v932, %v1108
      %v1110 = vpop.f32.mrb[0].mxu0
      %v1111 = vadd.f32 %v932, %v1110
      %1112 = vmatprep.mubr.bf16.mxu0 0
      %1113 = vmatmul.mubr.bf16.gmra.mrb[0].mxu0 %v975
      %v1114 = vpop.f32.mrb[0].mxu0
      %v1115 = vadd.f32 %v937, %v1114
      %v1116 = vpop.f32.mrb[0].mxu0
      %v1117 = vadd.f32 %v937, %v1116
      %v1118 = vpop.f32.mrb[0].mxu0
      %v1119 = vadd.f32 %v942, %v1118
      %v1120 = vpop.f32.mrb[0].mxu0
      %v1121 = vadd.f32 %v942, %v1120
      %1122 = vdwg.mxu0
      %v1123 = vmax.f32 %v1012, 0.0
      %v1124 = vmax.f32 %v1014, 0.0
      %v1125 = vmax.f32 %v1085, 0.0
      %v1126 = vmax.f32 %v1087, 0.0
      %v1127 = vmax.f32 %v1016, 0.0
      %v1128 = vmax.f32 %v1018, 0.0
      %v1129 = vmax.f32 %v1089, 0.0
      %v1130 = vmax.f32 %v1091, 0.0
      %v1131 = vmax.f32 %v1022, 0.0
      %v1132 = vmax.f32 %v1024, 0.0
      %v1133 = vmax.f32 %v1095, 0.0
      %v1134 = vmax.f32 %v1097, 0.0
      %v1135 = vmax.f32 %v1026, 0.0
      %v1136 = vmax.f32 %v1028, 0.0
      %v1137 = vmax.f32 %v1099, 0.0
      %v1138 = vmax.f32 %v1101, 0.0
      %v1139 = vmax.f32 %v1032, 0.0
      %v1140 = vmax.f32 %v1034, 0.0
      %v1141 = vmax.f32 %v1105, 0.0
      %v1142 = vmax.f32 %v1107, 0.0
      %v1143 = vmax.f32 %v1036, 0.0
      %v1144 = vmax.f32 %v1038, 0.0
      %v1145 = vmax.f32 %v1109, 0.0
      %v1146 = vmax.f32 %v1111, 0.0
      %v1147 = vmax.f32 %v1042, 0.0
      %v1148 = vmax.f32 %v1044, 0.0
      %v1149 = vmax.f32 %v1115, 0.0
      %v1150 = vmax.f32 %v1117, 0.0
      %v1151 = vmax.f32 %v1046, 0.0
      %v1152 = vmax.f32 %v1048, 0.0
      %v1153 = vmax.f32 %v1119, 0.0
      %v1154 = vmax.f32 %v1121, 0.0
      %v1155 = vld [vmem:[%s5] sm:$0xf]
      %v1156 = vld [vmem:[%s5 + $0x4] sm:$0xf]
      %v1157 = vld [vmem:[%s5 + $0x8] sm:$0xf]
      %v1158 = vld [vmem:[%s5 + $0xc] sm:$0xf]
      %v1159 = vld [vmem:[%s5 + $0x10] sm:$0xf]
      %v1160 = vld [vmem:[%s5 + $0x14] sm:$0xf]
      %v1161 = vld [vmem:[%s5 + $0x18] sm:$0xf]
      %v1162 = vld [vmem:[%s5 + $0x1c] sm:$0xf]
      %v1163 = vld [vmem:[%s5 + $0x20] sm:$0xf]
      %v1164 = vld [vmem:[%s5 + $0x24] sm:$0xf]
      %v1165 = vld [vmem:[%s5 + $0x28] sm:$0xf]
      %v1166 = vld [vmem:[%s5 + $0x2c] sm:$0xf]
      %v1167 = vld [vmem:[%s5 + $0x30] sm:$0xf]
      %v1168 = vld [vmem:[%s5 + $0x34] sm:$0xf]
      %v1169 = vld [vmem:[%s5 + $0x38] sm:$0xf]
      %v1170 = vld [vmem:[%s5 + $0x3c] sm:$0xf]
      %v1171 = vpack.c.bf16 %v1127, %v1123
      %v1172 = vpack.c.bf16 %v1128, %v1124
      %v1173 = vpack.c.bf16 %v1129, %v1125
      %v1174 = vpack.c.bf16 %v1130, %v1126
      %v1175 = vpack.c.bf16 %v1135, %v1131
      %v1176 = vpack.c.bf16 %v1136, %v1132
      %v1177 = vpack.c.bf16 %v1137, %v1133
      %v1178 = vpack.c.bf16 %v1138, %v1134
      %v1179 = vpack.c.bf16 %v1143, %v1139
      %v1180 = vpack.c.bf16 %v1144, %v1140
      %v1181 = vpack.c.bf16 %v1145, %v1141
      %v1182 = vpack.c.bf16 %v1146, %v1142
      %v1183 = vpack.c.bf16 %v1151, %v1147
      %v1184 = vpack.c.bf16 %v1152, %v1148
      %v1185 = vpack.c.bf16 %v1153, %v1149
      %v1186 = vpack.c.bf16 %v1154, %v1150
      %v1187 = vld [vmem:[%s6] sm:$0xff]
      %v1188 = vld [vmem:[%s6 + $0x8] sm:$0xff]
      %v1189 = vld [vmem:[%s6 + $0x10] sm:$0xff]
      %v1190 = vld [vmem:[%s6 + $0x18] sm:$0xff]
      %v1191 = vld [vmem:[%s6 + $0x20] sm:$0xff]
      %v1192 = vld [vmem:[%s6 + $0x28] sm:$0xff]
      %v1193 = vld [vmem:[%s6 + $0x30] sm:$0xff]
      %v1194 = vld [vmem:[%s6 + $0x38] sm:$0xff]
      %v1195 = vld [vmem:[%s6 + $0x40] sm:$0xff]
      %v1196 = vld [vmem:[%s6 + $0x48] sm:$0xff]
      %v1197 = vld [vmem:[%s6 + $0x50] sm:$0xff]
      %v1198 = vld [vmem:[%s6 + $0x58] sm:$0xff]
      %v1199 = vld [vmem:[%s6 + $0x60] sm:$0xff]
      %v1200 = vld [vmem:[%s6 + $0x68] sm:$0xff]
      %v1201 = vld [vmem:[%s6 + $0x70] sm:$0xff]
      %v1202 = vld [vmem:[%s6 + $0x78] sm:$0xff]
      %1204 = vset.pattern.permute.xlu0 0
      %1205 = vperm.xlu0 %1204, %v1187
      %v1206 = vpop.permute.xlu0 %1205
      %1209 = vset.pattern.permute.xlu0 0
      %1210 = vperm.xlu0 %1209, %v1188
      %v1211 = vpop.permute.xlu0 %1210
      %1214 = vset.pattern.permute.xlu0 0
      %1215 = vperm.xlu0 %1214, %v1189
      %v1216 = vpop.permute.xlu0 %1215
      %1219 = vset.pattern.permute.xlu0 0
      %1220 = vperm.xlu0 %1219, %v1190
      %v1221 = vpop.permute.xlu0 %1220
      %1224 = vset.pattern.permute.xlu0 0
      %1225 = vperm.xlu0 %1224, %v1191
      %v1226 = vpop.permute.xlu0 %1225
      %1229 = vset.pattern.permute.xlu0 0
      %1230 = vperm.xlu0 %1229, %v1192
      %v1231 = vpop.permute.xlu0 %1230
      %1234 = vset.pattern.permute.xlu0 0
      %1235 = vperm.xlu0 %1234, %v1193
      %v1236 = vpop.permute.xlu0 %1235
      %1239 = vset.pattern.permute.xlu0 0
      %1240 = vperm.xlu0 %1239, %v1194
      %v1241 = vpop.permute.xlu0 %1240
      %1244 = vset.pattern.permute.xlu0 0
      %1245 = vperm.xlu0 %1244, %v1195
      %v1246 = vpop.permute.xlu0 %1245
      %1249 = vset.pattern.permute.xlu0 0
      %1250 = vperm.xlu0 %1249, %v1196
      %v1251 = vpop.permute.xlu0 %1250
      %1254 = vset.pattern.permute.xlu0 0
      %1255 = vperm.xlu0 %1254, %v1197
      %v1256 = vpop.permute.xlu0 %1255
      %1259 = vset.pattern.permute.xlu0 0
      %1260 = vperm.xlu0 %1259, %v1198
      %v1261 = vpop.permute.xlu0 %1260
      %1264 = vset.pattern.permute.xlu0 0
      %1265 = vperm.xlu0 %1264, %v1199
      %v1266 = vpop.permute.xlu0 %1265
      %1269 = vset.pattern.permute.xlu0 0
      %1270 = vperm.xlu0 %1269, %v1200
      %v1271 = vpop.permute.xlu0 %1270
      %1274 = vset.pattern.permute.xlu0 0
      %1275 = vperm.xlu0 %1274, %v1201
      %v1276 = vpop.permute.xlu0 %1275
      %1279 = vset.pattern.permute.xlu0 0
      %1280 = vperm.xlu0 %1279, %v1202
      %v1281 = vpop.permute.xlu0 %1280
      %v1299 = vunpack.c.l.b16 %v1155
      %v1300 = vunpack.c.l.b16 %v1156
      %v1301 = vunpack.c.l.b16 %v1157
      %v1302 = vunpack.c.l.b16 %v1158
      %v1303 = vunpack.c.l.b16 %v1159
      %v1304 = vunpack.c.l.b16 %v1160
      %v1305 = vunpack.c.l.b16 %v1161
      %v1306 = vunpack.c.l.b16 %v1162
      %v1307 = vunpack.c.l.b16 %v1163
      %v1308 = vunpack.c.l.b16 %v1164
      %v1309 = vunpack.c.l.b16 %v1165
      %v1310 = vunpack.c.l.b16 %v1166
      %v1311 = vunpack.c.l.b16 %v1167
      %v1312 = vunpack.c.l.b16 %v1168
      %v1313 = vunpack.c.l.b16 %v1169
      %v1314 = vunpack.c.l.b16 %v1170
      %v1315 = vpack.c.b16 %v1300, %v1299
      %v1316 = vpack.c.b16 %v1302, %v1301
      %v1317 = vpack.c.b16 %v1304, %v1303
      %v1318 = vpack.c.b16 %v1306, %v1305
      %v1319 = vpack.c.b16 %v1308, %v1307
      %v1320 = vpack.c.b16 %v1310, %v1309
      %v1321 = vpack.c.b16 %v1312, %v1311
      %v1322 = vpack.c.b16 %v1314, %v1313
      %v1324 = vsel %vm964, %v1315, 0
      %v1327 = vsel %vm964, %v1316, 0
      %v1330 = vsel %vm964, %v1317, 0
      %v1333 = vsel %vm964, %v1318, 0
      %v1336 = vsel %vm964, %v1319, 0
      %v1339 = vsel %vm964, %v1320, 0
      %v1342 = vsel %vm964, %v1321, 0
      %v1345 = vsel %vm964, %v1322, 0
      %1347 = vmatprep.subr.bf16.mxu0 %v1172
      %1348 = vmatpush1.bf16.msra.mxu0 %v1171
      %1349 = vmatprep.subr.bf16.mxu0 %v1176
      %1350 = vmatpush1.bf16.msra.mxu0 %v1175
      %1351 = vmatprep.subr.bf16.mxu0 %v1180
      %1352 = vmatpush1.bf16.msra.mxu0 %v1179
      %1353 = vmatprep.subr.bf16.mxu0 %v1184
      %1354 = vmatpush1.bf16.msra.mxu0 %v1183
      %1355 = vmatprep.subr.bf16.mxu0 0
      %1356 = vmatpush1.bf16.msra.mxu0 0
      %1357 = vmatprep.subr.bf16.mxu0 0
      %1358 = vmatpush1.bf16.msra.mxu0 0
      %1359 = vmatprep.subr.bf16.mxu0 0
      %1360 = vmatpush1.bf16.msra.mxu0 0
      %1361 = vmatprep.subr.bf16.mxu0 0
      %1362 = vmatpush1.bf16.msra.mxu0 0
      %1363 = vmatprep.subr.bf16.mxu0 0
      %1364 = vmatpush1.bf16.msra.mxu0 0
      %1365 = vmatprep.subr.bf16.mxu0 0
      %1366 = vmatpush1.bf16.msra.mxu0 0
      %1367 = vmatprep.subr.bf16.mxu0 0
      %1368 = vmatpush1.bf16.msra.mxu0 0
      %1369 = vmatprep.subr.bf16.mxu0 0
      %1370 = vmatpush1.bf16.msra.mxu0 0
      %1371 = vmatprep.subr.bf16.mxu0 0
      %1372 = vmatpush1.bf16.msra.mxu0 0
      %1373 = vmatprep.subr.bf16.mxu0 0
      %1374 = vmatpush1.bf16.msra.mxu0 0
      %1375 = vmatprep.subr.bf16.mxu0 0
      %1376 = vmatpush1.bf16.msra.mxu0 0
      %1377 = vmatprep.subr.bf16.mxu0 0
      %1378 = vmatpush1.bf16.msra.mxu0 0
      %1379 = vmatprep.mubr.bf16.mxu0 0
      %1380 = vmatmul.mubr.bf16.gmra.mrb[0].mxu0 %v1324
      %v1381 = vpop.f32.mrb[0].mxu0
      %v1382 = vadd.f32 %v1206, %v1381
      %v1383 = vpop.f32.mrb[0].mxu0
      %v1384 = vadd.f32 %v1206, %v1383
      %v1385 = vpop.f32.mrb[0].mxu0
      %v1386 = vadd.f32 %v1211, %v1385
      %v1387 = vpop.f32.mrb[0].mxu0
      %v1388 = vadd.f32 %v1211, %v1387
      %1389 = vmatprep.mubr.bf16.mxu0 0
      %1390 = vmatmul.mubr.bf16.gmra.mrb[0].mxu0 %v1327
      %v1391 = vpop.f32.mrb[0].mxu0
      %v1392 = vadd.f32 %v1216, %v1391
      %v1393 = vpop.f32.mrb[0].mxu0
      %v1394 = vadd.f32 %v1216, %v1393
      %v1395 = vpop.f32.mrb[0].mxu0
      %v1396 = vadd.f32 %v1221, %v1395
      %v1397 = vpop.f32.mrb[0].mxu0
      %v1398 = vadd.f32 %v1221, %v1397
      %1399 = vmatprep.mubr.bf16.mxu0 0
      %1400 = vmatmul.mubr.bf16.gmra.mrb[0].mxu0 %v1330
      %v1401 = vpop.f32.mrb[0].mxu0
      %v1402 = vadd.f32 %v1226, %v1401
      %v1403 = vpop.f32.mrb[0].mxu0
      %v1404 = vadd.f32 %v1226, %v1403
      %v1405 = vpop.f32.mrb[0].mxu0
      %v1406 = vadd.f32 %v1231, %v1405
      %v1407 = vpop.f32.mrb[0].mxu0
      %v1408 = vadd.f32 %v1231, %v1407
      %1409 = vmatprep.mubr.bf16.mxu0 0
      %1410 = vmatmul.mubr.bf16.gmra.mrb[0].mxu0 %v1333
      %v1411 = vpop.f32.mrb[0].mxu0
      %v1412 = vadd.f32 %v1236, %v1411
      %v1413 = vpop.f32.mrb[0].mxu0
      %v1414 = vadd.f32 %v1236, %v1413
      %v1415 = vpop.f32.mrb[0].mxu0
      %v1416 = vadd.f32 %v1241, %v1415
      %v1417 = vpop.f32.mrb[0].mxu0
      %v1418 = vadd.f32 %v1241, %v1417
      %1419 = vmatprep.mubr.bf16.mxu0 0
      %1420 = vmatmul.mubr.bf16.gmra.mrb[0].mxu0 %v1336
      %v1421 = vpop.f32.mrb[0].mxu0
      %v1422 = vadd.f32 %v1246, %v1421
      %v1423 = vpop.f32.mrb[0].mxu0
      %v1424 = vadd.f32 %v1246, %v1423
      %v1425 = vpop.f32.mrb[0].mxu0
      %v1426 = vadd.f32 %v1251, %v1425
      %v1427 = vpop.f32.mrb[0].mxu0
      %v1428 = vadd.f32 %v1251, %v1427
      %1429 = vmatprep.mubr.bf16.mxu0 0
      %1430 = vmatmul.mubr.bf16.gmra.mrb[0].mxu0 %v1339
      %v1431 = vpop.f32.mrb[0].mxu0
      %v1432 = vadd.f32 %v1256, %v1431
      %v1433 = vpop.f32.mrb[0].mxu0
      %v1434 = vadd.f32 %v1256, %v1433
      %v1435 = vpop.f32.mrb[0].mxu0
      %v1436 = vadd.f32 %v1261, %v1435
      %v1437 = vpop.f32.mrb[0].mxu0
      %v1438 = vadd.f32 %v1261, %v1437
      %1439 = vmatprep.mubr.bf16.mxu0 0
      %1440 = vmatmul.mubr.bf16.gmra.mrb[0].mxu0 %v1342
      %v1441 = vpop.f32.mrb[0].mxu0
      %v1442 = vadd.f32 %v1266, %v1441
      %v1443 = vpop.f32.mrb[0].mxu0
      %v1444 = vadd.f32 %v1266, %v1443
      %v1445 = vpop.f32.mrb[0].mxu0
      %v1446 = vadd.f32 %v1271, %v1445
      %v1447 = vpop.f32.mrb[0].mxu0
      %v1448 = vadd.f32 %v1271, %v1447
      %1449 = vmatprep.mubr.bf16.mxu0 0
      %1450 = vmatmul.mubr.bf16.gmra.mrb[0].mxu0 %v1345
      %v1451 = vpop.f32.mrb[0].mxu0
      %v1452 = vadd.f32 %v1276, %v1451
      %v1453 = vpop.f32.mrb[0].mxu0
      %v1454 = vadd.f32 %v1276, %v1453
      %v1455 = vpop.f32.mrb[0].mxu0
      %v1456 = vadd.f32 %v1281, %v1455
      %v1457 = vpop.f32.mrb[0].mxu0
      %v1458 = vadd.f32 %v1281, %v1457
      %1459 = vdwg.mxu0
      %1460 = vmatprep.subr.bf16.mxu0 %v1174
      %1461 = vmatpush1.bf16.msra.mxu0 %v1173
      %1462 = vmatprep.subr.bf16.mxu0 %v1178
      %1463 = vmatpush1.bf16.msra.mxu0 %v1177
      %1464 = vmatprep.subr.bf16.mxu0 %v1182
      %1465 = vmatpush1.bf16.msra.mxu0 %v1181
      %1466 = vmatprep.subr.bf16.mxu0 %v1186
      %1467 = vmatpush1.bf16.msra.mxu0 %v1185
      %1468 = vmatprep.subr.bf16.mxu0 0
      %1469 = vmatpush1.bf16.msra.mxu0 0
      %1470 = vmatprep.subr.bf16.mxu0 0
      %1471 = vmatpush1.bf16.msra.mxu0 0
      %1472 = vmatprep.subr.bf16.mxu0 0
      %1473 = vmatpush1.bf16.msra.mxu0 0
      %1474 = vmatprep.subr.bf16.mxu0 0
      %1475 = vmatpush1.bf16.msra.mxu0 0
      %1476 = vmatprep.subr.bf16.mxu0 0
      %1477 = vmatpush1.bf16.msra.mxu0 0
      %1478 = vmatprep.subr.bf16.mxu0 0
      %1479 = vmatpush1.bf16.msra.mxu0 0
      %1480 = vmatprep.subr.bf16.mxu0 0
      %1481 = vmatpush1.bf16.msra.mxu0 0
      %1482 = vmatprep.subr.bf16.mxu0 0
      %1483 = vmatpush1.bf16.msra.mxu0 0
      %1484 = vmatprep.subr.bf16.mxu0 0
      %1485 = vmatpush1.bf16.msra.mxu0 0
      %1486 = vmatprep.subr.bf16.mxu0 0
      %1487 = vmatpush1.bf16.msra.mxu0 0
      %1488 = vmatprep.subr.bf16.mxu0 0
      %1489 = vmatpush1.bf16.msra.mxu0 0
      %1490 = vmatprep.subr.bf16.mxu0 0
      %1491 = vmatpush1.bf16.msra.mxu0 0
      %1492 = vmatprep.mubr.bf16.mxu0 0
      %1493 = vmatmul.mubr.bf16.gmra.mrb[0].mxu0 %v1324
      %v1494 = vpop.f32.mrb[0].mxu0
      %v1495 = vadd.f32 %v1206, %v1494
      %v1496 = vpop.f32.mrb[0].mxu0
      %v1497 = vadd.f32 %v1206, %v1496
      %v1498 = vpop.f32.mrb[0].mxu0
      %v1499 = vadd.f32 %v1211, %v1498
      %v1500 = vpop.f32.mrb[0].mxu0
      %v1501 = vadd.f32 %v1211, %v1500
      %1502 = vmatprep.mubr.bf16.mxu0 0
      %1503 = vmatmul.mubr.bf16.gmra.mrb[0].mxu0 %v1327
      %v1504 = vpop.f32.mrb[0].mxu0
      %v1505 = vadd.f32 %v1216, %v1504
      %v1506 = vpop.f32.mrb[0].mxu0
      %v1507 = vadd.f32 %v1216, %v1506
      %v1508 = vpop.f32.mrb[0].mxu0
      %v1509 = vadd.f32 %v1221, %v1508
      %v1510 = vpop.f32.mrb[0].mxu0
      %v1511 = vadd.f32 %v1221, %v1510
      %1512 = vmatprep.mubr.bf16.mxu0 0
      %1513 = vmatmul.mubr.bf16.gmra.mrb[0].mxu0 %v1330
      %v1514 = vpop.f32.mrb[0].mxu0
      %v1515 = vadd.f32 %v1226, %v1514
      %v1516 = vpop.f32.mrb[0].mxu0
      %v1517 = vadd.f32 %v1226, %v1516
      %v1518 = vpop.f32.mrb[0].mxu0
      %v1519 = vadd.f32 %v1231, %v1518
      %v1520 = vpop.f32.mrb[0].mxu0
      %v1521 = vadd.f32 %v1231, %v1520
      %1522 = vmatprep.mubr.bf16.mxu0 0
      %1523 = vmatmul.mubr.bf16.gmra.mrb[0].mxu0 %v1333
      %v1524 = vpop.f32.mrb[0].mxu0
      %v1525 = vadd.f32 %v1236, %v1524
      %v1526 = vpop.f32.mrb[0].mxu0
      %v1527 = vadd.f32 %v1236, %v1526
      %v1528 = vpop.f32.mrb[0].mxu0
      %v1529 = vadd.f32 %v1241, %v1528
      %v1530 = vpop.f32.mrb[0].mxu0
      %v1531 = vadd.f32 %v1241, %v1530
      %1532 = vmatprep.mubr.bf16.mxu0 0
      %1533 = vmatmul.mubr.bf16.gmra.mrb[0].mxu0 %v1336
      %v1534 = vpop.f32.mrb[0].mxu0
      %v1535 = vadd.f32 %v1246, %v1534
      %v1536 = vpop.f32.mrb[0].mxu0
      %v1537 = vadd.f32 %v1246, %v1536
      %v1538 = vpop.f32.mrb[0].mxu0
      %v1539 = vadd.f32 %v1251, %v1538
      %v1540 = vpop.f32.mrb[0].mxu0
      %v1541 = vadd.f32 %v1251, %v1540
      %1542 = vmatprep.mubr.bf16.mxu0 0
      %1543 = vmatmul.mubr.bf16.gmra.mrb[0].mxu0 %v1339
      %v1544 = vpop.f32.mrb[0].mxu0
      %v1545 = vadd.f32 %v1256, %v1544
      %v1546 = vpop.f32.mrb[0].mxu0
      %v1547 = vadd.f32 %v1256, %v1546
      %v1548 = vpop.f32.mrb[0].mxu0
      %v1549 = vadd.f32 %v1261, %v1548
      %v1550 = vpop.f32.mrb[0].mxu0
      %v1551 = vadd.f32 %v1261, %v1550
      %1552 = vmatprep.mubr.bf16.mxu0 0
      %1553 = vmatmul.mubr.bf16.gmra.mrb[0].mxu0 %v1342
      %v1554 = vpop.f32.mrb[0].mxu0
      %v1555 = vadd.f32 %v1266, %v1554
      %v1556 = vpop.f32.mrb[0].mxu0
      %v1557 = vadd.f32 %v1266, %v1556
      %v1558 = vpop.f32.mrb[0].mxu0
      %v1559 = vadd.f32 %v1271, %v1558
      %v1560 = vpop.f32.mrb[0].mxu0
      %v1561 = vadd.f32 %v1271, %v1560
      %1562 = vmatprep.mubr.bf16.mxu0 0
      %1563 = vmatmul.mubr.bf16.gmra.mrb[0].mxu0 %v1345
      %v1564 = vpop.f32.mrb[0].mxu0
      %v1565 = vadd.f32 %v1276, %v1564
      %v1566 = vpop.f32.mrb[0].mxu0
      %v1567 = vadd.f32 %v1276, %v1566
      %v1568 = vpop.f32.mrb[0].mxu0
      %v1569 = vadd.f32 %v1281, %v1568
      %v1570 = vpop.f32.mrb[0].mxu0
      %v1571 = vadd.f32 %v1281, %v1570
      %1572 = vdwg.mxu0
      %v1573 = vld [vmem:[#allocation2] sm:$0xff]
      %v1574 = vld [vmem:[#allocation2 + $0x8] sm:$0xff]
      %v1575 = vld [vmem:[#allocation2 + $0x10] sm:$0xff]
      %v1576 = vld [vmem:[#allocation2 + $0x18] sm:$0xff]
      %v1577 = vld [vmem:[#allocation2 + $0x20] sm:$0xff]
      %v1578 = vld [vmem:[#allocation2 + $0x28] sm:$0xff]
      %v1579 = vld [vmem:[#allocation2 + $0x30] sm:$0xff]
      %v1580 = vld [vmem:[#allocation2 + $0x38] sm:$0xff]
      %v1581 = vld [vmem:[#allocation2 + $0x40] sm:$0xff]
      %v1582 = vld [vmem:[#allocation2 + $0x48] sm:$0xff]
      %v1583 = vld [vmem:[#allocation2 + $0x50] sm:$0xff]
      %v1584 = vld [vmem:[#allocation2 + $0x58] sm:$0xff]
      %v1585 = vld [vmem:[#allocation2 + $0x60] sm:$0xff]
      %v1586 = vld [vmem:[#allocation2 + $0x68] sm:$0xff]
      %v1587 = vld [vmem:[#allocation2 + $0x70] sm:$0xff]
      %v1588 = vld [vmem:[#allocation2 + $0x78] sm:$0xff]
      %v1589 = vld [vmem:[#allocation2 + $0x80] sm:$0xff]
      %v1590 = vld [vmem:[#allocation2 + $0x88] sm:$0xff]
      %v1591 = vld [vmem:[#allocation2 + $0x90] sm:$0xff]
      %v1592 = vld [vmem:[#allocation2 + $0x98] sm:$0xff]
      %v1593 = vld [vmem:[#allocation2 + $0xa0] sm:$0xff]
      %v1594 = vld [vmem:[#allocation2 + $0xa8] sm:$0xff]
      %v1595 = vld [vmem:[#allocation2 + $0xb0] sm:$0xff]
      %v1596 = vld [vmem:[#allocation2 + $0xb8] sm:$0xff]
      %v1597 = vld [vmem:[#allocation2 + $0xc0] sm:$0xff]
      %v1598 = vld [vmem:[#allocation2 + $0xc8] sm:$0xff]
      %v1599 = vld [vmem:[#allocation2 + $0xd0] sm:$0xff]
      %v1600 = vld [vmem:[#allocation2 + $0xd8] sm:$0xff]
      %v1601 = vld [vmem:[#allocation2 + $0xe0] sm:$0xff]
      %v1602 = vld [vmem:[#allocation2 + $0xe8] sm:$0xff]
      %v1603 = vld [vmem:[#allocation2 + $0xf0] sm:$0xff]
      %v1604 = vld [vmem:[#allocation2 + $0xf8] sm:$0xff]
      %v1605 = vld [vmem:[#allocation2 + $0x100] sm:$0xff]
      %v1606 = vld [vmem:[#allocation2 + $0x108] sm:$0xff]
      %v1607 = vld [vmem:[#allocation2 + $0x110] sm:$0xff]
      %v1608 = vld [vmem:[#allocation2 + $0x118] sm:$0xff]
      %v1609 = vld [vmem:[#allocation2 + $0x120] sm:$0xff]
      %v1610 = vld [vmem:[#allocation2 + $0x128] sm:$0xff]
      %v1611 = vld [vmem:[#allocation2 + $0x130] sm:$0xff]
      %v1612 = vld [vmem:[#allocation2 + $0x138] sm:$0xff]
      %v1613 = vld [vmem:[#allocation2 + $0x140] sm:$0xff]
      %v1614 = vld [vmem:[#allocation2 + $0x148] sm:$0xff]
      %v1615 = vld [vmem:[#allocation2 + $0x150] sm:$0xff]
      %v1616 = vld [vmem:[#allocation2 + $0x158] sm:$0xff]
      %v1617 = vld [vmem:[#allocation2 + $0x160] sm:$0xff]
      %v1618 = vld [vmem:[#allocation2 + $0x168] sm:$0xff]
      %v1619 = vld [vmem:[#allocation2 + $0x170] sm:$0xff]
      %v1620 = vld [vmem:[#allocation2 + $0x178] sm:$0xff]
      %v1621 = vld [vmem:[#allocation2 + $0x180] sm:$0xff]
      %v1622 = vld [vmem:[#allocation2 + $0x188] sm:$0xff]
      %v1623 = vld [vmem:[#allocation2 + $0x190] sm:$0xff]
      %v1624 = vld [vmem:[#allocation2 + $0x198] sm:$0xff]
      %v1625 = vld [vmem:[#allocation2 + $0x1a0] sm:$0xff]
      %v1626 = vld [vmem:[#allocation2 + $0x1a8] sm:$0xff]
      %v1627 = vld [vmem:[#allocation2 + $0x1b0] sm:$0xff]
      %v1628 = vld [vmem:[#allocation2 + $0x1b8] sm:$0xff]
      %v1629 = vld [vmem:[#allocation2 + $0x1c0] sm:$0xff]
      %v1630 = vld [vmem:[#allocation2 + $0x1c8] sm:$0xff]
      %v1631 = vld [vmem:[#allocation2 + $0x1d0] sm:$0xff]
      %v1632 = vld [vmem:[#allocation2 + $0x1d8] sm:$0xff]
      %v1633 = vld [vmem:[#allocation2 + $0x1e0] sm:$0xff]
      %v1634 = vld [vmem:[#allocation2 + $0x1e8] sm:$0xff]
      %v1635 = vld [vmem:[#allocation2 + $0x1f0] sm:$0xff]
      %v1636 = vld [vmem:[#allocation2 + $0x1f8] sm:$0xff]
      %v1637 = vmax.f32 %v1573, %v1382
      %v1638 = vmax.f32 %v1574, %v1384
      %v1639 = vmax.f32 %v1575, %v1495
      %v1640 = vmax.f32 %v1576, %v1497
      %v1641 = vmax.f32 %v1577, %v1386
      %v1642 = vmax.f32 %v1578, %v1388
      %v1643 = vmax.f32 %v1579, %v1499
      %v1644 = vmax.f32 %v1580, %v1501
      %v1645 = vmax.f32 %v1581, %v1392
      %v1646 = vmax.f32 %v1582, %v1394
      %v1647 = vmax.f32 %v1583, %v1505
      %v1648 = vmax.f32 %v1584, %v1507
      %v1649 = vmax.f32 %v1585, %v1396
      %v1650 = vmax.f32 %v1586, %v1398
      %v1651 = vmax.f32 %v1587, %v1509
      %v1652 = vmax.f32 %v1588, %v1511
      %v1653 = vmax.f32 %v1589, %v1402
      %v1654 = vmax.f32 %v1590, %v1404
      %v1655 = vmax.f32 %v1591, %v1515
      %v1656 = vmax.f32 %v1592, %v1517
      %v1657 = vmax.f32 %v1593, %v1406
      %v1658 = vmax.f32 %v1594, %v1408
      %v1659 = vmax.f32 %v1595, %v1519
      %v1660 = vmax.f32 %v1596, %v1521
      %v1661 = vmax.f32 %v1597, %v1412
      %v1662 = vmax.f32 %v1598, %v1414
      %v1663 = vmax.f32 %v1599, %v1525
      %v1664 = vmax.f32 %v1600, %v1527
      %v1665 = vmax.f32 %v1601, %v1416
      %v1666 = vmax.f32 %v1602, %v1418
      %v1667 = vmax.f32 %v1603, %v1529
      %v1668 = vmax.f32 %v1604, %v1531
      %v1669 = vmax.f32 %v1605, %v1422
      %v1670 = vmax.f32 %v1606, %v1424
      %v1671 = vmax.f32 %v1607, %v1535
      %v1672 = vmax.f32 %v1608, %v1537
      %v1673 = vmax.f32 %v1609, %v1426
      %v1674 = vmax.f32 %v1610, %v1428
      %v1675 = vmax.f32 %v1611, %v1539
      %v1676 = vmax.f32 %v1612, %v1541
      %v1677 = vmax.f32 %v1613, %v1432
      %v1678 = vmax.f32 %v1614, %v1434
      %v1679 = vmax.f32 %v1615, %v1545
      %v1680 = vmax.f32 %v1616, %v1547
      %v1681 = vmax.f32 %v1617, %v1436
      %v1682 = vmax.f32 %v1618, %v1438
      %v1683 = vmax.f32 %v1619, %v1549
      %v1684 = vmax.f32 %v1620, %v1551
      %v1685 = vmax.f32 %v1621, %v1442
      %v1686 = vmax.f32 %v1622, %v1444
      %v1687 = vmax.f32 %v1623, %v1555
      %v1688 = vmax.f32 %v1624, %v1557
      %v1689 = vmax.f32 %v1625, %v1446
      %v1690 = vmax.f32 %v1626, %v1448
      %v1691 = vmax.f32 %v1627, %v1559
      %v1692 = vmax.f32 %v1628, %v1561
      %v1693 = vmax.f32 %v1629, %v1452
      %v1694 = vmax.f32 %v1630, %v1454
      %v1695 = vmax.f32 %v1631, %v1565
      %v1696 = vmax.f32 %v1632, %v1567
      %v1697 = vmax.f32 %v1633, %v1456
      %v1698 = vmax.f32 %v1634, %v1458
      %v1699 = vmax.f32 %v1635, %v1569
      %v1700 = vmax.f32 %v1636, %v1571
      %1701 = vst [vmem:[#allocation2] sm:$0xff] %v1637
      %1702 = vst [vmem:[#allocation2 + $0x8] sm:$0xff] %v1638
      %1703 = vst [vmem:[#allocation2 + $0x10] sm:$0xff] %v1639
      %1704 = vst [vmem:[#allocation2 + $0x18] sm:$0xff] %v1640
      %1705 = vst [vmem:[#allocation2 + $0x20] sm:$0xff] %v1641
      %1706 = vst [vmem:[#allocation2 + $0x28] sm:$0xff] %v1642
      %1707 = vst [vmem:[#allocation2 + $0x30] sm:$0xff] %v1643
      %1708 = vst [vmem:[#allocation2 + $0x38] sm:$0xff] %v1644
      %1709 = vst [vmem:[#allocation2 + $0x40] sm:$0xff] %v1645
      %1710 = vst [vmem:[#allocation2 + $0x48] sm:$0xff] %v1646
      %1711 = vst [vmem:[#allocation2 + $0x50] sm:$0xff] %v1647
      %1712 = vst [vmem:[#allocation2 + $0x58] sm:$0xff] %v1648
      %1713 = vst [vmem:[#allocation2 + $0x60] sm:$0xff] %v1649
      %1714 = vst [vmem:[#allocation2 + $0x68] sm:$0xff] %v1650
      %1715 = vst [vmem:[#allocation2 + $0x70] sm:$0xff] %v1651
      %1716 = vst [vmem:[#allocation2 + $0x78] sm:$0xff] %v1652
      %1717 = vst [vmem:[#allocation2 + $0x80] sm:$0xff] %v1653
      %1718 = vst [vmem:[#allocation2 + $0x88] sm:$0xff] %v1654
      %1719 = vst [vmem:[#allocation2 + $0x90] sm:$0xff] %v1655
      %1720 = vst [vmem:[#allocation2 + $0x98] sm:$0xff] %v1656
      %1721 = vst [vmem:[#allocation2 + $0xa0] sm:$0xff] %v1657
      %1722 = vst [vmem:[#allocation2 + $0xa8] sm:$0xff] %v1658
      %1723 = vst [vmem:[#allocation2 + $0xb0] sm:$0xff] %v1659
      %1724 = vst [vmem:[#allocation2 + $0xb8] sm:$0xff] %v1660
      %1725 = vst [vmem:[#allocation2 + $0xc0] sm:$0xff] %v1661
      %1726 = vst [vmem:[#allocation2 + $0xc8] sm:$0xff] %v1662
      %1727 = vst [vmem:[#allocation2 + $0xd0] sm:$0xff] %v1663
      %1728 = vst [vmem:[#allocation2 + $0xd8] sm:$0xff] %v1664
      %1729 = vst [vmem:[#allocation2 + $0xe0] sm:$0xff] %v1665
      %1730 = vst [vmem:[#allocation2 + $0xe8] sm:$0xff] %v1666
      %1731 = vst [vmem:[#allocation2 + $0xf0] sm:$0xff] %v1667
      %1732 = vst [vmem:[#allocation2 + $0xf8] sm:$0xff] %v1668
      %1733 = vst [vmem:[#allocation2 + $0x100] sm:$0xff] %v1669
      %1734 = vst [vmem:[#allocation2 + $0x108] sm:$0xff] %v1670
      %1735 = vst [vmem:[#allocation2 + $0x110] sm:$0xff] %v1671
      %1736 = vst [vmem:[#allocation2 + $0x118] sm:$0xff] %v1672
      %1737 = vst [vmem:[#allocation2 + $0x120] sm:$0xff] %v1673
      %1738 = vst [vmem:[#allocation2 + $0x128] sm:$0xff] %v1674
      %1739 = vst [vmem:[#allocation2 + $0x130] sm:$0xff] %v1675
      %1740 = vst [vmem:[#allocation2 + $0x138] sm:$0xff] %v1676
      %1741 = vst [vmem:[#allocation2 + $0x140] sm:$0xff] %v1677
      %1742 = vst [vmem:[#allocation2 + $0x148] sm:$0xff] %v1678
      %1743 = vst [vmem:[#allocation2 + $0x150] sm:$0xff] %v1679
      %1744 = vst [vmem:[#allocation2 + $0x158] sm:$0xff] %v1680
      %1745 = vst [vmem:[#allocation2 + $0x160] sm:$0xff] %v1681
      %1746 = vst [vmem:[#allocation2 + $0x168] sm:$0xff] %v1682
      %1747 = vst [vmem:[#allocation2 + $0x170] sm:$0xff] %v1683
      %1748 = vst [vmem:[#allocation2 + $0x178] sm:$0xff] %v1684
      %1749 = vst [vmem:[#allocation2 + $0x180] sm:$0xff] %v1685
      %1750 = vst [vmem:[#allocation2 + $0x188] sm:$0xff] %v1686
      %1751 = vst [vmem:[#allocation2 + $0x190] sm:$0xff] %v1687
      %1752 = vst [vmem:[#allocation2 + $0x198] sm:$0xff] %v1688
      %1753 = vst [vmem:[#allocation2 + $0x1a0] sm:$0xff] %v1689
      %1754 = vst [vmem:[#allocation2 + $0x1a8] sm:$0xff] %v1690
      %1755 = vst [vmem:[#allocation2 + $0x1b0] sm:$0xff] %v1691
      %1756 = vst [vmem:[#allocation2 + $0x1b8] sm:$0xff] %v1692
      %1757 = vst [vmem:[#allocation2 + $0x1c0] sm:$0xff] %v1693
      %1758 = vst [vmem:[#allocation2 + $0x1c8] sm:$0xff] %v1694
      %1759 = vst [vmem:[#allocation2 + $0x1d0] sm:$0xff] %v1695
      %1760 = vst [vmem:[#allocation2 + $0x1d8] sm:$0xff] %v1696
      %1761 = vst [vmem:[#allocation2 + $0x1e0] sm:$0xff] %v1697
      %1762 = vst [vmem:[#allocation2 + $0x1e8] sm:$0xff] %v1698
      %1763 = vst [vmem:[#allocation2 + $0x1f0] sm:$0xff] %v1699
      %1764 = vst [vmem:[#allocation2 + $0x1f8] sm:$0xff] %v1700
      // Predicated region
      $region53: #{atlasnet_forward.2} parent=47 // pred_check
        %p1765 = pneg %p308
      $region54: #{atlasnet_forward.2} parent=47 // pred_check_branch
        %1767 = sbr.rel (%p1765) target = $region56
      $region55: #{atlasnet_forward.2} parent=47 // pred_region
        %v1768 = vld [vmem:[#allocation2] sm:$0xff]
        %v1769 = vld [vmem:[#allocation2 + $0x8] sm:$0xff]
        %v1770 = vld [vmem:[#allocation2 + $0x10] sm:$0xff]
        %v1771 = vld [vmem:[#allocation2 + $0x18] sm:$0xff]
        %v1772 = vld [vmem:[#allocation2 + $0x20] sm:$0xff]
        %v1773 = vld [vmem:[#allocation2 + $0x28] sm:$0xff]
        %v1774 = vld [vmem:[#allocation2 + $0x30] sm:$0xff]
        %v1775 = vld [vmem:[#allocation2 + $0x38] sm:$0xff]
        %v1776 = vld [vmem:[#allocation2 + $0x40] sm:$0xff]
        %v1777 = vld [vmem:[#allocation2 + $0x48] sm:$0xff]
        %v1778 = vld [vmem:[#allocation2 + $0x50] sm:$0xff]
        %v1779 = vld [vmem:[#allocation2 + $0x58] sm:$0xff]
        %v1780 = vld [vmem:[#allocation2 + $0x60] sm:$0xff]
        %v1781 = vld [vmem:[#allocation2 + $0x68] sm:$0xff]
        %v1782 = vld [vmem:[#allocation2 + $0x70] sm:$0xff]
        %v1783 = vld [vmem:[#allocation2 + $0x78] sm:$0xff]
        %v1784 = vld [vmem:[#allocation2 + $0x80] sm:$0xff]
        %v1785 = vld [vmem:[#allocation2 + $0x88] sm:$0xff]
        %v1786 = vld [vmem:[#allocation2 + $0x90] sm:$0xff]
        %v1787 = vld [vmem:[#allocation2 + $0x98] sm:$0xff]
        %v1788 = vld [vmem:[#allocation2 + $0xa0] sm:$0xff]
        %v1789 = vld [vmem:[#allocation2 + $0xa8] sm:$0xff]
        %v1790 = vld [vmem:[#allocation2 + $0xb0] sm:$0xff]
        %v1791 = vld [vmem:[#allocation2 + $0xb8] sm:$0xff]
        %v1792 = vld [vmem:[#allocation2 + $0xc0] sm:$0xff]
        %v1793 = vld [vmem:[#allocation2 + $0xc8] sm:$0xff]
        %v1794 = vld [vmem:[#allocation2 + $0xd0] sm:$0xff]
        %v1795 = vld [vmem:[#allocation2 + $0xd8] sm:$0xff]
        %v1796 = vld [vmem:[#allocation2 + $0xe0] sm:$0xff]
        %v1797 = vld [vmem:[#allocation2 + $0xe8] sm:$0xff]
        %v1798 = vld [vmem:[#allocation2 + $0xf0] sm:$0xff]
        %v1799 = vld [vmem:[#allocation2 + $0xf8] sm:$0xff]
        %v1800 = vld [vmem:[#allocation2 + $0x100] sm:$0xff]
        %v1801 = vld [vmem:[#allocation2 + $0x108] sm:$0xff]
        %v1802 = vld [vmem:[#allocation2 + $0x110] sm:$0xff]
        %v1803 = vld [vmem:[#allocation2 + $0x118] sm:$0xff]
        %v1804 = vld [vmem:[#allocation2 + $0x120] sm:$0xff]
        %v1805 = vld [vmem:[#allocation2 + $0x128] sm:$0xff]
        %v1806 = vld [vmem:[#allocation2 + $0x130] sm:$0xff]
        %v1807 = vld [vmem:[#allocation2 + $0x138] sm:$0xff]
        %v1808 = vld [vmem:[#allocation2 + $0x140] sm:$0xff]
        %v1809 = vld [vmem:[#allocation2 + $0x148] sm:$0xff]
        %v1810 = vld [vmem:[#allocation2 + $0x150] sm:$0xff]
        %v1811 = vld [vmem:[#allocation2 + $0x158] sm:$0xff]
        %v1812 = vld [vmem:[#allocation2 + $0x160] sm:$0xff]
        %v1813 = vld [vmem:[#allocation2 + $0x168] sm:$0xff]
        %v1814 = vld [vmem:[#allocation2 + $0x170] sm:$0xff]
        %v1815 = vld [vmem:[#allocation2 + $0x178] sm:$0xff]
        %v1816 = vld [vmem:[#allocation2 + $0x180] sm:$0xff]
        %v1817 = vld [vmem:[#allocation2 + $0x188] sm:$0xff]
        %v1818 = vld [vmem:[#allocation2 + $0x190] sm:$0xff]
        %v1819 = vld [vmem:[#allocation2 + $0x198] sm:$0xff]
        %v1820 = vld [vmem:[#allocation2 + $0x1a0] sm:$0xff]
        %v1821 = vld [vmem:[#allocation2 + $0x1a8] sm:$0xff]
        %v1822 = vld [vmem:[#allocation2 + $0x1b0] sm:$0xff]
        %v1823 = vld [vmem:[#allocation2 + $0x1b8] sm:$0xff]
        %v1824 = vld [vmem:[#allocation2 + $0x1c0] sm:$0xff]
        %v1825 = vld [vmem:[#allocation2 + $0x1c8] sm:$0xff]
        %v1826 = vld [vmem:[#allocation2 + $0x1d0] sm:$0xff]
        %v1827 = vld [vmem:[#allocation2 + $0x1d8] sm:$0xff]
        %v1828 = vld [vmem:[#allocation2 + $0x1e0] sm:$0xff]
        %v1829 = vld [vmem:[#allocation2 + $0x1e8] sm:$0xff]
        %v1830 = vld [vmem:[#allocation2 + $0x1f0] sm:$0xff]
        %v1831 = vld [vmem:[#allocation2 + $0x1f8] sm:$0xff]
        %v1832 = vmax.f32 %v1768, %v1769
        %v1833 = vmax.f32 %v1832, %v1770
        %v1834 = vmax.f32 %v1833, %v1771
        %1835 = vmax.xlane.f32.xlu0 %v1834
        %v1836 = vpop.xlane.xlu0 %1835
        %v1837 = vmax.f32 %v1772, %v1773
        %v1838 = vmax.f32 %v1837, %v1774
        %v1839 = vmax.f32 %v1838, %v1775
        %1840 = vmax.xlane.f32.xlu0 %v1839
        %v1841 = vpop.xlane.xlu0 %1840
        %v1842 = vmax.f32 %v1776, %v1777
        %v1843 = vmax.f32 %v1842, %v1778
        %v1844 = vmax.f32 %v1843, %v1779
        %1845 = vmax.xlane.f32.xlu0 %v1844
        %v1846 = vpop.xlane.xlu0 %1845
        %v1847 = vmax.f32 %v1780, %v1781
        %v1848 = vmax.f32 %v1847, %v1782
        %v1849 = vmax.f32 %v1848, %v1783
        %1850 = vmax.xlane.f32.xlu0 %v1849
        %v1851 = vpop.xlane.xlu0 %1850
        %v1852 = vmax.f32 %v1784, %v1785
        %v1853 = vmax.f32 %v1852, %v1786
        %v1854 = vmax.f32 %v1853, %v1787
        %1855 = vmax.xlane.f32.xlu0 %v1854
        %v1856 = vpop.xlane.xlu0 %1855
        %v1857 = vmax.f32 %v1788, %v1789
        %v1858 = vmax.f32 %v1857, %v1790
        %v1859 = vmax.f32 %v1858, %v1791
        %1860 = vmax.xlane.f32.xlu0 %v1859
        %v1861 = vpop.xlane.xlu0 %1860
        %v1862 = vmax.f32 %v1792, %v1793
        %v1863 = vmax.f32 %v1862, %v1794
        %v1864 = vmax.f32 %v1863, %v1795
        %1865 = vmax.xlane.f32.xlu0 %v1864
        %v1866 = vpop.xlane.xlu0 %1865
        %v1867 = vmax.f32 %v1796, %v1797
        %v1868 = vmax.f32 %v1867, %v1798
        %v1869 = vmax.f32 %v1868, %v1799
        %1870 = vmax.xlane.f32.xlu0 %v1869
        %v1871 = vpop.xlane.xlu0 %1870
        %v1872 = vmax.f32 %v1800, %v1801
        %v1873 = vmax.f32 %v1872, %v1802
        %v1874 = vmax.f32 %v1873, %v1803
        %1875 = vmax.xlane.f32.xlu0 %v1874
        %v1876 = vpop.xlane.xlu0 %1875
        %v1877 = vmax.f32 %v1804, %v1805
        %v1878 = vmax.f32 %v1877, %v1806
        %v1879 = vmax.f32 %v1878, %v1807
        %1880 = vmax.xlane.f32.xlu0 %v1879
        %v1881 = vpop.xlane.xlu0 %1880
        %v1882 = vmax.f32 %v1808, %v1809
        %v1883 = vmax.f32 %v1882, %v1810
        %v1884 = vmax.f32 %v1883, %v1811
        %1885 = vmax.xlane.f32.xlu0 %v1884
        %v1886 = vpop.xlane.xlu0 %1885
        %v1887 = vmax.f32 %v1812, %v1813
        %v1888 = vmax.f32 %v1887, %v1814
        %v1889 = vmax.f32 %v1888, %v1815
        %1890 = vmax.xlane.f32.xlu0 %v1889
        %v1891 = vpop.xlane.xlu0 %1890
        %v1892 = vmax.f32 %v1816, %v1817
        %v1893 = vmax.f32 %v1892, %v1818
        %v1894 = vmax.f32 %v1893, %v1819
        %1895 = vmax.xlane.f32.xlu0 %v1894
        %v1896 = vpop.xlane.xlu0 %1895
        %v1897 = vmax.f32 %v1820, %v1821
        %v1898 = vmax.f32 %v1897, %v1822
        %v1899 = vmax.f32 %v1898, %v1823
        %1900 = vmax.xlane.f32.xlu0 %v1899
        %v1901 = vpop.xlane.xlu0 %1900
        %v1902 = vmax.f32 %v1824, %v1825
        %v1903 = vmax.f32 %v1902, %v1826
        %v1904 = vmax.f32 %v1903, %v1827
        %1905 = vmax.xlane.f32.xlu0 %v1904
        %v1906 = vpop.xlane.xlu0 %1905
        %v1907 = vmax.f32 %v1828, %v1829
        %v1908 = vmax.f32 %v1907, %v1830
        %v1909 = vmax.f32 %v1908, %v1831
        %1910 = vmax.xlane.f32.xlu0 %v1909
        %v1911 = vpop.xlane.xlu0 %1910
        %vm1912 = vcmask 7168
        %1913 = vst.msk [vmem:[%s306] sm:$0xff] %vm1912, %v1836
        %1914 = vst.msk [vmem:[%s306 + $0x8] sm:$0xff] %vm1912, %v1841
        %1915 = vst.msk [vmem:[%s306 + $0x10] sm:$0xff] %vm1912, %v1846
        %1916 = vst.msk [vmem:[%s306 + $0x18] sm:$0xff] %vm1912, %v1851
        %1917 = vst.msk [vmem:[%s306 + $0x20] sm:$0xff] %vm1912, %v1856
        %1918 = vst.msk [vmem:[%s306 + $0x28] sm:$0xff] %vm1912, %v1861
        %1919 = vst.msk [vmem:[%s306 + $0x30] sm:$0xff] %vm1912, %v1866
        %1920 = vst.msk [vmem:[%s306 + $0x38] sm:$0xff] %vm1912, %v1871
        %1921 = vst.msk [vmem:[%s306 + $0x40] sm:$0xff] %vm1912, %v1876
        %1922 = vst.msk [vmem:[%s306 + $0x48] sm:$0xff] %vm1912, %v1881
        %1923 = vst.msk [vmem:[%s306 + $0x50] sm:$0xff] %vm1912, %v1886
        %1924 = vst.msk [vmem:[%s306 + $0x58] sm:$0xff] %vm1912, %v1891
        %1925 = vst.msk [vmem:[%s306 + $0x60] sm:$0xff] %vm1912, %v1896
        %1926 = vst.msk [vmem:[%s306 + $0x68] sm:$0xff] %vm1912, %v1901
        %1927 = vst.msk [vmem:[%s306 + $0x70] sm:$0xff] %vm1912, %v1906
        %1928 = vst.msk [vmem:[%s306 + $0x78] sm:$0xff] %vm1912, %v1911
      $region56: #{atlasnet_forward.2} parent=47 // pred_fallthru
        _
      %p1929 = scmp.lt.s32.totalorder %s22, 1
      %s1930 = scalar_select %p1929, %s22, 1
      %s1931 = smul.addr %s1930, 16
      %s1932 = smul.addr %s1931, 8
      %s1933 = scalar_lea.vmem %s7, %s1932
      // Predicated region
      $region57: #{atlasnet_forward.2} parent=47 // pred_check
        %p1934 = pneg %p202
      $region58: #{atlasnet_forward.2} parent=47 // pred_check_branch
        %1936 = sbr.rel (%p1934) target = $region60
      $region59: #{atlasnet_forward.2} parent=47 // pred_region
        _
      $region60: #{atlasnet_forward.2} parent=47 // pred_fallthru
        _
    $region48: #{atlasnet_forward.2} parent=5 // pred_fallthru
      _
    %p1937 = scmp.le.s32.totalorder 2, %s13
    // Predicated region
    $region61: #{atlasnet_forward.2} parent=5 // pred_check
      %p1938 = pneg %p1937
    $region62: #{atlasnet_forward.2} parent=5 // pred_check_branch
      %1940 = sbr.rel (%p1938) target = $region64
    $region63: #{atlasnet_forward.2} parent=5 // pred_region
      %s1941 = ssub.s32 %s13, 2
      // Predicated region
      $region65: #{atlasnet_forward.2} parent=63 // pred_check
        %p1942 = pneg %p208
      $region66: #{atlasnet_forward.2} parent=63 // pred_check_branch
        %1944 = sbr.rel (%p1942) target = $region68
      $region67: #{atlasnet_forward.2} parent=63 // pred_region
        %p1945 = scmp.lt.s32.totalorder %s24, 1
        %s1946 = scalar_select %p1945, %s24, 1
        %s1947 = smul.addr %s1946, 16
        %s1948 = smul.addr %s1947, 8
        %s1949 = scalar_lea.vmem %s7, %s1948
      $region68: #{atlasnet_forward.2} parent=63 // pred_fallthru
        _
    $region64: #{atlasnet_forward.2} parent=5 // pred_fallthru
      _
  $region6: #{atlasnet_forward.2} parent=0 // loop_footer
    %s17 = sadd.s32 1, %s13
  $region7: #{atlasnet_forward.2} parent=0 // loop_footer_branch
    %12 = sbr.rel target = $region3
  $region8: #{atlasnet_forward.2} parent=0 // loop_exit
    _

</llo_original>
